<compile_context>
chip_gen: v6e
topology: v6e:2x2x1
jax: 0.10.0
libtpu: 0.0.40
codegen_flags: <defaults>
</compile_context>

<pallas_src>
import math

import numpy as np

import jax
import jax.numpy as jnp
from jax.experimental import pallas as pl
from jax.experimental.pallas import tpu as pltpu


# ----------------------------- in-kernel helpers -----------------------------
# Activations are (W, R, C): W = spatial (outer), R = batched rows (sublanes,
# R % 8 == 0), C = channels (lanes).  Matmuls use the flattened (W*R, C) form;
# all reshapes below keep the minor (R, C) dims untouched and are free.


def _tap_merge(y, cout, b):
    """Combine per-tap matmul outputs into a Conv2d((1,3), padding=(0,1)) + ReLU.

    y: (W, R, 3*Cout) with y[w, :, k*Cout:(k+1)*Cout] = x[w] @ W_k.
    out[v] = y[v-1, blk0] + y[v, blk1] + y[v+1, blk2]  (out-of-range taps = 0).
    """
    wd = y.shape[0]
    y0 = y[:, :, 0:cout]
    y1 = y[:, :, cout:2 * cout]
    y2 = y[:, :, 2 * cout:3 * cout]
    first = y1[0:1] + y2[1:2]                                 # v = 0
    mid = y0[0:wd - 2] + y1[1:wd - 1] + y2[2:wd]              # v = 1..W-2
    last = y0[wd - 2:wd - 1] + y1[wd - 1:wd]                  # v = W-1
    out = jnp.concatenate([first, mid, last], axis=0) + b
    return jnp.maximum(out, 0.0)


def _conv3(x, w_cat, b):
    """Conv2d((1,3), padding=(0,1)) + bias + ReLU as one fused matmul.

    x: (W, R, Cin); w_cat: (Cin, 3*Cout) = [W0 | W1 | W2]; b: (1, Cout).
    """
    wd, r, cin = x.shape
    cout = w_cat.shape[1] // 3
    y = jnp.dot(x.reshape(wd * r, cin), w_cat,
                preferred_element_type=jnp.float32)
    return _tap_merge(y.reshape(wd, r, 3 * cout), cout, b)


def _conv3_skip(xa, xb, wa_cat, wb_cat, b):
    """Conv over channel-concat([xa, xb]) without materialising the concat.

    xa: (W, R, Ca), xb: (W, R, Cb); wa_cat: (Ca, 3*Cout), wb_cat: (Cb, 3*Cout).
    """
    wd, r, ca = xa.shape
    cb = xb.shape[2]
    cout = wa_cat.shape[1] // 3
    y = jnp.dot(xa.reshape(wd * r, ca), wa_cat,
                preferred_element_type=jnp.float32)
    y = y + jnp.dot(xb.reshape(wd * r, cb), wb_cat,
                    preferred_element_type=jnp.float32)
    return _tap_merge(y.reshape(wd, r, 3 * cout), cout, b)


def _maxpool_w(x):
    """MaxPool2d((1, 2)) along W: (W, R, C) -> (W//2, R, C)."""
    wd, r, c = x.shape
    x4 = x.reshape(wd // 2, 2, r, c)
    return jnp.maximum(x4[:, 0], x4[:, 1])


def _upsample2x_w(x, g, h):
    """2x linear upsample (align_corners=True) along W via static lerps.

    x: (Wi, R, C); g, h: (Wi, 1, C) constant fraction vectors with
      g[m] = (Wi-1-m)/(2Wi-1)   -> out[2m+1] = (1-g[m])*x[m]   + g[m]*x[m+1]
      h[m] = (2Wi-1-m)/(2Wi-1)  -> out[2m]   = (1-h[m])*x[m-1] + h[m]*x[m]
    with out[0] = x[0] and out[2Wi-1] = x[Wi-1].
    """
    wi, r, c = x.shape
    gm = g[0:wi - 1]
    hm = h[1:wi]
    odd_main = x[0:wi - 1] * (1.0 - gm) + x[1:wi] * gm          # m = 0..Wi-2
    even_main = x[0:wi - 1] * (1.0 - hm) + x[1:wi] * hm         # m = 1..Wi-1
    odd = jnp.concatenate([odd_main, x[wi - 1:wi]], axis=0)     # (Wi, R, C)
    even = jnp.concatenate([x[0:1], even_main], axis=0)         # (Wi, R, C)
    out = jnp.concatenate([even.reshape(wi, 1, r, c),
                           odd.reshape(wi, 1, r, c)], axis=1)   # (Wi, 2, R, C)
    return out.reshape(2 * wi, r, c)


# ---------------------------------- kernel ----------------------------------

def _spectra_unet_kernel(x_ref, ga_ref, ha_ref, gb_ref, hb_ref, *refs):
    (w1a, b1a, w1b, b1b, w2a, b2a, w2b, b2b, w3a, b3a, w3b, b3b,
     wu2au, wu2as, bu2a, wu2b, bu2b, wu1au, wu1as, bu1a, wu1b, bu1b,
     wl, bl, o_ref) = refs

    r = o_ref.shape[1]
    wd = o_ref.shape[2]

    # ------------------------------ encoder ------------------------------
    # Stem conv (Cin=1): taps arrive as a lane-dense (3, W*R) block; one small
    # in-kernel transpose puts the 3 taps on lanes, then a single matmul.
    x_col = x_ref[0].T                                            # (W*R, 3)
    c = jnp.dot(x_col, w1a[...], preferred_element_type=jnp.float32) + b1a[...]
    c1 = jnp.maximum(c, 0.0).reshape(wd, r, 16)                   # (W, R, 16)
    c1 = _conv3(c1, w1b[...], b1b[...])                           # (W, R, 16)

    p1 = _maxpool_w(c1)                                           # (W/2, R, 16)
    c2 = _conv3(p1, w2a[...], b2a[...])                           # (W/2, R, 32)
    c2 = _conv3(c2, w2b[...], b2b[...])

    p2 = _maxpool_w(c2)                                           # (W/4, R, 32)
    c3 = _conv3(p2, w3a[...], b3a[...])                           # (W/4, R, 64)
    c3 = _conv3(c3, w3b[...], b3b[...])

    # ------------------------------ decoder ------------------------------
    u = _upsample2x_w(c3, ga_ref[...], ha_ref[...])               # (W/2, R, 64)
    u = _conv3_skip(u, c2, wu2au[...], wu2as[...], bu2a[...])     # (W/2, R, 32)
    u = _conv3(u, wu2b[...], bu2b[...])
    u = _upsample2x_w(u, gb_ref[...], hb_ref[...])                # (W,  R, 32)
    u = _conv3_skip(u, c1, wu1au[...], wu1as[...], bu1a[...])     # (W,  R, 16)
    u = _conv3(u, wu1b[...], bu1b[...])                           # (W,  R, 16)

    # conv_last: 1x1 conv 16 -> 1 as a lane reduction; store lane-dense (R, W).
    out = jnp.sum(u * wl[...], axis=2) + bl[...]                  # (W, R)
    o_ref[0] = out.T                                              # (R, W)


# -------------------------------- parameters --------------------------------
# Conv2d weights (Cout, Cin, 1, 3) in PyTorch are stored here as (3, Cin, Cout),
# biases as (1, Cout); conv_last (1, 16, 1, 1) is stored as (1, 16) + (1, 1).

PARAM_SHAPES = [
    ("w1a",  (3, 1, 16)),  ("b1a",  (1, 16)),
    ("w1b",  (3, 16, 16)), ("b1b",  (1, 16)),
    ("w2a",  (3, 16, 32)), ("b2a",  (1, 32)),
    ("w2b",  (3, 32, 32)), ("b2b",  (1, 32)),
    ("w3a",  (3, 32, 64)), ("b3a",  (1, 64)),
    ("w3b",  (3, 64, 64)), ("b3b",  (1, 64)),
    ("wu2a", (3, 96, 32)), ("bu2a", (1, 32)),
    ("wu2b", (3, 32, 32)), ("bu2b", (1, 32)),
    ("wu1a", (3, 48, 16)), ("bu1a", (1, 16)),
    ("wu1b", (3, 16, 16)), ("bu1b", (1, 16)),
    ("wl",   (1, 16)),     ("bl",   (1, 1)),
]


def init_params(key):
    params = []
    for name, shape in PARAM_SHAPES:
        key, sub = jax.random.split(key)
        if name.startswith("w"):
            fan_in = shape[0] * shape[1] if len(shape) == 3 else shape[1]
            p = (1.0 / math.sqrt(fan_in)) * jax.random.normal(sub, shape, jnp.float32)
        else:
            p = 0.01 * jax.random.normal(sub, shape, jnp.float32)
        params.append(p)
    return params


# ----------------------------- wrapper utilities -----------------------------

def _upsample_coefs(wi, c):
    """Per-output-row lerp fractions for the align_corners=True 2x upsample."""
    denom = float(2 * wi - 1)
    m = np.arange(wi, dtype=np.float32)
    g = (wi - 1 - m) / denom
    h = (2 * wi - 1 - m) / denom
    g3 = np.ascontiguousarray(
        np.broadcast_to(g[:, None, None], (wi, 1, c)), dtype=np.float32)
    h3 = np.ascontiguousarray(
        np.broadcast_to(h[:, None, None], (wi, 1, c)), dtype=np.float32)
    return jnp.asarray(g3), jnp.asarray(h3)


def _choose_row_block(B, W):
    """Rows per grid step: multiple of 8, R*W ~ 512, >= 2 grid steps if possible."""
    target_m = 512 if W <= 256 else 256
    r = max(8, (target_m // max(W, 1)) // 8 * 8)
    r = min(r, 128)
    bp8 = ((B + 7) // 8) * 8
    r = min(r, bp8)
    # v7x has two TensorCores: prefer >= 2 parallel grid steps when possible.
    while r > 8 and -(-B // r) < 2:
        r -= 8
    return max(r, 8)


# --------------------------------- wrapper ----------------------------------

def spectra_unet_forward(x, params):
    """x: (N, 1, H, W) float32 (NCHW, like PyTorch) -> (N, 1, H, W) float32."""
    N, C, H, W = x.shape
    assert C == 1, "SpectraUNet expects one input channel"
    assert W % 4 == 0 and W >= 12, "need W % 4 == 0 and W >= 12"

    (w1a, b1a, w1b, b1b, w2a, b2a, w2b, b2b, w3a, b3a, w3b, b3b,
     wu2a, bu2a, wu2b, bu2b, wu1a, bu1a, wu1b, bu1b, wl, bl) = params

    B = N * H
    R = _choose_row_block(B, W)
    nb = -(-B // R)
    Bp = nb * R

    # Every (n, h) row is independent; flatten rows and pad to an R multiple.
    xr = x.astype(jnp.float32).reshape(B, W)
    if Bp != B:
        xr = jnp.concatenate([xr, jnp.zeros((Bp - B, W), jnp.float32)], axis=0)

    # Stem im2col, transposed so the per-step DMA block (1, 3, W*R) is
    # lane-dense: element (blk, k, w*R + r) = x[blk*R + r, w + k - 1] (0-padded).
    xp = jnp.pad(xr, ((0, 0), (1, 1)))                           # (Bp, W+2)
    taps = jnp.stack([xp[:, k:k + W] for k in range(3)], axis=0)  # (3, Bp, W)
    xg = (taps.reshape(3, nb, R, W)
          .transpose(1, 0, 3, 2)
          .reshape(nb, 3, W * R))

    W2, W4 = W // 2, W // 4
    ga, ha = _upsample_coefs(W4, 64)    # decoder stage A: W/4 -> W/2, 64 ch
    gb, hb = _upsample_coefs(W2, 32)    # decoder stage B: W/2 -> W,   32 ch

    def ncat(w):  # (3, Cin, Cout) -> (Cin, 3*Cout) = [W0 | W1 | W2]
        return jnp.transpose(w, (1, 0, 2)).reshape(w.shape[1], 3 * w.shape[2])

    kparams = [
        w1a.reshape(3, 16), b1a,
        ncat(w1b), b1b,
        ncat(w2a), b2a, ncat(w2b), b2b,
        ncat(w3a), b3a, ncat(w3b), b3b,
        ncat(wu2a[:, :64, :]), ncat(wu2a[:, 64:, :]), bu2a,
        ncat(wu2b), bu2b,
        ncat(wu1a[:, :32, :]), ncat(wu1a[:, 32:, :]), bu1a,
        ncat(wu1b), bu1b,
        wl, bl,
    ]
    consts = [ga, ha, gb, hb] + kparams

    def _const_spec(p):
        nd = p.ndim
        return pl.BlockSpec(p.shape, lambda b, _nd=nd: (0,) * _nd)

    in_specs = ([pl.BlockSpec((1, 3, W * R), lambda b: (b, 0, 0))]
                + [_const_spec(p) for p in consts])
    out_specs = pl.BlockSpec((1, R, W), lambda b: (b, 0, 0))

    out = pl.pallas_call(
        _spectra_unet_kernel,
        out_shape=jax.ShapeDtypeStruct((nb, R, W), jnp.float32),
        grid_spec=pltpu.PrefetchScalarGridSpec(
            num_scalar_prefetch=0,
            grid=(nb,),
            in_specs=in_specs,
            out_specs=out_specs,
        ),
        compiler_params=pltpu.CompilerParams(
            dimension_semantics=("parallel",),
            vmem_limit_bytes=48 * 1024 * 1024),
    )(xg, *consts)

    # (nb, R, W) -> (Bp, W) -> (N, 1, H, W)   (no transpose: output is row-major)
    yr = out.reshape(Bp, W)[:B]
    return yr.reshape(N, H, W)[:, None, :, :]


# ----------------------- plain-JAX reference (for check) ----------------------

def _ref_forward(x, params):
    (w1a, b1a, w1b, b1b, w2a, b2a, w2b, b2b, w3a, b3a, w3b, b3b,
     wu2a, bu2a, wu2b, bu2b, wu1a, bu1a, wu1b, bu1b, wl, bl) = params
    t = jnp.transpose(x, (0, 2, 3, 1)).astype(jnp.float32)  # NHWC

    def conv(t, w, b):
        Wd = t.shape[2]
        tp = jnp.pad(t, ((0, 0), (0, 0), (1, 1), (0, 0)))
        out = jnp.broadcast_to(b.reshape(1, 1, 1, -1),
                               t.shape[:3] + (w.shape[2],)).astype(jnp.float32)
        for k in range(3):
            out = out + jnp.einsum("nhwc,cd->nhwd", tp[:, :, k:k + Wd, :], w[k])
        return jnp.maximum(out, 0.0)

    def pool(t):
        n, h, wd, c = t.shape
        return jnp.max(t.reshape(n, h, wd // 2, 2, c), axis=3)

    def up(t):
        n, h, wi, c = t.shape
        wo = 2 * wi
        src = jnp.arange(wo, dtype=jnp.float32) * (wi - 1) / (wo - 1)
        i0 = jnp.clip(jnp.floor(src).astype(jnp.int32), 0, wi - 1)
        i1 = jnp.minimum(i0 + 1, wi - 1)
        frac = (src - i0.astype(jnp.float32))[None, None, :, None]
        return (1.0 - frac) * t[:, :, i0, :] + frac * t[:, :, i1, :]

    c1 = conv(conv(t, w1a, b1a), w1b, b1b)
    c2 = conv(conv(pool(c1), w2a, b2a), w2b, b2b)
    c3 = conv(conv(pool(c2), w3a, b3a), w3b, b3b)
    u = jnp.concatenate([up(c3), c2], axis=3)
    u = conv(conv(u, wu2a, bu2a), wu2b, bu2b)
    u = jnp.concatenate([up(u), c1], axis=3)
    u = conv(conv(u, wu1a, bu1a), wu1b, bu1b)
    out = (jnp.sum(u * wl.reshape(1, 1, 1, -1), axis=3, keepdims=True)
           + bl.reshape(1, 1, 1, 1))
    return jnp.transpose(out, (0, 3, 1, 2))


# ----------------------------------- main ------------------------------------

if __name__ == "__main__":
    key = jax.random.PRNGKey(0)
    pkey, xkey, xkey2 = jax.random.split(key, 3)
    params = init_params(pkey)

    # NCHW input like the PyTorch module: N=2, C=1, H=4, W=16  (B = 8 rows)
    x = jax.random.normal(xkey, (2, 1, 4, 16), jnp.float32)
    y = jax.block_until_ready(spectra_unet_forward(x, params))
    assert y.shape == (2, 1, 4, 16) and y.dtype == jnp.float32
    y_ref = _ref_forward(x, params)
    max_err = float(jnp.max(jnp.abs(y - y_ref)))
    assert max_err < 2e-4, f"mismatch vs. reference: {max_err}"

    # Second shape exercising row padding and a multi-step grid (B=24 -> R=16, nb=2).
    x2 = jax.random.normal(xkey2, (2, 1, 12, 16), jnp.float32)
    y2 = jax.block_until_ready(spectra_unet_forward(x2, params))
    assert y2.shape == (2, 1, 12, 16)
    max_err2 = float(jnp.max(jnp.abs(y2 - _ref_forward(x2, params))))
    assert max_err2 < 2e-4, f"mismatch vs. reference (padded case): {max_err2}"

    print("KERNEL_OK")
</pallas_src>

<mosaic_0001>
module attributes {stable_mosaic.version = 11 : i64} {
  func.func @_spectra_unet_kernel(%arg0: i32, %arg1: memref<1x3x128xf32, #tpu.memory_space<vmem>>, %arg2: memref<4x1x64xf32, #tpu.memory_space<vmem>>, %arg3: memref<4x1x64xf32, #tpu.memory_space<vmem>>, %arg4: memref<8x1x32xf32, #tpu.memory_space<vmem>>, %arg5: memref<8x1x32xf32, #tpu.memory_space<vmem>>, %arg6: memref<3x16xf32, #tpu.memory_space<vmem>>, %arg7: memref<1x16xf32, #tpu.memory_space<vmem>>, %arg8: memref<16x48xf32, #tpu.memory_space<vmem>>, %arg9: memref<1x16xf32, #tpu.memory_space<vmem>>, %arg10: memref<16x96xf32, #tpu.memory_space<vmem>>, %arg11: memref<1x32xf32, #tpu.memory_space<vmem>>, %arg12: memref<32x96xf32, #tpu.memory_space<vmem>>, %arg13: memref<1x32xf32, #tpu.memory_space<vmem>>, %arg14: memref<32x192xf32, #tpu.memory_space<vmem>>, %arg15: memref<1x64xf32, #tpu.memory_space<vmem>>, %arg16: memref<64x192xf32, #tpu.memory_space<vmem>>, %arg17: memref<1x64xf32, #tpu.memory_space<vmem>>, %arg18: memref<64x96xf32, #tpu.memory_space<vmem>>, %arg19: memref<32x96xf32, #tpu.memory_space<vmem>>, %arg20: memref<1x32xf32, #tpu.memory_space<vmem>>, %arg21: memref<32x96xf32, #tpu.memory_space<vmem>>, %arg22: memref<1x32xf32, #tpu.memory_space<vmem>>, %arg23: memref<32x48xf32, #tpu.memory_space<vmem>>, %arg24: memref<16x48xf32, #tpu.memory_space<vmem>>, %arg25: memref<1x16xf32, #tpu.memory_space<vmem>>, %arg26: memref<16x48xf32, #tpu.memory_space<vmem>>, %arg27: memref<1x16xf32, #tpu.memory_space<vmem>>, %arg28: memref<1x16xf32, #tpu.memory_space<vmem>>, %arg29: memref<1x1xf32, #tpu.memory_space<vmem>>, %arg30: memref<1x8x16xf32, #tpu.memory_space<vmem>>) attributes {dimension_semantics = [#tpu.dimension_semantics<parallel>], iteration_bounds = array<i64: 1>, scalar_prefetch = 0 : i64, scratch_operands = 0 : i64, tpu.core_type = #tpu.core_type<tc>, window_params = [{transform_indices = @transform_0, window_bounds = array<i64: 1, 3, 128>}, {pipeline_mode = #tpu.pipeline_mode<synchronous>, transform_indices = @transform_1, window_bounds = array<i64: 4, 1, 64>}, {pipeline_mode = #tpu.pipeline_mode<synchronous>, transform_indices = @transform_2, window_bounds = array<i64: 4, 1, 64>}, {pipeline_mode = #tpu.pipeline_mode<synchronous>, transform_indices = @transform_3, window_bounds = array<i64: 8, 1, 32>}, {pipeline_mode = #tpu.pipeline_mode<synchronous>, transform_indices = @transform_4, window_bounds = array<i64: 8, 1, 32>}, {pipeline_mode = #tpu.pipeline_mode<synchronous>, transform_indices = @transform_5, window_bounds = array<i64: 3, 16>}, {pipeline_mode = #tpu.pipeline_mode<synchronous>, transform_indices = @transform_6, window_bounds = array<i64: 1, 16>}, {pipeline_mode = #tpu.pipeline_mode<synchronous>, transform_indices = @transform_7, window_bounds = array<i64: 16, 48>}, {pipeline_mode = #tpu.pipeline_mode<synchronous>, transform_indices = @transform_8, window_bounds = array<i64: 1, 16>}, {pipeline_mode = #tpu.pipeline_mode<synchronous>, transform_indices = @transform_9, window_bounds = array<i64: 16, 96>}, {pipeline_mode = #tpu.pipeline_mode<synchronous>, transform_indices = @transform_10, window_bounds = array<i64: 1, 32>}, {pipeline_mode = #tpu.pipeline_mode<synchronous>, transform_indices = @transform_11, window_bounds = array<i64: 32, 96>}, {pipeline_mode = #tpu.pipeline_mode<synchronous>, transform_indices = @transform_12, window_bounds = array<i64: 1, 32>}, {pipeline_mode = #tpu.pipeline_mode<synchronous>, transform_indices = @transform_13, window_bounds = array<i64: 32, 192>}, {pipeline_mode = #tpu.pipeline_mode<synchronous>, transform_indices = @transform_14, window_bounds = array<i64: 1, 64>}, {pipeline_mode = #tpu.pipeline_mode<synchronous>, transform_indices = @transform_15, window_bounds = array<i64: 64, 192>}, {pipeline_mode = #tpu.pipeline_mode<synchronous>, transform_indices = @transform_16, window_bounds = array<i64: 1, 64>}, {pipeline_mode = #tpu.pipeline_mode<synchronous>, transform_indices = @transform_17, window_bounds = array<i64: 64, 96>}, {pipeline_mode = #tpu.pipeline_mode<synchronous>, transform_indices = @transform_18, window_bounds = array<i64: 32, 96>}, {pipeline_mode = #tpu.pipeline_mode<synchronous>, transform_indices = @transform_19, window_bounds = array<i64: 1, 32>}, {pipeline_mode = #tpu.pipeline_mode<synchronous>, transform_indices = @transform_20, window_bounds = array<i64: 32, 96>}, {pipeline_mode = #tpu.pipeline_mode<synchronous>, transform_indices = @transform_21, window_bounds = array<i64: 1, 32>}, {pipeline_mode = #tpu.pipeline_mode<synchronous>, transform_indices = @transform_22, window_bounds = array<i64: 32, 48>}, {pipeline_mode = #tpu.pipeline_mode<synchronous>, transform_indices = @transform_23, window_bounds = array<i64: 16, 48>}, {pipeline_mode = #tpu.pipeline_mode<synchronous>, transform_indices = @transform_24, window_bounds = array<i64: 1, 16>}, {pipeline_mode = #tpu.pipeline_mode<synchronous>, transform_indices = @transform_25, window_bounds = array<i64: 16, 48>}, {pipeline_mode = #tpu.pipeline_mode<synchronous>, transform_indices = @transform_26, window_bounds = array<i64: 1, 16>}, {pipeline_mode = #tpu.pipeline_mode<synchronous>, transform_indices = @transform_27, window_bounds = array<i64: 1, 16>}, {pipeline_mode = #tpu.pipeline_mode<synchronous>, transform_indices = @transform_28, window_bounds = array<i64: 1, 1>}, {transform_indices = @transform_29, window_bounds = array<i64: 1, 8, 16>}]} {
    %c0 = arith.constant 0 : index
    %c0_0 = arith.constant 0 : index
    %c0_1 = arith.constant 0 : index
    %0 = vector.load %arg1[%c0, %c0_0, %c0_1] : memref<1x3x128xf32, #tpu.memory_space<vmem>>, vector<1x3x128xf32>
    %1 = vector.shape_cast %0 : vector<1x3x128xf32> to vector<3x128xf32>
    %2 = tpu.transpose %1, [1, 0] : vector<3x128xf32> -> vector<128x3xf32>
    %c0_2 = arith.constant 0 : index
    %c0_3 = arith.constant 0 : index
    %3 = vector.load %arg6[%c0_2, %c0_3] : memref<3x16xf32, #tpu.memory_space<vmem>>, vector<3x16xf32>
    %cst = arith.constant dense<0.000000e+00> : vector<128x16xf32>
    %4 = tpu.matmul %2, %3, %cst {dimension_numbers = #tpu.dot_dimension_numbers<[1], [0], [0], [1], [0, 0, 1, 1], [], []>} : vector<128x3xf32>, vector<3x16xf32>, vector<128x16xf32> -> vector<128x16xf32>
    %c0_4 = arith.constant 0 : index
    %c0_5 = arith.constant 0 : index
    %5 = vector.load %arg7[%c0_4, %c0_5] : memref<1x16xf32, #tpu.memory_space<vmem>>, vector<1x16xf32>
    %6 = vector.broadcast %5 : vector<1x16xf32> to vector<128x16xf32>
    %7 = arith.addf %4, %6 : vector<128x16xf32>
    %cst_6 = arith.constant 0.000000e+00 : f32
    %8 = vector.broadcast %cst_6 : f32 to vector<128x16xf32>
    %9 = arith.maximumf %7, %8 : vector<128x16xf32>
    %10 = vector.shape_cast %9 : vector<128x16xf32> to vector<16x8x16xf32>
    %c0_7 = arith.constant 0 : index
    %c0_8 = arith.constant 0 : index
    %11 = vector.load %arg8[%c0_7, %c0_8] : memref<16x48xf32, #tpu.memory_space<vmem>>, vector<16x48xf32>
    %c0_9 = arith.constant 0 : index
    %c0_10 = arith.constant 0 : index
    %12 = vector.load %arg9[%c0_9, %c0_10] : memref<1x16xf32, #tpu.memory_space<vmem>>, vector<1x16xf32>
    %13 = vector.shape_cast %10 : vector<16x8x16xf32> to vector<128x16xf32>
    %cst_11 = arith.constant dense<0.000000e+00> : vector<128x48xf32>
    %14 = tpu.matmul %13, %11, %cst_11 {dimension_numbers = #tpu.dot_dimension_numbers<[1], [0], [0], [1], [0, 0, 1, 1], [], []>} : vector<128x16xf32>, vector<16x48xf32>, vector<128x48xf32> -> vector<128x48xf32>
    %15 = vector.shape_cast %14 : vector<128x48xf32> to vector<16x8x48xf32>
    %16 = vector.extract_strided_slice %15 {offsets = [0, 0, 0], sizes = [16, 8, 16], strides = [1, 1, 1]} : vector<16x8x48xf32> to vector<16x8x16xf32>
    %17 = vector.extract_strided_slice %15 {offsets = [0, 0, 16], sizes = [16, 8, 16], strides = [1, 1, 1]} : vector<16x8x48xf32> to vector<16x8x16xf32>
    %18 = vector.extract_strided_slice %15 {offsets = [0, 0, 32], sizes = [16, 8, 16], strides = [1, 1, 1]} : vector<16x8x48xf32> to vector<16x8x16xf32>
    %19 = vector.extract_strided_slice %17 {offsets = [0, 0, 0], sizes = [1, 8, 16], strides = [1, 1, 1]} : vector<16x8x16xf32> to vector<1x8x16xf32>
    %20 = vector.extract_strided_slice %18 {offsets = [1, 0, 0], sizes = [1, 8, 16], strides = [1, 1, 1]} : vector<16x8x16xf32> to vector<1x8x16xf32>
    %21 = arith.addf %19, %20 : vector<1x8x16xf32>
    %22 = vector.extract_strided_slice %16 {offsets = [0, 0, 0], sizes = [14, 8, 16], strides = [1, 1, 1]} : vector<16x8x16xf32> to vector<14x8x16xf32>
    %23 = vector.extract_strided_slice %17 {offsets = [1, 0, 0], sizes = [14, 8, 16], strides = [1, 1, 1]} : vector<16x8x16xf32> to vector<14x8x16xf32>
    %24 = arith.addf %22, %23 : vector<14x8x16xf32>
    %25 = vector.extract_strided_slice %18 {offsets = [2, 0, 0], sizes = [14, 8, 16], strides = [1, 1, 1]} : vector<16x8x16xf32> to vector<14x8x16xf32>
    %26 = arith.addf %24, %25 : vector<14x8x16xf32>
    %27 = vector.extract_strided_slice %16 {offsets = [14, 0, 0], sizes = [1, 8, 16], strides = [1, 1, 1]} : vector<16x8x16xf32> to vector<1x8x16xf32>
    %28 = vector.extract_strided_slice %17 {offsets = [15, 0, 0], sizes = [1, 8, 16], strides = [1, 1, 1]} : vector<16x8x16xf32> to vector<1x8x16xf32>
    %29 = arith.addf %27, %28 : vector<1x8x16xf32>
    %30 = tpu.concatenate %21, %26, %29 in 0 : vector<1x8x16xf32>, vector<14x8x16xf32>, vector<1x8x16xf32> -> vector<16x8x16xf32>
    %31 = vector.shape_cast %12 : vector<1x16xf32> to vector<1x1x16xf32>
    %32 = vector.broadcast %31 : vector<1x1x16xf32> to vector<16x8x16xf32>
    %33 = arith.addf %30, %32 : vector<16x8x16xf32>
    %cst_12 = arith.constant 0.000000e+00 : f32
    %34 = vector.broadcast %cst_12 : f32 to vector<16x8x16xf32>
    %35 = arith.maximumf %33, %34 : vector<16x8x16xf32>
    %36 = vector.shape_cast %35 : vector<16x8x16xf32> to vector<8x2x8x16xf32>
    %37 = vector.extract_strided_slice %36 {offsets = [0, 0, 0, 0], sizes = [8, 1, 8, 16], strides = [1, 1, 1, 1]} : vector<8x2x8x16xf32> to vector<8x1x8x16xf32>
    %38 = vector.shape_cast %37 : vector<8x1x8x16xf32> to vector<8x8x16xf32>
    %39 = vector.extract_strided_slice %36 {offsets = [0, 1, 0, 0], sizes = [8, 1, 8, 16], strides = [1, 1, 1, 1]} : vector<8x2x8x16xf32> to vector<8x1x8x16xf32>
    %40 = vector.shape_cast %39 : vector<8x1x8x16xf32> to vector<8x8x16xf32>
    %41 = arith.maximumf %38, %40 : vector<8x8x16xf32>
    %c0_13 = arith.constant 0 : index
    %c0_14 = arith.constant 0 : index
    %42 = vector.load %arg10[%c0_13, %c0_14] : memref<16x96xf32, #tpu.memory_space<vmem>>, vector<16x96xf32>
    %c0_15 = arith.constant 0 : index
    %c0_16 = arith.constant 0 : index
    %43 = vector.load %arg11[%c0_15, %c0_16] : memref<1x32xf32, #tpu.memory_space<vmem>>, vector<1x32xf32>
    %44 = vector.shape_cast %41 : vector<8x8x16xf32> to vector<64x16xf32>
    %cst_17 = arith.constant dense<0.000000e+00> : vector<64x96xf32>
    %45 = tpu.matmul %44, %42, %cst_17 {dimension_numbers = #tpu.dot_dimension_numbers<[1], [0], [0], [1], [0, 0, 1, 1], [], []>} : vector<64x16xf32>, vector<16x96xf32>, vector<64x96xf32> -> vector<64x96xf32>
    %46 = vector.shape_cast %45 : vector<64x96xf32> to vector<8x8x96xf32>
    %47 = vector.extract_strided_slice %46 {offsets = [0, 0, 0], sizes = [8, 8, 32], strides = [1, 1, 1]} : vector<8x8x96xf32> to vector<8x8x32xf32>
    %48 = vector.extract_strided_slice %46 {offsets = [0, 0, 32], sizes = [8, 8, 32], strides = [1, 1, 1]} : vector<8x8x96xf32> to vector<8x8x32xf32>
    %49 = vector.extract_strided_slice %46 {offsets = [0, 0, 64], sizes = [8, 8, 32], strides = [1, 1, 1]} : vector<8x8x96xf32> to vector<8x8x32xf32>
    %50 = vector.extract_strided_slice %48 {offsets = [0, 0, 0], sizes = [1, 8, 32], strides = [1, 1, 1]} : vector<8x8x32xf32> to vector<1x8x32xf32>
    %51 = vector.extract_strided_slice %49 {offsets = [1, 0, 0], sizes = [1, 8, 32], strides = [1, 1, 1]} : vector<8x8x32xf32> to vector<1x8x32xf32>
    %52 = arith.addf %50, %51 : vector<1x8x32xf32>
    %53 = vector.extract_strided_slice %47 {offsets = [0, 0, 0], sizes = [6, 8, 32], strides = [1, 1, 1]} : vector<8x8x32xf32> to vector<6x8x32xf32>
    %54 = vector.extract_strided_slice %48 {offsets = [1, 0, 0], sizes = [6, 8, 32], strides = [1, 1, 1]} : vector<8x8x32xf32> to vector<6x8x32xf32>
    %55 = arith.addf %53, %54 : vector<6x8x32xf32>
    %56 = vector.extract_strided_slice %49 {offsets = [2, 0, 0], sizes = [6, 8, 32], strides = [1, 1, 1]} : vector<8x8x32xf32> to vector<6x8x32xf32>
    %57 = arith.addf %55, %56 : vector<6x8x32xf32>
    %58 = vector.extract_strided_slice %47 {offsets = [6, 0, 0], sizes = [1, 8, 32], strides = [1, 1, 1]} : vector<8x8x32xf32> to vector<1x8x32xf32>
    %59 = vector.extract_strided_slice %48 {offsets = [7, 0, 0], sizes = [1, 8, 32], strides = [1, 1, 1]} : vector<8x8x32xf32> to vector<1x8x32xf32>
    %60 = arith.addf %58, %59 : vector<1x8x32xf32>
    %61 = tpu.concatenate %52, %57, %60 in 0 : vector<1x8x32xf32>, vector<6x8x32xf32>, vector<1x8x32xf32> -> vector<8x8x32xf32>
    %62 = vector.shape_cast %43 : vector<1x32xf32> to vector<1x1x32xf32>
    %63 = vector.broadcast %62 : vector<1x1x32xf32> to vector<8x8x32xf32>
    %64 = arith.addf %61, %63 : vector<8x8x32xf32>
    %cst_18 = arith.constant 0.000000e+00 : f32
    %65 = vector.broadcast %cst_18 : f32 to vector<8x8x32xf32>
    %66 = arith.maximumf %64, %65 : vector<8x8x32xf32>
    %c0_19 = arith.constant 0 : index
    %c0_20 = arith.constant 0 : index
    %67 = vector.load %arg12[%c0_19, %c0_20] : memref<32x96xf32, #tpu.memory_space<vmem>>, vector<32x96xf32>
    %c0_21 = arith.constant 0 : index
    %c0_22 = arith.constant 0 : index
    %68 = vector.load %arg13[%c0_21, %c0_22] : memref<1x32xf32, #tpu.memory_space<vmem>>, vector<1x32xf32>
    %69 = vector.shape_cast %66 : vector<8x8x32xf32> to vector<64x32xf32>
    %cst_23 = arith.constant dense<0.000000e+00> : vector<64x96xf32>
    %70 = tpu.matmul %69, %67, %cst_23 {dimension_numbers = #tpu.dot_dimension_numbers<[1], [0], [0], [1], [0, 0, 1, 1], [], []>} : vector<64x32xf32>, vector<32x96xf32>, vector<64x96xf32> -> vector<64x96xf32>
    %71 = vector.shape_cast %70 : vector<64x96xf32> to vector<8x8x96xf32>
    %72 = vector.extract_strided_slice %71 {offsets = [0, 0, 0], sizes = [8, 8, 32], strides = [1, 1, 1]} : vector<8x8x96xf32> to vector<8x8x32xf32>
    %73 = vector.extract_strided_slice %71 {offsets = [0, 0, 32], sizes = [8, 8, 32], strides = [1, 1, 1]} : vector<8x8x96xf32> to vector<8x8x32xf32>
    %74 = vector.extract_strided_slice %71 {offsets = [0, 0, 64], sizes = [8, 8, 32], strides = [1, 1, 1]} : vector<8x8x96xf32> to vector<8x8x32xf32>
    %75 = vector.extract_strided_slice %73 {offsets = [0, 0, 0], sizes = [1, 8, 32], strides = [1, 1, 1]} : vector<8x8x32xf32> to vector<1x8x32xf32>
    %76 = vector.extract_strided_slice %74 {offsets = [1, 0, 0], sizes = [1, 8, 32], strides = [1, 1, 1]} : vector<8x8x32xf32> to vector<1x8x32xf32>
    %77 = arith.addf %75, %76 : vector<1x8x32xf32>
    %78 = vector.extract_strided_slice %72 {offsets = [0, 0, 0], sizes = [6, 8, 32], strides = [1, 1, 1]} : vector<8x8x32xf32> to vector<6x8x32xf32>
    %79 = vector.extract_strided_slice %73 {offsets = [1, 0, 0], sizes = [6, 8, 32], strides = [1, 1, 1]} : vector<8x8x32xf32> to vector<6x8x32xf32>
    %80 = arith.addf %78, %79 : vector<6x8x32xf32>
    %81 = vector.extract_strided_slice %74 {offsets = [2, 0, 0], sizes = [6, 8, 32], strides = [1, 1, 1]} : vector<8x8x32xf32> to vector<6x8x32xf32>
    %82 = arith.addf %80, %81 : vector<6x8x32xf32>
    %83 = vector.extract_strided_slice %72 {offsets = [6, 0, 0], sizes = [1, 8, 32], strides = [1, 1, 1]} : vector<8x8x32xf32> to vector<1x8x32xf32>
    %84 = vector.extract_strided_slice %73 {offsets = [7, 0, 0], sizes = [1, 8, 32], strides = [1, 1, 1]} : vector<8x8x32xf32> to vector<1x8x32xf32>
    %85 = arith.addf %83, %84 : vector<1x8x32xf32>
    %86 = tpu.concatenate %77, %82, %85 in 0 : vector<1x8x32xf32>, vector<6x8x32xf32>, vector<1x8x32xf32> -> vector<8x8x32xf32>
    %87 = vector.shape_cast %68 : vector<1x32xf32> to vector<1x1x32xf32>
    %88 = vector.broadcast %87 : vector<1x1x32xf32> to vector<8x8x32xf32>
    %89 = arith.addf %86, %88 : vector<8x8x32xf32>
    %cst_24 = arith.constant 0.000000e+00 : f32
    %90 = vector.broadcast %cst_24 : f32 to vector<8x8x32xf32>
    %91 = arith.maximumf %89, %90 : vector<8x8x32xf32>
    %92 = vector.shape_cast %91 : vector<8x8x32xf32> to vector<4x2x8x32xf32>
    %93 = vector.extract_strided_slice %92 {offsets = [0, 0, 0, 0], sizes = [4, 1, 8, 32], strides = [1, 1, 1, 1]} : vector<4x2x8x32xf32> to vector<4x1x8x32xf32>
    %94 = vector.shape_cast %93 : vector<4x1x8x32xf32> to vector<4x8x32xf32>
    %95 = vector.extract_strided_slice %92 {offsets = [0, 1, 0, 0], sizes = [4, 1, 8, 32], strides = [1, 1, 1, 1]} : vector<4x2x8x32xf32> to vector<4x1x8x32xf32>
    %96 = vector.shape_cast %95 : vector<4x1x8x32xf32> to vector<4x8x32xf32>
    %97 = arith.maximumf %94, %96 : vector<4x8x32xf32>
    %c0_25 = arith.constant 0 : index
    %c0_26 = arith.constant 0 : index
    %98 = vector.load %arg14[%c0_25, %c0_26] : memref<32x192xf32, #tpu.memory_space<vmem>>, vector<32x192xf32>
    %c0_27 = arith.constant 0 : index
    %c0_28 = arith.constant 0 : index
    %99 = vector.load %arg15[%c0_27, %c0_28] : memref<1x64xf32, #tpu.memory_space<vmem>>, vector<1x64xf32>
    %100 = vector.shape_cast %97 : vector<4x8x32xf32> to vector<32x32xf32>
    %cst_29 = arith.constant dense<0.000000e+00> : vector<32x192xf32>
    %101 = tpu.matmul %100, %98, %cst_29 {dimension_numbers = #tpu.dot_dimension_numbers<[1], [0], [0], [1], [0, 0, 1, 1], [], []>} : vector<32x32xf32>, vector<32x192xf32>, vector<32x192xf32> -> vector<32x192xf32>
    %102 = vector.shape_cast %101 : vector<32x192xf32> to vector<4x8x192xf32>
    %103 = vector.extract_strided_slice %102 {offsets = [0, 0, 0], sizes = [4, 8, 64], strides = [1, 1, 1]} : vector<4x8x192xf32> to vector<4x8x64xf32>
    %104 = vector.extract_strided_slice %102 {offsets = [0, 0, 64], sizes = [4, 8, 64], strides = [1, 1, 1]} : vector<4x8x192xf32> to vector<4x8x64xf32>
    %105 = vector.extract_strided_slice %102 {offsets = [0, 0, 128], sizes = [4, 8, 64], strides = [1, 1, 1]} : vector<4x8x192xf32> to vector<4x8x64xf32>
    %106 = vector.extract_strided_slice %104 {offsets = [0, 0, 0], sizes = [1, 8, 64], strides = [1, 1, 1]} : vector<4x8x64xf32> to vector<1x8x64xf32>
    %107 = vector.extract_strided_slice %105 {offsets = [1, 0, 0], sizes = [1, 8, 64], strides = [1, 1, 1]} : vector<4x8x64xf32> to vector<1x8x64xf32>
    %108 = arith.addf %106, %107 : vector<1x8x64xf32>
    %109 = vector.extract_strided_slice %103 {offsets = [0, 0, 0], sizes = [2, 8, 64], strides = [1, 1, 1]} : vector<4x8x64xf32> to vector<2x8x64xf32>
    %110 = vector.extract_strided_slice %104 {offsets = [1, 0, 0], sizes = [2, 8, 64], strides = [1, 1, 1]} : vector<4x8x64xf32> to vector<2x8x64xf32>
    %111 = arith.addf %109, %110 : vector<2x8x64xf32>
    %112 = vector.extract_strided_slice %105 {offsets = [2, 0, 0], sizes = [2, 8, 64], strides = [1, 1, 1]} : vector<4x8x64xf32> to vector<2x8x64xf32>
    %113 = arith.addf %111, %112 : vector<2x8x64xf32>
    %114 = vector.extract_strided_slice %103 {offsets = [2, 0, 0], sizes = [1, 8, 64], strides = [1, 1, 1]} : vector<4x8x64xf32> to vector<1x8x64xf32>
    %115 = vector.extract_strided_slice %104 {offsets = [3, 0, 0], sizes = [1, 8, 64], strides = [1, 1, 1]} : vector<4x8x64xf32> to vector<1x8x64xf32>
    %116 = arith.addf %114, %115 : vector<1x8x64xf32>
    %117 = tpu.concatenate %108, %113, %116 in 0 : vector<1x8x64xf32>, vector<2x8x64xf32>, vector<1x8x64xf32> -> vector<4x8x64xf32>
    %118 = vector.shape_cast %99 : vector<1x64xf32> to vector<1x1x64xf32>
    %119 = vector.broadcast %118 : vector<1x1x64xf32> to vector<4x8x64xf32>
    %120 = arith.addf %117, %119 : vector<4x8x64xf32>
    %cst_30 = arith.constant 0.000000e+00 : f32
    %121 = vector.broadcast %cst_30 : f32 to vector<4x8x64xf32>
    %122 = arith.maximumf %120, %121 : vector<4x8x64xf32>
    %c0_31 = arith.constant 0 : index
    %c0_32 = arith.constant 0 : index
    %123 = vector.load %arg16[%c0_31, %c0_32] : memref<64x192xf32, #tpu.memory_space<vmem>>, vector<64x192xf32>
    %c0_33 = arith.constant 0 : index
    %c0_34 = arith.constant 0 : index
    %124 = vector.load %arg17[%c0_33, %c0_34] : memref<1x64xf32, #tpu.memory_space<vmem>>, vector<1x64xf32>
    %125 = vector.shape_cast %122 : vector<4x8x64xf32> to vector<32x64xf32>
    %cst_35 = arith.constant dense<0.000000e+00> : vector<32x192xf32>
    %126 = tpu.matmul %125, %123, %cst_35 {dimension_numbers = #tpu.dot_dimension_numbers<[1], [0], [0], [1], [0, 0, 1, 1], [], []>} : vector<32x64xf32>, vector<64x192xf32>, vector<32x192xf32> -> vector<32x192xf32>
    %127 = vector.shape_cast %126 : vector<32x192xf32> to vector<4x8x192xf32>
    %128 = vector.extract_strided_slice %127 {offsets = [0, 0, 0], sizes = [4, 8, 64], strides = [1, 1, 1]} : vector<4x8x192xf32> to vector<4x8x64xf32>
    %129 = vector.extract_strided_slice %127 {offsets = [0, 0, 64], sizes = [4, 8, 64], strides = [1, 1, 1]} : vector<4x8x192xf32> to vector<4x8x64xf32>
    %130 = vector.extract_strided_slice %127 {offsets = [0, 0, 128], sizes = [4, 8, 64], strides = [1, 1, 1]} : vector<4x8x192xf32> to vector<4x8x64xf32>
    %131 = vector.extract_strided_slice %129 {offsets = [0, 0, 0], sizes = [1, 8, 64], strides = [1, 1, 1]} : vector<4x8x64xf32> to vector<1x8x64xf32>
    %132 = vector.extract_strided_slice %130 {offsets = [1, 0, 0], sizes = [1, 8, 64], strides = [1, 1, 1]} : vector<4x8x64xf32> to vector<1x8x64xf32>
    %133 = arith.addf %131, %132 : vector<1x8x64xf32>
    %134 = vector.extract_strided_slice %128 {offsets = [0, 0, 0], sizes = [2, 8, 64], strides = [1, 1, 1]} : vector<4x8x64xf32> to vector<2x8x64xf32>
    %135 = vector.extract_strided_slice %129 {offsets = [1, 0, 0], sizes = [2, 8, 64], strides = [1, 1, 1]} : vector<4x8x64xf32> to vector<2x8x64xf32>
    %136 = arith.addf %134, %135 : vector<2x8x64xf32>
    %137 = vector.extract_strided_slice %130 {offsets = [2, 0, 0], sizes = [2, 8, 64], strides = [1, 1, 1]} : vector<4x8x64xf32> to vector<2x8x64xf32>
    %138 = arith.addf %136, %137 : vector<2x8x64xf32>
    %139 = vector.extract_strided_slice %128 {offsets = [2, 0, 0], sizes = [1, 8, 64], strides = [1, 1, 1]} : vector<4x8x64xf32> to vector<1x8x64xf32>
    %140 = vector.extract_strided_slice %129 {offsets = [3, 0, 0], sizes = [1, 8, 64], strides = [1, 1, 1]} : vector<4x8x64xf32> to vector<1x8x64xf32>
    %141 = arith.addf %139, %140 : vector<1x8x64xf32>
    %142 = tpu.concatenate %133, %138, %141 in 0 : vector<1x8x64xf32>, vector<2x8x64xf32>, vector<1x8x64xf32> -> vector<4x8x64xf32>
    %143 = vector.shape_cast %124 : vector<1x64xf32> to vector<1x1x64xf32>
    %144 = vector.broadcast %143 : vector<1x1x64xf32> to vector<4x8x64xf32>
    %145 = arith.addf %142, %144 : vector<4x8x64xf32>
    %cst_36 = arith.constant 0.000000e+00 : f32
    %146 = vector.broadcast %cst_36 : f32 to vector<4x8x64xf32>
    %147 = arith.maximumf %145, %146 : vector<4x8x64xf32>
    %c0_37 = arith.constant 0 : index
    %c0_38 = arith.constant 0 : index
    %c0_39 = arith.constant 0 : index
    %148 = vector.load %arg2[%c0_37, %c0_38, %c0_39] : memref<4x1x64xf32, #tpu.memory_space<vmem>>, vector<4x1x64xf32>
    %c0_40 = arith.constant 0 : index
    %c0_41 = arith.constant 0 : index
    %c0_42 = arith.constant 0 : index
    %149 = vector.load %arg3[%c0_40, %c0_41, %c0_42] : memref<4x1x64xf32, #tpu.memory_space<vmem>>, vector<4x1x64xf32>
    %150 = vector.extract_strided_slice %148 {offsets = [0, 0, 0], sizes = [3, 1, 64], strides = [1, 1, 1]} : vector<4x1x64xf32> to vector<3x1x64xf32>
    %151 = vector.extract_strided_slice %149 {offsets = [1, 0, 0], sizes = [3, 1, 64], strides = [1, 1, 1]} : vector<4x1x64xf32> to vector<3x1x64xf32>
    %152 = vector.extract_strided_slice %147 {offsets = [0, 0, 0], sizes = [3, 8, 64], strides = [1, 1, 1]} : vector<4x8x64xf32> to vector<3x8x64xf32>
    %cst_43 = arith.constant 1.000000e+00 : f32
    %153 = vector.broadcast %cst_43 : f32 to vector<3x1x64xf32>
    %154 = arith.subf %153, %150 : vector<3x1x64xf32>
    %155 = vector.broadcast %154 : vector<3x1x64xf32> to vector<3x8x64xf32>
    %156 = arith.mulf %152, %155 : vector<3x8x64xf32>
    %157 = vector.extract_strided_slice %147 {offsets = [1, 0, 0], sizes = [3, 8, 64], strides = [1, 1, 1]} : vector<4x8x64xf32> to vector<3x8x64xf32>
    %158 = vector.broadcast %150 : vector<3x1x64xf32> to vector<3x8x64xf32>
    %159 = arith.mulf %157, %158 : vector<3x8x64xf32>
    %160 = arith.addf %156, %159 : vector<3x8x64xf32>
    %161 = vector.extract_strided_slice %147 {offsets = [0, 0, 0], sizes = [3, 8, 64], strides = [1, 1, 1]} : vector<4x8x64xf32> to vector<3x8x64xf32>
    %cst_44 = arith.constant 1.000000e+00 : f32
    %162 = vector.broadcast %cst_44 : f32 to vector<3x1x64xf32>
    %163 = arith.subf %162, %151 : vector<3x1x64xf32>
    %164 = vector.broadcast %163 : vector<3x1x64xf32> to vector<3x8x64xf32>
    %165 = arith.mulf %161, %164 : vector<3x8x64xf32>
    %166 = vector.extract_strided_slice %147 {offsets = [1, 0, 0], sizes = [3, 8, 64], strides = [1, 1, 1]} : vector<4x8x64xf32> to vector<3x8x64xf32>
    %167 = vector.broadcast %151 : vector<3x1x64xf32> to vector<3x8x64xf32>
    %168 = arith.mulf %166, %167 : vector<3x8x64xf32>
    %169 = arith.addf %165, %168 : vector<3x8x64xf32>
    %170 = vector.extract_strided_slice %147 {offsets = [3, 0, 0], sizes = [1, 8, 64], strides = [1, 1, 1]} : vector<4x8x64xf32> to vector<1x8x64xf32>
    %171 = tpu.concatenate %160, %170 in 0 : vector<3x8x64xf32>, vector<1x8x64xf32> -> vector<4x8x64xf32>
    %172 = vector.extract_strided_slice %147 {offsets = [0, 0, 0], sizes = [1, 8, 64], strides = [1, 1, 1]} : vector<4x8x64xf32> to vector<1x8x64xf32>
    %173 = tpu.concatenate %172, %169 in 0 : vector<1x8x64xf32>, vector<3x8x64xf32> -> vector<4x8x64xf32>
    %174 = vector.shape_cast %173 : vector<4x8x64xf32> to vector<4x1x8x64xf32>
    %175 = vector.shape_cast %171 : vector<4x8x64xf32> to vector<4x1x8x64xf32>
    %176 = tpu.concatenate %174, %175 in 1 : vector<4x1x8x64xf32>, vector<4x1x8x64xf32> -> vector<4x2x8x64xf32>
    %177 = vector.shape_cast %176 : vector<4x2x8x64xf32> to vector<8x8x64xf32>
    %c0_45 = arith.constant 0 : index
    %c0_46 = arith.constant 0 : index
    %178 = vector.load %arg18[%c0_45, %c0_46] : memref<64x96xf32, #tpu.memory_space<vmem>>, vector<64x96xf32>
    %c0_47 = arith.constant 0 : index
    %c0_48 = arith.constant 0 : index
    %179 = vector.load %arg19[%c0_47, %c0_48] : memref<32x96xf32, #tpu.memory_space<vmem>>, vector<32x96xf32>
    %c0_49 = arith.constant 0 : index
    %c0_50 = arith.constant 0 : index
    %180 = vector.load %arg20[%c0_49, %c0_50] : memref<1x32xf32, #tpu.memory_space<vmem>>, vector<1x32xf32>
    %181 = vector.shape_cast %177 : vector<8x8x64xf32> to vector<64x64xf32>
    %cst_51 = arith.constant dense<0.000000e+00> : vector<64x96xf32>
    %182 = tpu.matmul %181, %178, %cst_51 {dimension_numbers = #tpu.dot_dimension_numbers<[1], [0], [0], [1], [0, 0, 1, 1], [], []>} : vector<64x64xf32>, vector<64x96xf32>, vector<64x96xf32> -> vector<64x96xf32>
    %183 = vector.shape_cast %91 : vector<8x8x32xf32> to vector<64x32xf32>
    %cst_52 = arith.constant dense<0.000000e+00> : vector<64x96xf32>
    %184 = tpu.matmul %183, %179, %cst_52 {dimension_numbers = #tpu.dot_dimension_numbers<[1], [0], [0], [1], [0, 0, 1, 1], [], []>} : vector<64x32xf32>, vector<32x96xf32>, vector<64x96xf32> -> vector<64x96xf32>
    %185 = arith.addf %182, %184 : vector<64x96xf32>
    %186 = vector.shape_cast %185 : vector<64x96xf32> to vector<8x8x96xf32>
    %187 = vector.extract_strided_slice %186 {offsets = [0, 0, 0], sizes = [8, 8, 32], strides = [1, 1, 1]} : vector<8x8x96xf32> to vector<8x8x32xf32>
    %188 = vector.extract_strided_slice %186 {offsets = [0, 0, 32], sizes = [8, 8, 32], strides = [1, 1, 1]} : vector<8x8x96xf32> to vector<8x8x32xf32>
    %189 = vector.extract_strided_slice %186 {offsets = [0, 0, 64], sizes = [8, 8, 32], strides = [1, 1, 1]} : vector<8x8x96xf32> to vector<8x8x32xf32>
    %190 = vector.extract_strided_slice %188 {offsets = [0, 0, 0], sizes = [1, 8, 32], strides = [1, 1, 1]} : vector<8x8x32xf32> to vector<1x8x32xf32>
    %191 = vector.extract_strided_slice %189 {offsets = [1, 0, 0], sizes = [1, 8, 32], strides = [1, 1, 1]} : vector<8x8x32xf32> to vector<1x8x32xf32>
    %192 = arith.addf %190, %191 : vector<1x8x32xf32>
    %193 = vector.extract_strided_slice %187 {offsets = [0, 0, 0], sizes = [6, 8, 32], strides = [1, 1, 1]} : vector<8x8x32xf32> to vector<6x8x32xf32>
    %194 = vector.extract_strided_slice %188 {offsets = [1, 0, 0], sizes = [6, 8, 32], strides = [1, 1, 1]} : vector<8x8x32xf32> to vector<6x8x32xf32>
    %195 = arith.addf %193, %194 : vector<6x8x32xf32>
    %196 = vector.extract_strided_slice %189 {offsets = [2, 0, 0], sizes = [6, 8, 32], strides = [1, 1, 1]} : vector<8x8x32xf32> to vector<6x8x32xf32>
    %197 = arith.addf %195, %196 : vector<6x8x32xf32>
    %198 = vector.extract_strided_slice %187 {offsets = [6, 0, 0], sizes = [1, 8, 32], strides = [1, 1, 1]} : vector<8x8x32xf32> to vector<1x8x32xf32>
    %199 = vector.extract_strided_slice %188 {offsets = [7, 0, 0], sizes = [1, 8, 32], strides = [1, 1, 1]} : vector<8x8x32xf32> to vector<1x8x32xf32>
    %200 = arith.addf %198, %199 : vector<1x8x32xf32>
    %201 = tpu.concatenate %192, %197, %200 in 0 : vector<1x8x32xf32>, vector<6x8x32xf32>, vector<1x8x32xf32> -> vector<8x8x32xf32>
    %202 = vector.shape_cast %180 : vector<1x32xf32> to vector<1x1x32xf32>
    %203 = vector.broadcast %202 : vector<1x1x32xf32> to vector<8x8x32xf32>
    %204 = arith.addf %201, %203 : vector<8x8x32xf32>
    %cst_53 = arith.constant 0.000000e+00 : f32
    %205 = vector.broadcast %cst_53 : f32 to vector<8x8x32xf32>
    %206 = arith.maximumf %204, %205 : vector<8x8x32xf32>
    %c0_54 = arith.constant 0 : index
    %c0_55 = arith.constant 0 : index
    %207 = vector.load %arg21[%c0_54, %c0_55] : memref<32x96xf32, #tpu.memory_space<vmem>>, vector<32x96xf32>
    %c0_56 = arith.constant 0 : index
    %c0_57 = arith.constant 0 : index
    %208 = vector.load %arg22[%c0_56, %c0_57] : memref<1x32xf32, #tpu.memory_space<vmem>>, vector<1x32xf32>
    %209 = vector.shape_cast %206 : vector<8x8x32xf32> to vector<64x32xf32>
    %cst_58 = arith.constant dense<0.000000e+00> : vector<64x96xf32>
    %210 = tpu.matmul %209, %207, %cst_58 {dimension_numbers = #tpu.dot_dimension_numbers<[1], [0], [0], [1], [0, 0, 1, 1], [], []>} : vector<64x32xf32>, vector<32x96xf32>, vector<64x96xf32> -> vector<64x96xf32>
    %211 = vector.shape_cast %210 : vector<64x96xf32> to vector<8x8x96xf32>
    %212 = vector.extract_strided_slice %211 {offsets = [0, 0, 0], sizes = [8, 8, 32], strides = [1, 1, 1]} : vector<8x8x96xf32> to vector<8x8x32xf32>
    %213 = vector.extract_strided_slice %211 {offsets = [0, 0, 32], sizes = [8, 8, 32], strides = [1, 1, 1]} : vector<8x8x96xf32> to vector<8x8x32xf32>
    %214 = vector.extract_strided_slice %211 {offsets = [0, 0, 64], sizes = [8, 8, 32], strides = [1, 1, 1]} : vector<8x8x96xf32> to vector<8x8x32xf32>
    %215 = vector.extract_strided_slice %213 {offsets = [0, 0, 0], sizes = [1, 8, 32], strides = [1, 1, 1]} : vector<8x8x32xf32> to vector<1x8x32xf32>
    %216 = vector.extract_strided_slice %214 {offsets = [1, 0, 0], sizes = [1, 8, 32], strides = [1, 1, 1]} : vector<8x8x32xf32> to vector<1x8x32xf32>
    %217 = arith.addf %215, %216 : vector<1x8x32xf32>
    %218 = vector.extract_strided_slice %212 {offsets = [0, 0, 0], sizes = [6, 8, 32], strides = [1, 1, 1]} : vector<8x8x32xf32> to vector<6x8x32xf32>
    %219 = vector.extract_strided_slice %213 {offsets = [1, 0, 0], sizes = [6, 8, 32], strides = [1, 1, 1]} : vector<8x8x32xf32> to vector<6x8x32xf32>
    %220 = arith.addf %218, %219 : vector<6x8x32xf32>
    %221 = vector.extract_strided_slice %214 {offsets = [2, 0, 0], sizes = [6, 8, 32], strides = [1, 1, 1]} : vector<8x8x32xf32> to vector<6x8x32xf32>
    %222 = arith.addf %220, %221 : vector<6x8x32xf32>
    %223 = vector.extract_strided_slice %212 {offsets = [6, 0, 0], sizes = [1, 8, 32], strides = [1, 1, 1]} : vector<8x8x32xf32> to vector<1x8x32xf32>
    %224 = vector.extract_strided_slice %213 {offsets = [7, 0, 0], sizes = [1, 8, 32], strides = [1, 1, 1]} : vector<8x8x32xf32> to vector<1x8x32xf32>
    %225 = arith.addf %223, %224 : vector<1x8x32xf32>
    %226 = tpu.concatenate %217, %222, %225 in 0 : vector<1x8x32xf32>, vector<6x8x32xf32>, vector<1x8x32xf32> -> vector<8x8x32xf32>
    %227 = vector.shape_cast %208 : vector<1x32xf32> to vector<1x1x32xf32>
    %228 = vector.broadcast %227 : vector<1x1x32xf32> to vector<8x8x32xf32>
    %229 = arith.addf %226, %228 : vector<8x8x32xf32>
    %cst_59 = arith.constant 0.000000e+00 : f32
    %230 = vector.broadcast %cst_59 : f32 to vector<8x8x32xf32>
    %231 = arith.maximumf %229, %230 : vector<8x8x32xf32>
    %c0_60 = arith.constant 0 : index
    %c0_61 = arith.constant 0 : index
    %c0_62 = arith.constant 0 : index
    %232 = vector.load %arg4[%c0_60, %c0_61, %c0_62] : memref<8x1x32xf32, #tpu.memory_space<vmem>>, vector<8x1x32xf32>
    %c0_63 = arith.constant 0 : index
    %c0_64 = arith.constant 0 : index
    %c0_65 = arith.constant 0 : index
    %233 = vector.load %arg5[%c0_63, %c0_64, %c0_65] : memref<8x1x32xf32, #tpu.memory_space<vmem>>, vector<8x1x32xf32>
    %234 = vector.extract_strided_slice %232 {offsets = [0, 0, 0], sizes = [7, 1, 32], strides = [1, 1, 1]} : vector<8x1x32xf32> to vector<7x1x32xf32>
    %235 = vector.extract_strided_slice %233 {offsets = [1, 0, 0], sizes = [7, 1, 32], strides = [1, 1, 1]} : vector<8x1x32xf32> to vector<7x1x32xf32>
    %236 = vector.extract_strided_slice %231 {offsets = [0, 0, 0], sizes = [7, 8, 32], strides = [1, 1, 1]} : vector<8x8x32xf32> to vector<7x8x32xf32>
    %cst_66 = arith.constant 1.000000e+00 : f32
    %237 = vector.broadcast %cst_66 : f32 to vector<7x1x32xf32>
    %238 = arith.subf %237, %234 : vector<7x1x32xf32>
    %239 = vector.broadcast %238 : vector<7x1x32xf32> to vector<7x8x32xf32>
    %240 = arith.mulf %236, %239 : vector<7x8x32xf32>
    %241 = vector.extract_strided_slice %231 {offsets = [1, 0, 0], sizes = [7, 8, 32], strides = [1, 1, 1]} : vector<8x8x32xf32> to vector<7x8x32xf32>
    %242 = vector.broadcast %234 : vector<7x1x32xf32> to vector<7x8x32xf32>
    %243 = arith.mulf %241, %242 : vector<7x8x32xf32>
    %244 = arith.addf %240, %243 : vector<7x8x32xf32>
    %245 = vector.extract_strided_slice %231 {offsets = [0, 0, 0], sizes = [7, 8, 32], strides = [1, 1, 1]} : vector<8x8x32xf32> to vector<7x8x32xf32>
    %cst_67 = arith.constant 1.000000e+00 : f32
    %246 = vector.broadcast %cst_67 : f32 to vector<7x1x32xf32>
    %247 = arith.subf %246, %235 : vector<7x1x32xf32>
    %248 = vector.broadcast %247 : vector<7x1x32xf32> to vector<7x8x32xf32>
    %249 = arith.mulf %245, %248 : vector<7x8x32xf32>
    %250 = vector.extract_strided_slice %231 {offsets = [1, 0, 0], sizes = [7, 8, 32], strides = [1, 1, 1]} : vector<8x8x32xf32> to vector<7x8x32xf32>
    %251 = vector.broadcast %235 : vector<7x1x32xf32> to vector<7x8x32xf32>
    %252 = arith.mulf %250, %251 : vector<7x8x32xf32>
    %253 = arith.addf %249, %252 : vector<7x8x32xf32>
    %254 = vector.extract_strided_slice %231 {offsets = [7, 0, 0], sizes = [1, 8, 32], strides = [1, 1, 1]} : vector<8x8x32xf32> to vector<1x8x32xf32>
    %255 = tpu.concatenate %244, %254 in 0 : vector<7x8x32xf32>, vector<1x8x32xf32> -> vector<8x8x32xf32>
    %256 = vector.extract_strided_slice %231 {offsets = [0, 0, 0], sizes = [1, 8, 32], strides = [1, 1, 1]} : vector<8x8x32xf32> to vector<1x8x32xf32>
    %257 = tpu.concatenate %256, %253 in 0 : vector<1x8x32xf32>, vector<7x8x32xf32> -> vector<8x8x32xf32>
    %258 = vector.shape_cast %257 : vector<8x8x32xf32> to vector<8x1x8x32xf32>
    %259 = vector.shape_cast %255 : vector<8x8x32xf32> to vector<8x1x8x32xf32>
    %260 = tpu.concatenate %258, %259 in 1 : vector<8x1x8x32xf32>, vector<8x1x8x32xf32> -> vector<8x2x8x32xf32>
    %261 = vector.shape_cast %260 : vector<8x2x8x32xf32> to vector<16x8x32xf32>
    %c0_68 = arith.constant 0 : index
    %c0_69 = arith.constant 0 : index
    %262 = vector.load %arg23[%c0_68, %c0_69] : memref<32x48xf32, #tpu.memory_space<vmem>>, vector<32x48xf32>
    %c0_70 = arith.constant 0 : index
    %c0_71 = arith.constant 0 : index
    %263 = vector.load %arg24[%c0_70, %c0_71] : memref<16x48xf32, #tpu.memory_space<vmem>>, vector<16x48xf32>
    %c0_72 = arith.constant 0 : index
    %c0_73 = arith.constant 0 : index
    %264 = vector.load %arg25[%c0_72, %c0_73] : memref<1x16xf32, #tpu.memory_space<vmem>>, vector<1x16xf32>
    %265 = vector.shape_cast %261 : vector<16x8x32xf32> to vector<128x32xf32>
    %cst_74 = arith.constant dense<0.000000e+00> : vector<128x48xf32>
    %266 = tpu.matmul %265, %262, %cst_74 {dimension_numbers = #tpu.dot_dimension_numbers<[1], [0], [0], [1], [0, 0, 1, 1], [], []>} : vector<128x32xf32>, vector<32x48xf32>, vector<128x48xf32> -> vector<128x48xf32>
    %267 = vector.shape_cast %35 : vector<16x8x16xf32> to vector<128x16xf32>
    %cst_75 = arith.constant dense<0.000000e+00> : vector<128x48xf32>
    %268 = tpu.matmul %267, %263, %cst_75 {dimension_numbers = #tpu.dot_dimension_numbers<[1], [0], [0], [1], [0, 0, 1, 1], [], []>} : vector<128x16xf32>, vector<16x48xf32>, vector<128x48xf32> -> vector<128x48xf32>
    %269 = arith.addf %266, %268 : vector<128x48xf32>
    %270 = vector.shape_cast %269 : vector<128x48xf32> to vector<16x8x48xf32>
    %271 = vector.extract_strided_slice %270 {offsets = [0, 0, 0], sizes = [16, 8, 16], strides = [1, 1, 1]} : vector<16x8x48xf32> to vector<16x8x16xf32>
    %272 = vector.extract_strided_slice %270 {offsets = [0, 0, 16], sizes = [16, 8, 16], strides = [1, 1, 1]} : vector<16x8x48xf32> to vector<16x8x16xf32>
    %273 = vector.extract_strided_slice %270 {offsets = [0, 0, 32], sizes = [16, 8, 16], strides = [1, 1, 1]} : vector<16x8x48xf32> to vector<16x8x16xf32>
    %274 = vector.extract_strided_slice %272 {offsets = [0, 0, 0], sizes = [1, 8, 16], strides = [1, 1, 1]} : vector<16x8x16xf32> to vector<1x8x16xf32>
    %275 = vector.extract_strided_slice %273 {offsets = [1, 0, 0], sizes = [1, 8, 16], strides = [1, 1, 1]} : vector<16x8x16xf32> to vector<1x8x16xf32>
    %276 = arith.addf %274, %275 : vector<1x8x16xf32>
    %277 = vector.extract_strided_slice %271 {offsets = [0, 0, 0], sizes = [14, 8, 16], strides = [1, 1, 1]} : vector<16x8x16xf32> to vector<14x8x16xf32>
    %278 = vector.extract_strided_slice %272 {offsets = [1, 0, 0], sizes = [14, 8, 16], strides = [1, 1, 1]} : vector<16x8x16xf32> to vector<14x8x16xf32>
    %279 = arith.addf %277, %278 : vector<14x8x16xf32>
    %280 = vector.extract_strided_slice %273 {offsets = [2, 0, 0], sizes = [14, 8, 16], strides = [1, 1, 1]} : vector<16x8x16xf32> to vector<14x8x16xf32>
    %281 = arith.addf %279, %280 : vector<14x8x16xf32>
    %282 = vector.extract_strided_slice %271 {offsets = [14, 0, 0], sizes = [1, 8, 16], strides = [1, 1, 1]} : vector<16x8x16xf32> to vector<1x8x16xf32>
    %283 = vector.extract_strided_slice %272 {offsets = [15, 0, 0], sizes = [1, 8, 16], strides = [1, 1, 1]} : vector<16x8x16xf32> to vector<1x8x16xf32>
    %284 = arith.addf %282, %283 : vector<1x8x16xf32>
    %285 = tpu.concatenate %276, %281, %284 in 0 : vector<1x8x16xf32>, vector<14x8x16xf32>, vector<1x8x16xf32> -> vector<16x8x16xf32>
    %286 = vector.shape_cast %264 : vector<1x16xf32> to vector<1x1x16xf32>
    %287 = vector.broadcast %286 : vector<1x1x16xf32> to vector<16x8x16xf32>
    %288 = arith.addf %285, %287 : vector<16x8x16xf32>
    %cst_76 = arith.constant 0.000000e+00 : f32
    %289 = vector.broadcast %cst_76 : f32 to vector<16x8x16xf32>
    %290 = arith.maximumf %288, %289 : vector<16x8x16xf32>
    %c0_77 = arith.constant 0 : index
    %c0_78 = arith.constant 0 : index
    %291 = vector.load %arg26[%c0_77, %c0_78] : memref<16x48xf32, #tpu.memory_space<vmem>>, vector<16x48xf32>
    %c0_79 = arith.constant 0 : index
    %c0_80 = arith.constant 0 : index
    %292 = vector.load %arg27[%c0_79, %c0_80] : memref<1x16xf32, #tpu.memory_space<vmem>>, vector<1x16xf32>
    %293 = vector.shape_cast %290 : vector<16x8x16xf32> to vector<128x16xf32>
    %cst_81 = arith.constant dense<0.000000e+00> : vector<128x48xf32>
    %294 = tpu.matmul %293, %291, %cst_81 {dimension_numbers = #tpu.dot_dimension_numbers<[1], [0], [0], [1], [0, 0, 1, 1], [], []>} : vector<128x16xf32>, vector<16x48xf32>, vector<128x48xf32> -> vector<128x48xf32>
    %295 = vector.shape_cast %294 : vector<128x48xf32> to vector<16x8x48xf32>
    %296 = vector.extract_strided_slice %295 {offsets = [0, 0, 0], sizes = [16, 8, 16], strides = [1, 1, 1]} : vector<16x8x48xf32> to vector<16x8x16xf32>
    %297 = vector.extract_strided_slice %295 {offsets = [0, 0, 16], sizes = [16, 8, 16], strides = [1, 1, 1]} : vector<16x8x48xf32> to vector<16x8x16xf32>
    %298 = vector.extract_strided_slice %295 {offsets = [0, 0, 32], sizes = [16, 8, 16], strides = [1, 1, 1]} : vector<16x8x48xf32> to vector<16x8x16xf32>
    %299 = vector.extract_strided_slice %297 {offsets = [0, 0, 0], sizes = [1, 8, 16], strides = [1, 1, 1]} : vector<16x8x16xf32> to vector<1x8x16xf32>
    %300 = vector.extract_strided_slice %298 {offsets = [1, 0, 0], sizes = [1, 8, 16], strides = [1, 1, 1]} : vector<16x8x16xf32> to vector<1x8x16xf32>
    %301 = arith.addf %299, %300 : vector<1x8x16xf32>
    %302 = vector.extract_strided_slice %296 {offsets = [0, 0, 0], sizes = [14, 8, 16], strides = [1, 1, 1]} : vector<16x8x16xf32> to vector<14x8x16xf32>
    %303 = vector.extract_strided_slice %297 {offsets = [1, 0, 0], sizes = [14, 8, 16], strides = [1, 1, 1]} : vector<16x8x16xf32> to vector<14x8x16xf32>
    %304 = arith.addf %302, %303 : vector<14x8x16xf32>
    %305 = vector.extract_strided_slice %298 {offsets = [2, 0, 0], sizes = [14, 8, 16], strides = [1, 1, 1]} : vector<16x8x16xf32> to vector<14x8x16xf32>
    %306 = arith.addf %304, %305 : vector<14x8x16xf32>
    %307 = vector.extract_strided_slice %296 {offsets = [14, 0, 0], sizes = [1, 8, 16], strides = [1, 1, 1]} : vector<16x8x16xf32> to vector<1x8x16xf32>
    %308 = vector.extract_strided_slice %297 {offsets = [15, 0, 0], sizes = [1, 8, 16], strides = [1, 1, 1]} : vector<16x8x16xf32> to vector<1x8x16xf32>
    %309 = arith.addf %307, %308 : vector<1x8x16xf32>
    %310 = tpu.concatenate %301, %306, %309 in 0 : vector<1x8x16xf32>, vector<14x8x16xf32>, vector<1x8x16xf32> -> vector<16x8x16xf32>
    %311 = vector.shape_cast %292 : vector<1x16xf32> to vector<1x1x16xf32>
    %312 = vector.broadcast %311 : vector<1x1x16xf32> to vector<16x8x16xf32>
    %313 = arith.addf %310, %312 : vector<16x8x16xf32>
    %cst_82 = arith.constant 0.000000e+00 : f32
    %314 = vector.broadcast %cst_82 : f32 to vector<16x8x16xf32>
    %315 = arith.maximumf %313, %314 : vector<16x8x16xf32>
    %c0_83 = arith.constant 0 : index
    %c0_84 = arith.constant 0 : index
    %316 = vector.load %arg28[%c0_83, %c0_84] : memref<1x16xf32, #tpu.memory_space<vmem>>, vector<1x16xf32>
    %317 = vector.shape_cast %316 : vector<1x16xf32> to vector<1x1x16xf32>
    %318 = vector.broadcast %317 : vector<1x1x16xf32> to vector<16x8x16xf32>
    %319 = arith.mulf %315, %318 : vector<16x8x16xf32>
    %cst_85 = arith.constant dense<0.000000e+00> : vector<16x8xf32>
    %320 = vector.multi_reduction <add>, %319, %cst_85 [2] : vector<16x8x16xf32> to vector<16x8xf32>
    %c0_86 = arith.constant 0 : index
    %c0_87 = arith.constant 0 : index
    %321 = vector.load %arg29[%c0_86, %c0_87] : memref<1x1xf32, #tpu.memory_space<vmem>>, vector<1x1xf32>
    %322 = vector.broadcast %321 : vector<1x1xf32> to vector<16x8xf32>
    %323 = arith.addf %320, %322 : vector<16x8xf32>
    %324 = tpu.transpose %323, [1, 0] : vector<16x8xf32> -> vector<8x16xf32>
    %c0_88 = arith.constant 0 : index
    %c0_89 = arith.constant 0 : index
    %c0_90 = arith.constant 0 : index
    %325 = vector.load %arg30[%c0_88, %c0_89, %c0_90] : memref<1x8x16xf32, #tpu.memory_space<vmem>>, vector<1x8x16xf32>
    %326 = vector.shape_cast %325 : vector<1x8x16xf32> to vector<8x16xf32>
    %327 = vector.shape_cast %324 : vector<8x16xf32> to vector<1x8x16xf32>
    tpu.vector_store %arg30[%c0_88, %c0_89, %c0_90], %327 {strides = array<i32>} : memref<1x8x16xf32, #tpu.memory_space<vmem>>, vector<1x8x16xf32>,
    return
  }
  func.func @transform_0(%arg0: i32) -> (i32, i32, i32) {
    %c0_i32 = arith.constant 0 : i32
    %c0_i32_0 = arith.constant 0 : i32
    %c0_i32_1 = arith.constant 0 : i32
    return %arg0, %c0_i32, %c0_i32_0 : i32, i32, i32
  }
  func.func @transform_1(%arg0: i32) -> (i32, i32, i32) {
    %c0_i32 = arith.constant 0 : i32
    %c0_i32_0 = arith.constant 0 : i32
    %c0_i32_1 = arith.constant 0 : i32
    %c0_i32_2 = arith.constant 0 : i32
    return %c0_i32, %c0_i32_0, %c0_i32_1 : i32, i32, i32
  }
  func.func @transform_2(%arg0: i32) -> (i32, i32, i32) {
    %c0_i32 = arith.constant 0 : i32
    %c0_i32_0 = arith.constant 0 : i32
    %c0_i32_1 = arith.constant 0 : i32
    %c0_i32_2 = arith.constant 0 : i32
    return %c0_i32, %c0_i32_0, %c0_i32_1 : i32, i32, i32
  }
  func.func @transform_3(%arg0: i32) -> (i32, i32, i32) {
    %c0_i32 = arith.constant 0 : i32
    %c0_i32_0 = arith.constant 0 : i32
    %c0_i32_1 = arith.constant 0 : i32
    %c0_i32_2 = arith.constant 0 : i32
    return %c0_i32, %c0_i32_0, %c0_i32_1 : i32, i32, i32
  }
  func.func @transform_4(%arg0: i32) -> (i32, i32, i32) {
    %c0_i32 = arith.constant 0 : i32
    %c0_i32_0 = arith.constant 0 : i32
    %c0_i32_1 = arith.constant 0 : i32
    %c0_i32_2 = arith.constant 0 : i32
    return %c0_i32, %c0_i32_0, %c0_i32_1 : i32, i32, i32
  }
  func.func @transform_5(%arg0: i32) -> (i32, i32) {
    %c0_i32 = arith.constant 0 : i32
    %c0_i32_0 = arith.constant 0 : i32
    %c0_i32_1 = arith.constant 0 : i32
    return %c0_i32, %c0_i32_0 : i32, i32
  }
  func.func @transform_6(%arg0: i32) -> (i32, i32) {
    %c0_i32 = arith.constant 0 : i32
    %c0_i32_0 = arith.constant 0 : i32
    %c0_i32_1 = arith.constant 0 : i32
    return %c0_i32, %c0_i32_0 : i32, i32
  }
  func.func @transform_7(%arg0: i32) -> (i32, i32) {
    %c0_i32 = arith.constant 0 : i32
    %c0_i32_0 = arith.constant 0 : i32
    %c0_i32_1 = arith.constant 0 : i32
    return %c0_i32, %c0_i32_0 : i32, i32
  }
  func.func @transform_8(%arg0: i32) -> (i32, i32) {
    %c0_i32 = arith.constant 0 : i32
    %c0_i32_0 = arith.constant 0 : i32
    %c0_i32_1 = arith.constant 0 : i32
    return %c0_i32, %c0_i32_0 : i32, i32
  }
  func.func @transform_9(%arg0: i32) -> (i32, i32) {
    %c0_i32 = arith.constant 0 : i32
    %c0_i32_0 = arith.constant 0 : i32
    %c0_i32_1 = arith.constant 0 : i32
    return %c0_i32, %c0_i32_0 : i32, i32
  }
  func.func @transform_10(%arg0: i32) -> (i32, i32) {
    %c0_i32 = arith.constant 0 : i32
    %c0_i32_0 = arith.constant 0 : i32
    %c0_i32_1 = arith.constant 0 : i32
    return %c0_i32, %c0_i32_0 : i32, i32
  }
  func.func @transform_11(%arg0: i32) -> (i32, i32) {
    %c0_i32 = arith.constant 0 : i32
    %c0_i32_0 = arith.constant 0 : i32
    %c0_i32_1 = arith.constant 0 : i32
    return %c0_i32, %c0_i32_0 : i32, i32
  }
  func.func @transform_12(%arg0: i32) -> (i32, i32) {
    %c0_i32 = arith.constant 0 : i32
    %c0_i32_0 = arith.constant 0 : i32
    %c0_i32_1 = arith.constant 0 : i32
    return %c0_i32, %c0_i32_0 : i32, i32
  }
  func.func @transform_13(%arg0: i32) -> (i32, i32) {
    %c0_i32 = arith.constant 0 : i32
    %c0_i32_0 = arith.constant 0 : i32
    %c0_i32_1 = arith.constant 0 : i32
    return %c0_i32, %c0_i32_0 : i32, i32
  }
  func.func @transform_14(%arg0: i32) -> (i32, i32) {
    %c0_i32 = arith.constant 0 : i32
    %c0_i32_0 = arith.constant 0 : i32
    %c0_i32_1 = arith.constant 0 : i32
    return %c0_i32, %c0_i32_0 : i32, i32
  }
  func.func @transform_15(%arg0: i32) -> (i32, i32) {
    %c0_i32 = arith.constant 0 : i32
    %c0_i32_0 = arith.constant 0 : i32
    %c0_i32_1 = arith.constant 0 : i32
    return %c0_i32, %c0_i32_0 : i32, i32
  }
  func.func @transform_16(%arg0: i32) -> (i32, i32) {
    %c0_i32 = arith.constant 0 : i32
    %c0_i32_0 = arith.constant 0 : i32
    %c0_i32_1 = arith.constant 0 : i32
    return %c0_i32, %c0_i32_0 : i32, i32
  }
  func.func @transform_17(%arg0: i32) -> (i32, i32) {
    %c0_i32 = arith.constant 0 : i32
    %c0_i32_0 = arith.constant 0 : i32
    %c0_i32_1 = arith.constant 0 : i32
    return %c0_i32, %c0_i32_0 : i32, i32
  }
  func.func @transform_18(%arg0: i32) -> (i32, i32) {
    %c0_i32 = arith.constant 0 : i32
    %c0_i32_0 = arith.constant 0 : i32
    %c0_i32_1 = arith.constant 0 : i32
    return %c0_i32, %c0_i32_0 : i32, i32
  }
  func.func @transform_19(%arg0: i32) -> (i32, i32) {
    %c0_i32 = arith.constant 0 : i32
    %c0_i32_0 = arith.constant 0 : i32
    %c0_i32_1 = arith.constant 0 : i32
    return %c0_i32, %c0_i32_0 : i32, i32
  }
  func.func @transform_20(%arg0: i32) -> (i32, i32) {
    %c0_i32 = arith.constant 0 : i32
    %c0_i32_0 = arith.constant 0 : i32
    %c0_i32_1 = arith.constant 0 : i32
    return %c0_i32, %c0_i32_0 : i32, i32
  }
  func.func @transform_21(%arg0: i32) -> (i32, i32) {
    %c0_i32 = arith.constant 0 : i32
    %c0_i32_0 = arith.constant 0 : i32
    %c0_i32_1 = arith.constant 0 : i32
    return %c0_i32, %c0_i32_0 : i32, i32
  }
  func.func @transform_22(%arg0: i32) -> (i32, i32) {
    %c0_i32 = arith.constant 0 : i32
    %c0_i32_0 = arith.constant 0 : i32
    %c0_i32_1 = arith.constant 0 : i32
    return %c0_i32, %c0_i32_0 : i32, i32
  }
  func.func @transform_23(%arg0: i32) -> (i32, i32) {
    %c0_i32 = arith.constant 0 : i32
    %c0_i32_0 = arith.constant 0 : i32
    %c0_i32_1 = arith.constant 0 : i32
    return %c0_i32, %c0_i32_0 : i32, i32
  }
  func.func @transform_24(%arg0: i32) -> (i32, i32) {
    %c0_i32 = arith.constant 0 : i32
    %c0_i32_0 = arith.constant 0 : i32
    %c0_i32_1 = arith.constant 0 : i32
    return %c0_i32, %c0_i32_0 : i32, i32
  }
  func.func @transform_25(%arg0: i32) -> (i32, i32) {
    %c0_i32 = arith.constant 0 : i32
    %c0_i32_0 = arith.constant 0 : i32
    %c0_i32_1 = arith.constant 0 : i32
    return %c0_i32, %c0_i32_0 : i32, i32
  }
  func.func @transform_26(%arg0: i32) -> (i32, i32) {
    %c0_i32 = arith.constant 0 : i32
    %c0_i32_0 = arith.constant 0 : i32
    %c0_i32_1 = arith.constant 0 : i32
    return %c0_i32, %c0_i32_0 : i32, i32
  }
  func.func @transform_27(%arg0: i32) -> (i32, i32) {
    %c0_i32 = arith.constant 0 : i32
    %c0_i32_0 = arith.constant 0 : i32
    %c0_i32_1 = arith.constant 0 : i32
    return %c0_i32, %c0_i32_0 : i32, i32
  }
  func.func @transform_28(%arg0: i32) -> (i32, i32) {
    %c0_i32 = arith.constant 0 : i32
    %c0_i32_0 = arith.constant 0 : i32
    %c0_i32_1 = arith.constant 0 : i32
    return %c0_i32, %c0_i32_0 : i32, i32
  }
  func.func @transform_29(%arg0: i32) -> (i32, i32, i32) {
    %c0_i32 = arith.constant 0 : i32
    %c0_i32_0 = arith.constant 0 : i32
    %c0_i32_1 = arith.constant 0 : i32
    return %arg0, %c0_i32, %c0_i32_0 : i32, i32, i32
  }
}

</mosaic_0001>

<llo_original>
// kernel: tpu_custom_call.1
$region0: #{tpu_custom_call.1}
  #allocation0 [shape = 'u32[]', space=smem, size = 0x4, offset = 0x4, fixed_abs, tag = 'smem constant byte address 0x4 - core index']
  #allocation1 [shape = 'u32[144,128]{1,0:T(1,128)}', space=vmem, size = 0x12000, scoped, tag = 'internal scratch']
  #allocation2 [shape = 'f32[1,1]{1,0:T(1,128)S(1)}', space=vmem, size = 0x200, scoped, tag = 'scoped memory for tpu_custom_call.1']
  %s0 = inlined_call_operand.smem [shape: u32[30], index: -1, kind: input, shape index: {}]
  %s1 = sld [smem:[%s0]]
  %s2 = scalar_lea.smem %s0, 1
  %s3 = sld [smem:[%s2]]
  %s4 = scalar_lea.smem %s0, 2
  %s5 = sld [smem:[%s4]]
  %s6 = scalar_lea.smem %s0, 3
  %s7 = sld [smem:[%s6]]
  %s8 = scalar_lea.smem %s0, 4
  %s9 = sld [smem:[%s8]]
  %s10 = scalar_lea.smem %s0, 5
  %s11 = sld [smem:[%s10]]
  %s12 = scalar_lea.smem %s0, 6
  %s13 = sld [smem:[%s12]]
  %s14 = scalar_lea.smem %s0, 7
  %s15 = sld [smem:[%s14]]
  %s16 = scalar_lea.smem %s0, 8
  %s17 = sld [smem:[%s16]]
  %s18 = scalar_lea.smem %s0, 9
  %s19 = sld [smem:[%s18]]
  %s20 = scalar_lea.smem %s0, 10
  %s21 = sld [smem:[%s20]]
  %s22 = scalar_lea.smem %s0, 11
  %s23 = sld [smem:[%s22]]
  %s24 = scalar_lea.smem %s0, 12
  %s25 = sld [smem:[%s24]]
  %s26 = scalar_lea.smem %s0, 13
  %s27 = sld [smem:[%s26]]
  %s28 = scalar_lea.smem %s0, 14
  %s29 = sld [smem:[%s28]]
  %s30 = scalar_lea.smem %s0, 15
  %s31 = sld [smem:[%s30]]
  %s32 = scalar_lea.smem %s0, 16
  %s33 = sld [smem:[%s32]]
  %s34 = scalar_lea.smem %s0, 17
  %s35 = sld [smem:[%s34]]
  %s36 = scalar_lea.smem %s0, 18
  %s37 = sld [smem:[%s36]]
  %s38 = scalar_lea.smem %s0, 19
  %s39 = sld [smem:[%s38]]
  %s40 = scalar_lea.smem %s0, 20
  %s41 = sld [smem:[%s40]]
  %s42 = scalar_lea.smem %s0, 21
  %s43 = sld [smem:[%s42]]
  %s44 = scalar_lea.smem %s0, 22
  %s45 = sld [smem:[%s44]]
  %s46 = scalar_lea.smem %s0, 23
  %s47 = sld [smem:[%s46]]
  %s48 = scalar_lea.smem %s0, 24
  %s49 = sld [smem:[%s48]]
  %s50 = scalar_lea.smem %s0, 25
  %s51 = sld [smem:[%s50]]
  %s52 = scalar_lea.smem %s0, 26
  %s53 = sld [smem:[%s52]]
  %s54 = scalar_lea.smem %s0, 27
  %s55 = sld [smem:[%s54]]
  %s56 = scalar_lea.smem %s0, 28
  %s57 = sld [smem:[%s56]]
  %s58 = scalar_lea.smem %s0, 29
  %s59 = sld [smem:[%s58]]
  %s60 = sld [smem:[#allocation0]]
  $region210: #{tpu_custom_call.1} parent=0
    _
  %s62 = ssub.s32 1, %s60
  %s63 = scalar_select 0, %s62, %s60
  %v64 = vstv %s57
  %65 = vst [vmem:[#allocation2] sm:$0x1] %v64
  $region1: #{tpu_custom_call.1} parent=0
    #allocation3 [shape = 'u8[2048]{0}', space=vmem, size = 0x800, scoped, tag = 'input window, operand 1, single buffered']
    #allocation4 [shape = 's32[1]{0}', space=sflag, size = 0x4, scoped, tag = 'scoped memory for tpu_custom_call.1']
    #allocation5 [shape = 's32[1]{0}', space=sflag, size = 0x4, scoped, tag = 'scoped memory for tpu_custom_call.1']
    #allocation6 [shape = 'u8[2048]{0}', space=vmem, size = 0x800, scoped, tag = 'input window, operand 2, single buffered']
    #allocation7 [shape = 's32[1]{0}', space=sflag, size = 0x4, scoped, tag = 'scoped memory for tpu_custom_call.1']
    #allocation8 [shape = 'u8[4096]{0}', space=vmem, size = 0x1000, scoped, tag = 'input window, operand 3, single buffered']
    #allocation9 [shape = 'u8[4096]{0}', space=vmem, size = 0x1000, scoped, tag = 'input window, operand 4, single buffered']
    #allocation10 [shape = 's32[1]{0}', space=sflag, size = 0x4, scoped, tag = 'scoped memory for tpu_custom_call.1']
    #allocation11 [shape = 'u8[2048]{0}', space=vmem, size = 0x800, scoped, tag = 'input window, operand 5, single buffered']
    #allocation12 [shape = 'u8[8192]{0}', space=vmem, size = 0x2000, scoped, tag = 'input window, operand 7, single buffered']
    #allocation13 [shape = 's32[1]{0}', space=sflag, size = 0x4, scoped, tag = 'scoped memory for tpu_custom_call.1']
    #allocation14 [shape = 'u8[512]{0}', space=vmem, size = 0x400, scoped, tag = 'input window, operand 8, single buffered']
    #allocation15 [shape = 'u8[8192]{0}', space=vmem, size = 0x2000, scoped, tag = 'input window, operand 9, single buffered']
    #allocation16 [shape = 's32[1]{0}', space=sflag, size = 0x4, scoped, tag = 'scoped memory for tpu_custom_call.1']
    #allocation17 [shape = 'u8[512]{0}', space=vmem, size = 0x400, scoped, tag = 'input window, operand 10, single buffered']
    #allocation18 [shape = 'u8[16384]{0}', space=vmem, size = 0x4000, scoped, tag = 'input window, operand 11, single buffered']
    #allocation19 [shape = 's32[1]{0}', space=sflag, size = 0x4, scoped, tag = 'scoped memory for tpu_custom_call.1']
    #allocation20 [shape = 'u8[512]{0}', space=vmem, size = 0x400, scoped, tag = 'input window, operand 12, single buffered']
    #allocation21 [shape = 'u8[32768]{0}', space=vmem, size = 0x8000, scoped, tag = 'input window, operand 13, single buffered']
    #allocation22 [shape = 's32[1]{0}', space=sflag, size = 0x4, scoped, tag = 'scoped memory for tpu_custom_call.1']
    #allocation23 [shape = 'u8[512]{0}', space=vmem, size = 0x400, scoped, tag = 'input window, operand 14, single buffered']
    #allocation24 [shape = 'u8[65536]{0}', space=vmem, size = 0x10000, scoped, tag = 'input window, operand 15, single buffered']
    #allocation25 [shape = 's32[1]{0}', space=sflag, size = 0x4, scoped, tag = 'scoped memory for tpu_custom_call.1']
    #allocation26 [shape = 'u8[512]{0}', space=vmem, size = 0x400, scoped, tag = 'input window, operand 16, single buffered']
    #allocation27 [shape = 'u8[32768]{0}', space=vmem, size = 0x8000, scoped, tag = 'input window, operand 17, single buffered']
    #allocation28 [shape = 's32[1]{0}', space=sflag, size = 0x4, scoped, tag = 'scoped memory for tpu_custom_call.1']
    #allocation29 [shape = 'u8[512]{0}', space=vmem, size = 0x400, scoped, tag = 'input window, operand 19, single buffered']
    #allocation30 [shape = 'u8[16384]{0}', space=vmem, size = 0x4000, scoped, tag = 'input window, operand 20, single buffered']
    #allocation31 [shape = 's32[1]{0}', space=sflag, size = 0x4, scoped, tag = 'scoped memory for tpu_custom_call.1']
    #allocation32 [shape = 'u8[512]{0}', space=vmem, size = 0x400, scoped, tag = 'input window, operand 21, single buffered']
    #allocation33 [shape = 'u8[16384]{0}', space=vmem, size = 0x4000, scoped, tag = 'input window, operand 22, single buffered']
    #allocation34 [shape = 's32[1]{0}', space=sflag, size = 0x4, scoped, tag = 'scoped memory for tpu_custom_call.1']
    #allocation35 [shape = 'u8[8192]{0}', space=vmem, size = 0x2000, scoped, tag = 'input window, operand 25, single buffered']
    #allocation36 [shape = 'u8[4096]{0}', space=vmem, size = 0x1000, scoped, tag = 'output window, operand 0, single buffered']
    %66 = vsyncpa [#allocation4], 0
    %67 = vsyncpa [#allocation7], 0
    %68 = vsyncpa [#allocation10], 0
    %69 = vsyncpa [#allocation13], 0
    %70 = vsyncpa [#allocation16], 0
    %71 = vsyncpa [#allocation19], 0
    %72 = vsyncpa [#allocation22], 0
    %73 = vsyncpa [#allocation25], 0
    %74 = vsyncpa [#allocation28], 0
    %75 = vsyncpa [#allocation31], 0
    %76 = vsyncpa [#allocation34], 0
    %77 = vsyncpa [#allocation5], 0
    // Predicated region
    $region2: #{tpu_custom_call.1} parent=1 // pred_check
      _
    $region3: #{tpu_custom_call.1} parent=1 // pred_check_branch
      %79 = sbr.rel (0) target = $region5
    $region4: #{tpu_custom_call.1} parent=1 // pred_region
      _
    $region5: #{tpu_custom_call.1} parent=1 // pred_fallthru
      _
    // Predicated region
    $region6: #{tpu_custom_call.1} parent=1 // pred_check
      _
    $region7: #{tpu_custom_call.1} parent=1 // pred_check_branch
      %81 = sbr.rel (0) target = $region9
    $region8: #{tpu_custom_call.1} parent=1 // pred_region
      %s83 = ssub.s32 64, 64
      %84 = vsyncadd [#allocation4], %s83
      %s85 = sshll.u32 [#allocation3], 4
      %s86 = int_to_ptr.vmem [resolvable:$true] %s85
      %91 = dma.hbm_to_vmem [thread:$0]  %s3, 64, %s86, [#allocation4], 16, 16, 1
    $region9: #{tpu_custom_call.1} parent=1 // pred_fallthru
      _
    // Predicated region
    $region10: #{tpu_custom_call.1} parent=1 // pred_check
      _
    $region11: #{tpu_custom_call.1} parent=1 // pred_check_branch
      %93 = sbr.rel (0) target = $region13
    $region12: #{tpu_custom_call.1} parent=1 // pred_region
      %s95 = ssub.s32 64, 64
      %96 = vsyncadd [#allocation7], %s95
      %s97 = sshll.u32 [#allocation6], 4
      %s98 = int_to_ptr.vmem [resolvable:$true] %s97
      %103 = dma.hbm_to_vmem [thread:$0]  %s5, 64, %s98, [#allocation7], 16, 16, 1
    $region13: #{tpu_custom_call.1} parent=1 // pred_fallthru
      _
    // Predicated region
    $region14: #{tpu_custom_call.1} parent=1 // pred_check
      _
    $region15: #{tpu_custom_call.1} parent=1 // pred_check_branch
      %105 = sbr.rel (0) target = $region17
    $region16: #{tpu_custom_call.1} parent=1 // pred_region
      %s107 = ssub.s32 128, 128
      %108 = vsyncadd [#allocation7], %s107
      %s109 = sshll.u32 [#allocation8], 4
      %s110 = int_to_ptr.vmem [resolvable:$true] %s109
      %115 = dma.hbm_to_vmem [thread:$0]  %s7, 128, %s110, [#allocation7], 16, 16, 1
    $region17: #{tpu_custom_call.1} parent=1 // pred_fallthru
      _
    // Predicated region
    $region18: #{tpu_custom_call.1} parent=1 // pred_check
      _
    $region19: #{tpu_custom_call.1} parent=1 // pred_check_branch
      %117 = sbr.rel (0) target = $region21
    $region20: #{tpu_custom_call.1} parent=1 // pred_region
      %s119 = ssub.s32 128, 128
      %120 = vsyncadd [#allocation10], %s119
      %s121 = sshll.u32 [#allocation9], 4
      %s122 = int_to_ptr.vmem [resolvable:$true] %s121
      %127 = dma.hbm_to_vmem [thread:$0]  %s9, 128, %s122, [#allocation10], 16, 16, 1
    $region21: #{tpu_custom_call.1} parent=1 // pred_fallthru
      _
    // Predicated region
    $region22: #{tpu_custom_call.1} parent=1 // pred_check
      _
    $region23: #{tpu_custom_call.1} parent=1 // pred_check_branch
      %129 = sbr.rel (0) target = $region25
    $region24: #{tpu_custom_call.1} parent=1 // pred_region
      %s131 = ssub.s32 64, 64
      %132 = vsyncadd [#allocation10], %s131
      %s134 = sshll.u32 [#allocation11], 4
      %s135 = int_to_ptr.vmem [resolvable:$true] %s134
      %137 = dma.hbm_to_vmem [thread:$0]  %s11, 64, %s135, [#allocation10]
    $region25: #{tpu_custom_call.1} parent=1 // pred_fallthru
      _
    // Predicated region
    $region26: #{tpu_custom_call.1} parent=1 // pred_check
      _
    $region27: #{tpu_custom_call.1} parent=1 // pred_check_branch
      %139 = sbr.rel (0) target = $region29
    $region28: #{tpu_custom_call.1} parent=1 // pred_region
      _
    $region29: #{tpu_custom_call.1} parent=1 // pred_fallthru
      _
    // Predicated region
    $region30: #{tpu_custom_call.1} parent=1 // pred_check
      _
    $region31: #{tpu_custom_call.1} parent=1 // pred_check_branch
      %141 = sbr.rel (0) target = $region33
    $region32: #{tpu_custom_call.1} parent=1 // pred_region
      %s143 = ssub.s32 256, 256
      %144 = vsyncadd [#allocation13], %s143
      %s145 = sshll.u32 [#allocation12], 4
      %s146 = int_to_ptr.vmem [resolvable:$true] %s145
      %151 = dma.hbm_to_vmem [thread:$0]  %s15, 256, %s146, [#allocation13], 128, 128, 8
    $region33: #{tpu_custom_call.1} parent=1 // pred_fallthru
      _
    // Predicated region
    $region34: #{tpu_custom_call.1} parent=1 // pred_check
      _
    $region35: #{tpu_custom_call.1} parent=1 // pred_check_branch
      %153 = sbr.rel (0) target = $region37
    $region36: #{tpu_custom_call.1} parent=1 // pred_region
      %s155 = ssub.s32 16, 16
      %156 = vsyncadd [#allocation13], %s155
      %s158 = sshll.u32 [#allocation14], 4
      %s159 = int_to_ptr.vmem [resolvable:$true] %s158
      %161 = dma.hbm_to_vmem [thread:$0]  %s17, 16, %s159, [#allocation13]
    $region37: #{tpu_custom_call.1} parent=1 // pred_fallthru
      _
    // Predicated region
    $region38: #{tpu_custom_call.1} parent=1 // pred_check
      _
    $region39: #{tpu_custom_call.1} parent=1 // pred_check_branch
      %163 = sbr.rel (0) target = $region41
    $region40: #{tpu_custom_call.1} parent=1 // pred_region
      %s165 = ssub.s32 256, 256
      %166 = vsyncadd [#allocation16], %s165
      %s167 = sshll.u32 [#allocation15], 4
      %s168 = int_to_ptr.vmem [resolvable:$true] %s167
      %173 = dma.hbm_to_vmem [thread:$0]  %s19, 256, %s168, [#allocation16], 128, 128, 8
    $region41: #{tpu_custom_call.1} parent=1 // pred_fallthru
      _
    // Predicated region
    $region42: #{tpu_custom_call.1} parent=1 // pred_check
      _
    $region43: #{tpu_custom_call.1} parent=1 // pred_check_branch
      %175 = sbr.rel (0) target = $region45
    $region44: #{tpu_custom_call.1} parent=1 // pred_region
      %s177 = ssub.s32 16, 16
      %178 = vsyncadd [#allocation16], %s177
      %s180 = sshll.u32 [#allocation17], 4
      %s181 = int_to_ptr.vmem [resolvable:$true] %s180
      %183 = dma.hbm_to_vmem [thread:$0]  %s21, 16, %s181, [#allocation16]
    $region45: #{tpu_custom_call.1} parent=1 // pred_fallthru
      _
    // Predicated region
    $region46: #{tpu_custom_call.1} parent=1 // pred_check
      _
    $region47: #{tpu_custom_call.1} parent=1 // pred_check_branch
      %185 = sbr.rel (0) target = $region49
    $region48: #{tpu_custom_call.1} parent=1 // pred_region
      %s187 = ssub.s32 512, 512
      %188 = vsyncadd [#allocation19], %s187
      %s189 = sshll.u32 [#allocation18], 4
      %s190 = int_to_ptr.vmem [resolvable:$true] %s189
      %195 = dma.hbm_to_vmem [thread:$0]  %s23, 512, %s190, [#allocation19], 128, 128, 8
    $region49: #{tpu_custom_call.1} parent=1 // pred_fallthru
      _
    // Predicated region
    $region50: #{tpu_custom_call.1} parent=1 // pred_check
      _
    $region51: #{tpu_custom_call.1} parent=1 // pred_check_branch
      %197 = sbr.rel (0) target = $region53
    $region52: #{tpu_custom_call.1} parent=1 // pred_region
      %s199 = ssub.s32 16, 16
      %200 = vsyncadd [#allocation19], %s199
      %s202 = sshll.u32 [#allocation20], 4
      %s203 = int_to_ptr.vmem [resolvable:$true] %s202
      %205 = dma.hbm_to_vmem [thread:$0]  %s25, 16, %s203, [#allocation19]
    $region53: #{tpu_custom_call.1} parent=1 // pred_fallthru
      _
    // Predicated region
    $region54: #{tpu_custom_call.1} parent=1 // pred_check
      _
    $region55: #{tpu_custom_call.1} parent=1 // pred_check_branch
      %207 = sbr.rel (0) target = $region57
    $region56: #{tpu_custom_call.1} parent=1 // pred_region
      %s209 = ssub.s32 1024, 1024
      %210 = vsyncadd [#allocation22], %s209
      %s211 = sshll.u32 [#allocation21], 4
      %s212 = int_to_ptr.vmem [resolvable:$true] %s211
      %217 = dma.hbm_to_vmem [thread:$0]  %s27, 1024, %s212, [#allocation22], 256, 256, 16
    $region57: #{tpu_custom_call.1} parent=1 // pred_fallthru
      _
    // Predicated region
    $region58: #{tpu_custom_call.1} parent=1 // pred_check
      _
    $region59: #{tpu_custom_call.1} parent=1 // pred_check_branch
      %219 = sbr.rel (0) target = $region61
    $region60: #{tpu_custom_call.1} parent=1 // pred_region
      %s221 = ssub.s32 16, 16
      %222 = vsyncadd [#allocation22], %s221
      %s224 = sshll.u32 [#allocation23], 4
      %s225 = int_to_ptr.vmem [resolvable:$true] %s224
      %227 = dma.hbm_to_vmem [thread:$0]  %s29, 16, %s225, [#allocation22]
    $region61: #{tpu_custom_call.1} parent=1 // pred_fallthru
      _
    // Predicated region
    $region62: #{tpu_custom_call.1} parent=1 // pred_check
      _
    $region63: #{tpu_custom_call.1} parent=1 // pred_check_branch
      %229 = sbr.rel (0) target = $region65
    $region64: #{tpu_custom_call.1} parent=1 // pred_region
      %s231 = ssub.s32 2048, 2048
      %232 = vsyncadd [#allocation25], %s231
      %s233 = sshll.u32 [#allocation24], 4
      %s234 = int_to_ptr.vmem [resolvable:$true] %s233
      %239 = dma.hbm_to_vmem [thread:$0]  %s31, 2048, %s234, [#allocation25], 256, 256, 16
    $region65: #{tpu_custom_call.1} parent=1 // pred_fallthru
      _
    // Predicated region
    $region66: #{tpu_custom_call.1} parent=1 // pred_check
      _
    $region67: #{tpu_custom_call.1} parent=1 // pred_check_branch
      %241 = sbr.rel (0) target = $region69
    $region68: #{tpu_custom_call.1} parent=1 // pred_region
      %s243 = ssub.s32 16, 16
      %244 = vsyncadd [#allocation25], %s243
      %s246 = sshll.u32 [#allocation26], 4
      %s247 = int_to_ptr.vmem [resolvable:$true] %s246
      %249 = dma.hbm_to_vmem [thread:$0]  %s33, 16, %s247, [#allocation25]
    $region69: #{tpu_custom_call.1} parent=1 // pred_fallthru
      _
    // Predicated region
    $region70: #{tpu_custom_call.1} parent=1 // pred_check
      _
    $region71: #{tpu_custom_call.1} parent=1 // pred_check_branch
      %251 = sbr.rel (0) target = $region73
    $region72: #{tpu_custom_call.1} parent=1 // pred_region
      %s253 = ssub.s32 1024, 1024
      %254 = vsyncadd [#allocation28], %s253
      %s255 = sshll.u32 [#allocation27], 4
      %s256 = int_to_ptr.vmem [resolvable:$true] %s255
      %261 = dma.hbm_to_vmem [thread:$0]  %s35, 1024, %s256, [#allocation28], 128, 128, 8
    $region73: #{tpu_custom_call.1} parent=1 // pred_fallthru
      _
    // Predicated region
    $region74: #{tpu_custom_call.1} parent=1 // pred_check
      _
    $region75: #{tpu_custom_call.1} parent=1 // pred_check_branch
      %263 = sbr.rel (0) target = $region77
    $region76: #{tpu_custom_call.1} parent=1 // pred_region
      _
    $region77: #{tpu_custom_call.1} parent=1 // pred_fallthru
      _
    // Predicated region
    $region78: #{tpu_custom_call.1} parent=1 // pred_check
      _
    $region79: #{tpu_custom_call.1} parent=1 // pred_check_branch
      %265 = sbr.rel (0) target = $region81
    $region80: #{tpu_custom_call.1} parent=1 // pred_region
      %s267 = ssub.s32 16, 16
      %268 = vsyncadd [#allocation28], %s267
      %s270 = sshll.u32 [#allocation29], 4
      %s271 = int_to_ptr.vmem [resolvable:$true] %s270
      %273 = dma.hbm_to_vmem [thread:$0]  %s39, 16, %s271, [#allocation28]
    $region81: #{tpu_custom_call.1} parent=1 // pred_fallthru
      _
    // Predicated region
    $region82: #{tpu_custom_call.1} parent=1 // pred_check
      _
    $region83: #{tpu_custom_call.1} parent=1 // pred_check_branch
      %275 = sbr.rel (0) target = $region85
    $region84: #{tpu_custom_call.1} parent=1 // pred_region
      %s277 = ssub.s32 512, 512
      %278 = vsyncadd [#allocation31], %s277
      %s279 = sshll.u32 [#allocation30], 4
      %s280 = int_to_ptr.vmem [resolvable:$true] %s279
      %285 = dma.hbm_to_vmem [thread:$0]  %s41, 512, %s280, [#allocation31], 128, 128, 8
    $region85: #{tpu_custom_call.1} parent=1 // pred_fallthru
      _
    // Predicated region
    $region86: #{tpu_custom_call.1} parent=1 // pred_check
      _
    $region87: #{tpu_custom_call.1} parent=1 // pred_check_branch
      %287 = sbr.rel (0) target = $region89
    $region88: #{tpu_custom_call.1} parent=1 // pred_region
      %s289 = ssub.s32 16, 16
      %290 = vsyncadd [#allocation31], %s289
      %s292 = sshll.u32 [#allocation32], 4
      %s293 = int_to_ptr.vmem [resolvable:$true] %s292
      %295 = dma.hbm_to_vmem [thread:$0]  %s43, 16, %s293, [#allocation31]
    $region89: #{tpu_custom_call.1} parent=1 // pred_fallthru
      _
    // Predicated region
    $region90: #{tpu_custom_call.1} parent=1 // pred_check
      _
    $region91: #{tpu_custom_call.1} parent=1 // pred_check_branch
      %297 = sbr.rel (0) target = $region93
    $region92: #{tpu_custom_call.1} parent=1 // pred_region
      %s299 = ssub.s32 512, 512
      %300 = vsyncadd [#allocation34], %s299
      %s301 = sshll.u32 [#allocation33], 4
      %s302 = int_to_ptr.vmem [resolvable:$true] %s301
      %307 = dma.hbm_to_vmem [thread:$0]  %s45, 512, %s302, [#allocation34], 128, 128, 8
    $region93: #{tpu_custom_call.1} parent=1 // pred_fallthru
      _
    // Predicated region
    $region94: #{tpu_custom_call.1} parent=1 // pred_check
      _
    $region95: #{tpu_custom_call.1} parent=1 // pred_check_branch
      %309 = sbr.rel (0) target = $region97
    $region96: #{tpu_custom_call.1} parent=1 // pred_region
      _
    $region97: #{tpu_custom_call.1} parent=1 // pred_fallthru
      _
    // Predicated region
    $region98: #{tpu_custom_call.1} parent=1 // pred_check
      _
    $region99: #{tpu_custom_call.1} parent=1 // pred_check_branch
      %311 = sbr.rel (0) target = $region101
    $region100: #{tpu_custom_call.1} parent=1 // pred_region
      _
    $region101: #{tpu_custom_call.1} parent=1 // pred_fallthru
      _
    // Predicated region
    $region102: #{tpu_custom_call.1} parent=1 // pred_check
      _
    $region103: #{tpu_custom_call.1} parent=1 // pred_check_branch
      %313 = sbr.rel (0) target = $region105
    $region104: #{tpu_custom_call.1} parent=1 // pred_region
      %s315 = ssub.s32 256, 256
      %316 = vsyncadd [#allocation34], %s315
      %s317 = sshll.u32 [#allocation35], 4
      %s318 = int_to_ptr.vmem [resolvable:$true] %s317
      %323 = dma.hbm_to_vmem [thread:$0]  %s51, 256, %s318, [#allocation34], 128, 128, 8
    $region105: #{tpu_custom_call.1} parent=1 // pred_fallthru
      _
    // Predicated region
    $region106: #{tpu_custom_call.1} parent=1 // pred_check
      _
    $region107: #{tpu_custom_call.1} parent=1 // pred_check_branch
      %325 = sbr.rel (0) target = $region109
    $region108: #{tpu_custom_call.1} parent=1 // pred_region
      _
    $region109: #{tpu_custom_call.1} parent=1 // pred_fallthru
      _
    // Predicated region
    $region110: #{tpu_custom_call.1} parent=1 // pred_check
      _
    $region111: #{tpu_custom_call.1} parent=1 // pred_check_branch
      %327 = sbr.rel (0) target = $region113
    $region112: #{tpu_custom_call.1} parent=1 // pred_region
      _
    $region113: #{tpu_custom_call.1} parent=1 // pred_fallthru
      _
    // Predicated region
    $region114: #{tpu_custom_call.1} parent=1 // pred_check
      _
    $region115: #{tpu_custom_call.1} parent=1 // pred_check_branch
      %329 = sbr.rel (0) target = $region117
    $region116: #{tpu_custom_call.1} parent=1 // pred_region
      _
    $region117: #{tpu_custom_call.1} parent=1 // pred_fallthru
      _
    // Predicated region
    $region118: #{tpu_custom_call.1} parent=1 // pred_check
      _
    $region119: #{tpu_custom_call.1} parent=1 // pred_check_branch
      %331 = sbr.rel (0) target = $region121
    $region120: #{tpu_custom_call.1} parent=1 // pred_region
      %332 = dma.done [#allocation4], 64
    $region121: #{tpu_custom_call.1} parent=1 // pred_fallthru
      _
    // Predicated region
    $region122: #{tpu_custom_call.1} parent=1 // pred_check
      _
    $region123: #{tpu_custom_call.1} parent=1 // pred_check_branch
      %334 = sbr.rel (0) target = $region125
    $region124: #{tpu_custom_call.1} parent=1 // pred_region
      %335 = dma.done [#allocation7], 64
    $region125: #{tpu_custom_call.1} parent=1 // pred_fallthru
      _
    // Predicated region
    $region126: #{tpu_custom_call.1} parent=1 // pred_check
      _
    $region127: #{tpu_custom_call.1} parent=1 // pred_check_branch
      %337 = sbr.rel (0) target = $region129
    $region128: #{tpu_custom_call.1} parent=1 // pred_region
      %338 = dma.done [#allocation7], 128
    $region129: #{tpu_custom_call.1} parent=1 // pred_fallthru
      _
    // Predicated region
    $region130: #{tpu_custom_call.1} parent=1 // pred_check
      _
    $region131: #{tpu_custom_call.1} parent=1 // pred_check_branch
      %340 = sbr.rel (0) target = $region133
    $region132: #{tpu_custom_call.1} parent=1 // pred_region
      %341 = dma.done [#allocation10], 128
    $region133: #{tpu_custom_call.1} parent=1 // pred_fallthru
      _
    // Predicated region
    $region134: #{tpu_custom_call.1} parent=1 // pred_check
      _
    $region135: #{tpu_custom_call.1} parent=1 // pred_check_branch
      %343 = sbr.rel (0) target = $region137
    $region136: #{tpu_custom_call.1} parent=1 // pred_region
      %344 = dma.done [#allocation10], 64
    $region137: #{tpu_custom_call.1} parent=1 // pred_fallthru
      _
    // Predicated region
    $region138: #{tpu_custom_call.1} parent=1 // pred_check
      _
    $region139: #{tpu_custom_call.1} parent=1 // pred_check_branch
      %346 = sbr.rel (0) target = $region141
    $region140: #{tpu_custom_call.1} parent=1 // pred_region
      %347 = dma.done [#allocation13], 256
    $region141: #{tpu_custom_call.1} parent=1 // pred_fallthru
      _
    // Predicated region
    $region142: #{tpu_custom_call.1} parent=1 // pred_check
      _
    $region143: #{tpu_custom_call.1} parent=1 // pred_check_branch
      %349 = sbr.rel (0) target = $region145
    $region144: #{tpu_custom_call.1} parent=1 // pred_region
      %350 = dma.done [#allocation13], 16
    $region145: #{tpu_custom_call.1} parent=1 // pred_fallthru
      _
    // Predicated region
    $region146: #{tpu_custom_call.1} parent=1 // pred_check
      _
    $region147: #{tpu_custom_call.1} parent=1 // pred_check_branch
      %352 = sbr.rel (0) target = $region149
    $region148: #{tpu_custom_call.1} parent=1 // pred_region
      %353 = dma.done [#allocation16], 256
    $region149: #{tpu_custom_call.1} parent=1 // pred_fallthru
      _
    // Predicated region
    $region150: #{tpu_custom_call.1} parent=1 // pred_check
      _
    $region151: #{tpu_custom_call.1} parent=1 // pred_check_branch
      %355 = sbr.rel (0) target = $region153
    $region152: #{tpu_custom_call.1} parent=1 // pred_region
      %356 = dma.done [#allocation16], 16
    $region153: #{tpu_custom_call.1} parent=1 // pred_fallthru
      _
    // Predicated region
    $region154: #{tpu_custom_call.1} parent=1 // pred_check
      _
    $region155: #{tpu_custom_call.1} parent=1 // pred_check_branch
      %358 = sbr.rel (0) target = $region157
    $region156: #{tpu_custom_call.1} parent=1 // pred_region
      %359 = dma.done [#allocation19], 512
    $region157: #{tpu_custom_call.1} parent=1 // pred_fallthru
      _
    // Predicated region
    $region158: #{tpu_custom_call.1} parent=1 // pred_check
      _
    $region159: #{tpu_custom_call.1} parent=1 // pred_check_branch
      %361 = sbr.rel (0) target = $region161
    $region160: #{tpu_custom_call.1} parent=1 // pred_region
      %362 = dma.done [#allocation19], 16
    $region161: #{tpu_custom_call.1} parent=1 // pred_fallthru
      _
    // Predicated region
    $region162: #{tpu_custom_call.1} parent=1 // pred_check
      _
    $region163: #{tpu_custom_call.1} parent=1 // pred_check_branch
      %364 = sbr.rel (0) target = $region165
    $region164: #{tpu_custom_call.1} parent=1 // pred_region
      %365 = dma.done [#allocation22], 1024
    $region165: #{tpu_custom_call.1} parent=1 // pred_fallthru
      _
    // Predicated region
    $region166: #{tpu_custom_call.1} parent=1 // pred_check
      _
    $region167: #{tpu_custom_call.1} parent=1 // pred_check_branch
      %367 = sbr.rel (0) target = $region169
    $region168: #{tpu_custom_call.1} parent=1 // pred_region
      %368 = dma.done [#allocation22], 16
    $region169: #{tpu_custom_call.1} parent=1 // pred_fallthru
      _
    // Predicated region
    $region170: #{tpu_custom_call.1} parent=1 // pred_check
      _
    $region171: #{tpu_custom_call.1} parent=1 // pred_check_branch
      %370 = sbr.rel (0) target = $region173
    $region172: #{tpu_custom_call.1} parent=1 // pred_region
      %371 = dma.done [#allocation25], 2048
    $region173: #{tpu_custom_call.1} parent=1 // pred_fallthru
      _
    // Predicated region
    $region174: #{tpu_custom_call.1} parent=1 // pred_check
      _
    $region175: #{tpu_custom_call.1} parent=1 // pred_check_branch
      %373 = sbr.rel (0) target = $region177
    $region176: #{tpu_custom_call.1} parent=1 // pred_region
      %374 = dma.done [#allocation25], 16
    $region177: #{tpu_custom_call.1} parent=1 // pred_fallthru
      _
    // Predicated region
    $region178: #{tpu_custom_call.1} parent=1 // pred_check
      _
    $region179: #{tpu_custom_call.1} parent=1 // pred_check_branch
      %376 = sbr.rel (0) target = $region181
    $region180: #{tpu_custom_call.1} parent=1 // pred_region
      %377 = dma.done [#allocation28], 1024
    $region181: #{tpu_custom_call.1} parent=1 // pred_fallthru
      _
    // Predicated region
    $region182: #{tpu_custom_call.1} parent=1 // pred_check
      _
    $region183: #{tpu_custom_call.1} parent=1 // pred_check_branch
      %379 = sbr.rel (0) target = $region185
    $region184: #{tpu_custom_call.1} parent=1 // pred_region
      %380 = dma.done [#allocation28], 16
    $region185: #{tpu_custom_call.1} parent=1 // pred_fallthru
      _
    // Predicated region
    $region186: #{tpu_custom_call.1} parent=1 // pred_check
      _
    $region187: #{tpu_custom_call.1} parent=1 // pred_check_branch
      %382 = sbr.rel (0) target = $region189
    $region188: #{tpu_custom_call.1} parent=1 // pred_region
      %383 = dma.done [#allocation31], 512
    $region189: #{tpu_custom_call.1} parent=1 // pred_fallthru
      _
    // Predicated region
    $region190: #{tpu_custom_call.1} parent=1 // pred_check
      _
    $region191: #{tpu_custom_call.1} parent=1 // pred_check_branch
      %385 = sbr.rel (0) target = $region193
    $region192: #{tpu_custom_call.1} parent=1 // pred_region
      %386 = dma.done [#allocation31], 16
    $region193: #{tpu_custom_call.1} parent=1 // pred_fallthru
      _
    // Predicated region
    $region194: #{tpu_custom_call.1} parent=1 // pred_check
      _
    $region195: #{tpu_custom_call.1} parent=1 // pred_check_branch
      %388 = sbr.rel (0) target = $region197
    $region196: #{tpu_custom_call.1} parent=1 // pred_region
      %389 = dma.done [#allocation34], 512
    $region197: #{tpu_custom_call.1} parent=1 // pred_fallthru
      _
    // Predicated region
    $region198: #{tpu_custom_call.1} parent=1 // pred_check
      _
    $region199: #{tpu_custom_call.1} parent=1 // pred_check_branch
      %391 = sbr.rel (0) target = $region201
    $region200: #{tpu_custom_call.1} parent=1 // pred_region
      %392 = dma.done [#allocation34], 256
    $region201: #{tpu_custom_call.1} parent=1 // pred_fallthru
      _
    %v393 = vld [vmem:[%s1] sm:$0x7]
    %394 = vxpose.xlu0.b32.start [1/16] %v393, 128
    %395 = vxpose.xlu0.b32.cont [2/16] 0.0, 128
    %396 = vxpose.xlu0.b32.cont [3/16] 0.0, 128
    %397 = vxpose.xlu0.b32.cont [4/16] 0.0, 128
    %398 = vxpose.xlu0.b32.cont [5/16] 0.0, 128
    %399 = vxpose.xlu0.b32.cont [6/16] 0.0, 128
    %400 = vxpose.xlu0.b32.cont [7/16] 0.0, 128
    %401 = vxpose.xlu0.b32.cont [8/16] 0.0, 128
    %402 = vxpose.xlu0.b32.cont [9/16] 0.0, 128
    %403 = vxpose.xlu0.b32.cont [10/16] 0.0, 128
    %404 = vxpose.xlu0.b32.cont [11/16] 0.0, 128
    %405 = vxpose.xlu0.b32.cont [12/16] 0.0, 128
    %406 = vxpose.xlu0.b32.cont [13/16] 0.0, 128
    %407 = vxpose.xlu0.b32.cont [14/16] 0.0, 128
    %408 = vxpose.xlu0.b32.cont [15/16] 0.0, 128
    %409 = vxpose.xlu0.b32.end [16/16] 0.0, 128
    %v410 = vpop.trf.xlu0
    %v411 = vpop.trf.xlu0
    %v412 = vpop.trf.xlu0
    %v413 = vpop.trf.xlu0
    %v414 = vpop.trf.xlu0
    %v415 = vpop.trf.xlu0
    %v416 = vpop.trf.xlu0
    %v417 = vpop.trf.xlu0
    %v418 = vpop.trf.xlu0
    %v419 = vpop.trf.xlu0
    %v420 = vpop.trf.xlu0
    %v421 = vpop.trf.xlu0
    %v422 = vpop.trf.xlu0
    %v423 = vpop.trf.xlu0
    %v424 = vpop.trf.xlu0
    %v425 = vpop.trf.xlu0
    %v426 = vld [vmem:[#allocation11] sm:$0x7]
    %v427 = vld [vmem:[%s13] sm:$0x1]
    %v429 = vlaneseq
    %v430 = vshrl.u32 %v429, 7
    %v431 = vsub.s32 0, %v430
    %v432 = vrot.slane %v427, %v431
    %vm434 = vcmask 23552
    %v436 = vsel %vm434, %v410, 0
    %v439 = vsel %vm434, %v411, 0
    %v442 = vsel %vm434, %v412, 0
    %v445 = vsel %vm434, %v413, 0
    %v448 = vsel %vm434, %v414, 0
    %v451 = vsel %vm434, %v415, 0
    %v454 = vsel %vm434, %v416, 0
    %v457 = vsel %vm434, %v417, 0
    %v460 = vsel %vm434, %v418, 0
    %v463 = vsel %vm434, %v419, 0
    %v466 = vsel %vm434, %v420, 0
    %v469 = vsel %vm434, %v421, 0
    %v472 = vsel %vm434, %v422, 0
    %v475 = vsel %vm434, %v423, 0
    %v478 = vsel %vm434, %v424, 0
    %v481 = vsel %vm434, %v425, 0
    %vm483 = vcmask 1042432
    %v485 = vsel %vm483, %v426, 0
    %487 = vmatprep.subr.mxu0 0.0
    %488 = vmatpush1.msra.mxu0 0.0
    %489 = vmatprep.subr.mxu0 0.0
    %490 = vmatpush1.msra.mxu0 0.0
    %491 = vmatprep.subr.mxu0 0.0
    %492 = vmatpush1.msra.mxu0 0.0
    %493 = vmatprep.subr.mxu0 0.0
    %494 = vmatpush1.msra.mxu0 0.0
    %495 = vmatprep.subr.mxu0 0.0
    %496 = vmatpush1.msra.mxu0 0.0
    %497 = vmatprep.subr.mxu0 0.0
    %498 = vmatpush1.msra.mxu0 0.0
    %499 = vmatprep.subr.mxu0 0.0
    %500 = vmatpush1.msra.mxu0 0.0
    %501 = vmatprep.subr.mxu0 0.0
    %502 = vmatpush1.msra.mxu0 0.0
    %503 = vmatprep.subr.mxu0 0.0
    %504 = vmatpush1.msra.mxu0 0.0
    %505 = vmatprep.subr.mxu0 0.0
    %506 = vmatpush1.msra.mxu0 0.0
    %507 = vmatprep.subr.mxu0 0.0
    %508 = vmatpush1.msra.mxu0 0.0
    %509 = vmatprep.subr.mxu0 0.0
    %510 = vmatpush1.msra.mxu0 0.0
    %511 = vmatprep.subr.mxu0 0.0
    %512 = vmatpush1.msra.mxu0 0.0
    %513 = vmatprep.subr.mxu0 0.0
    %514 = vmatpush1.msra.mxu0 0.0
    %515 = vmatprep.subr.mxu0 0.0
    %516 = vmatpush1.msra.mxu0 0.0
    %517 = vmatprep.subr.mxu0 0.0
    %518 = vmatpush1.msra.mxu0 %v485
    %519 = vmatprep.subr.mxu0 0.0
    %520 = vmatpush2.msra.mxu0 0.0
    %521 = vmatprep.subr.mxu0 0.0
    %522 = vmatpush2.msra.mxu0 0.0
    %523 = vmatprep.subr.mxu0 0.0
    %524 = vmatpush2.msra.mxu0 0.0
    %525 = vmatprep.subr.mxu0 0.0
    %526 = vmatpush2.msra.mxu0 0.0
    %527 = vmatprep.subr.mxu0 0.0
    %528 = vmatpush2.msra.mxu0 0.0
    %529 = vmatprep.subr.mxu0 0.0
    %530 = vmatpush2.msra.mxu0 0.0
    %531 = vmatprep.subr.mxu0 0.0
    %532 = vmatpush2.msra.mxu0 0.0
    %533 = vmatprep.subr.mxu0 0.0
    %534 = vmatpush2.msra.mxu0 0.0
    %535 = vmatprep.subr.mxu0 0.0
    %536 = vmatpush2.msra.mxu0 0.0
    %537 = vmatprep.subr.mxu0 0.0
    %538 = vmatpush2.msra.mxu0 0.0
    %539 = vmatprep.subr.mxu0 0.0
    %540 = vmatpush2.msra.mxu0 0.0
    %541 = vmatprep.subr.mxu0 0.0
    %542 = vmatpush2.msra.mxu0 0.0
    %543 = vmatprep.subr.mxu0 0.0
    %544 = vmatpush2.msra.mxu0 0.0
    %545 = vmatprep.subr.mxu0 0.0
    %546 = vmatpush2.msra.mxu0 0.0
    %547 = vmatprep.subr.mxu0 0.0
    %548 = vmatpush2.msra.mxu0 0.0
    %549 = vmatprep.subr.mxu0 0.0
    %550 = vmatpush2.msra.mxu0 0.0
    %551 = vmatprep.mubr.f32.mxu0 0.0
    %552 = vmatmul.mubr.f32.gmra.mxu0 %v436
    %v553 = vpop.f32.mrf.mxu0
    %v554 = vadd.f32 %v432, %v553
    %v555 = vpop.f32.mrf.mxu0
    %556 = vmatprep.mubr.f32.mxu0 0.0
    %557 = vmatmul.mubr.f32.gmra.mxu0 %v439
    %v558 = vpop.f32.mrf.mxu0
    %v559 = vadd.f32 %v432, %v558
    %v560 = vpop.f32.mrf.mxu0
    %561 = vmatprep.mubr.f32.mxu0 0.0
    %562 = vmatmul.mubr.f32.gmra.mxu0 %v442
    %v563 = vpop.f32.mrf.mxu0
    %v564 = vadd.f32 %v432, %v563
    %v565 = vpop.f32.mrf.mxu0
    %566 = vmatprep.mubr.f32.mxu0 0.0
    %567 = vmatmul.mubr.f32.gmra.mxu0 %v445
    %v568 = vpop.f32.mrf.mxu0
    %v569 = vadd.f32 %v432, %v568
    %v570 = vpop.f32.mrf.mxu0
    %571 = vmatprep.mubr.f32.mxu0 0.0
    %572 = vmatmul.mubr.f32.gmra.mxu0 %v448
    %v573 = vpop.f32.mrf.mxu0
    %v574 = vadd.f32 %v432, %v573
    %v575 = vpop.f32.mrf.mxu0
    %576 = vmatprep.mubr.f32.mxu0 0.0
    %577 = vmatmul.mubr.f32.gmra.mxu0 %v451
    %v578 = vpop.f32.mrf.mxu0
    %v579 = vadd.f32 %v432, %v578
    %v580 = vpop.f32.mrf.mxu0
    %581 = vmatprep.mubr.f32.mxu0 0.0
    %582 = vmatmul.mubr.f32.gmra.mxu0 %v454
    %v583 = vpop.f32.mrf.mxu0
    %v584 = vadd.f32 %v432, %v583
    %v585 = vpop.f32.mrf.mxu0
    %586 = vmatprep.mubr.f32.mxu0 0.0
    %587 = vmatmul.mubr.f32.gmra.mxu0 %v457
    %v588 = vpop.f32.mrf.mxu0
    %v589 = vadd.f32 %v432, %v588
    %v590 = vpop.f32.mrf.mxu0
    %591 = vmatprep.mubr.f32.mxu0 0.0
    %592 = vmatmul.mubr.f32.gmra.mxu0 %v460
    %v593 = vpop.f32.mrf.mxu0
    %v594 = vadd.f32 %v432, %v593
    %v595 = vpop.f32.mrf.mxu0
    %596 = vmatprep.mubr.f32.mxu0 0.0
    %597 = vmatmul.mubr.f32.gmra.mxu0 %v463
    %v598 = vpop.f32.mrf.mxu0
    %v599 = vadd.f32 %v432, %v598
    %v600 = vpop.f32.mrf.mxu0
    %601 = vmatprep.mubr.f32.mxu0 0.0
    %602 = vmatmul.mubr.f32.gmra.mxu0 %v466
    %v603 = vpop.f32.mrf.mxu0
    %v604 = vadd.f32 %v432, %v603
    %v605 = vpop.f32.mrf.mxu0
    %606 = vmatprep.mubr.f32.mxu0 0.0
    %607 = vmatmul.mubr.f32.gmra.mxu0 %v469
    %v608 = vpop.f32.mrf.mxu0
    %v609 = vadd.f32 %v432, %v608
    %v610 = vpop.f32.mrf.mxu0
    %611 = vmatprep.mubr.f32.mxu0 0.0
    %612 = vmatmul.mubr.f32.gmra.mxu0 %v472
    %v613 = vpop.f32.mrf.mxu0
    %v614 = vadd.f32 %v432, %v613
    %v615 = vpop.f32.mrf.mxu0
    %616 = vmatprep.mubr.f32.mxu0 0.0
    %617 = vmatmul.mubr.f32.gmra.mxu0 %v475
    %v618 = vpop.f32.mrf.mxu0
    %v619 = vadd.f32 %v432, %v618
    %v620 = vpop.f32.mrf.mxu0
    %621 = vmatprep.mubr.f32.mxu0 0.0
    %622 = vmatmul.mubr.f32.gmra.mxu0 %v478
    %v623 = vpop.f32.mrf.mxu0
    %v624 = vadd.f32 %v432, %v623
    %v625 = vpop.f32.mrf.mxu0
    %626 = vmatprep.mubr.f32.mxu0 0.0
    %627 = vmatmul.mubr.f32.gmra.mxu0 %v481
    %v628 = vpop.f32.mrf.mxu0
    %v629 = vadd.f32 %v432, %v628
    %v630 = vpop.f32.mrf.mxu0
    %631 = vdwg.mxu0
    %v632 = vmax.f32 %v554, 0.0
    %v633 = vmax.f32 %v559, 0.0
    %v634 = vmax.f32 %v564, 0.0
    %v635 = vmax.f32 %v569, 0.0
    %v636 = vmax.f32 %v574, 0.0
    %v637 = vmax.f32 %v579, 0.0
    %v638 = vmax.f32 %v584, 0.0
    %v639 = vmax.f32 %v589, 0.0
    %v640 = vmax.f32 %v594, 0.0
    %v641 = vmax.f32 %v599, 0.0
    %v642 = vmax.f32 %v604, 0.0
    %v643 = vmax.f32 %v609, 0.0
    %v644 = vmax.f32 %v614, 0.0
    %v645 = vmax.f32 %v619, 0.0
    %v646 = vmax.f32 %v624, 0.0
    %v647 = vmax.f32 %v629, 0.0
    %v648 = vld [vmem:[#allocation12] sm:$0xff]
    %v649 = vld [vmem:[#allocation12 + $0x8] sm:$0xff]
    %v650 = vld [vmem:[#allocation14] sm:$0x1]
    %vm651 = vcmask 130048
    %v653 = vsel %vm651, %v632, 0
    %v656 = vsel %vm651, %v633, 0
    %v659 = vsel %vm651, %v634, 0
    %v662 = vsel %vm651, %v635, 0
    %v665 = vsel %vm651, %v636, 0
    %v668 = vsel %vm651, %v637, 0
    %v671 = vsel %vm651, %v638, 0
    %v674 = vsel %vm651, %v639, 0
    %v677 = vsel %vm651, %v640, 0
    %v680 = vsel %vm651, %v641, 0
    %v683 = vsel %vm651, %v642, 0
    %v686 = vsel %vm651, %v643, 0
    %v689 = vsel %vm651, %v644, 0
    %v692 = vsel %vm651, %v645, 0
    %v695 = vsel %vm651, %v646, 0
    %v698 = vsel %vm651, %v647, 0
    %700 = vmatprep.subr.mxu0 0.0
    %701 = vmatpush1.msra.mxu0 0.0
    %702 = vmatprep.subr.mxu0 0.0
    %703 = vmatpush1.msra.mxu0 0.0
    %704 = vmatprep.subr.mxu0 0.0
    %705 = vmatpush1.msra.mxu0 0.0
    %706 = vmatprep.subr.mxu0 0.0
    %707 = vmatpush1.msra.mxu0 0.0
    %708 = vmatprep.subr.mxu0 0.0
    %709 = vmatpush1.msra.mxu0 0.0
    %710 = vmatprep.subr.mxu0 0.0
    %711 = vmatpush1.msra.mxu0 0.0
    %712 = vmatprep.subr.mxu0 0.0
    %713 = vmatpush1.msra.mxu0 0.0
    %714 = vmatprep.subr.mxu0 0.0
    %715 = vmatpush1.msra.mxu0 0.0
    %716 = vmatprep.subr.mxu0 0.0
    %717 = vmatpush1.msra.mxu0 0.0
    %718 = vmatprep.subr.mxu0 0.0
    %719 = vmatpush1.msra.mxu0 0.0
    %720 = vmatprep.subr.mxu0 0.0
    %721 = vmatpush1.msra.mxu0 0.0
    %722 = vmatprep.subr.mxu0 0.0
    %723 = vmatpush1.msra.mxu0 0.0
    %724 = vmatprep.subr.mxu0 0.0
    %725 = vmatpush1.msra.mxu0 0.0
    %726 = vmatprep.subr.mxu0 0.0
    %727 = vmatpush1.msra.mxu0 0.0
    %728 = vmatprep.subr.mxu0 0.0
    %729 = vmatpush1.msra.mxu0 %v649
    %730 = vmatprep.subr.mxu0 0.0
    %731 = vmatpush1.msra.mxu0 %v648
    %732 = vmatprep.subr.mxu0 0.0
    %733 = vmatpush2.msra.mxu0 0.0
    %734 = vmatprep.subr.mxu0 0.0
    %735 = vmatpush2.msra.mxu0 0.0
    %736 = vmatprep.subr.mxu0 0.0
    %737 = vmatpush2.msra.mxu0 0.0
    %738 = vmatprep.subr.mxu0 0.0
    %739 = vmatpush2.msra.mxu0 0.0
    %740 = vmatprep.subr.mxu0 0.0
    %741 = vmatpush2.msra.mxu0 0.0
    %742 = vmatprep.subr.mxu0 0.0
    %743 = vmatpush2.msra.mxu0 0.0
    %744 = vmatprep.subr.mxu0 0.0
    %745 = vmatpush2.msra.mxu0 0.0
    %746 = vmatprep.subr.mxu0 0.0
    %747 = vmatpush2.msra.mxu0 0.0
    %748 = vmatprep.subr.mxu0 0.0
    %749 = vmatpush2.msra.mxu0 0.0
    %750 = vmatprep.subr.mxu0 0.0
    %751 = vmatpush2.msra.mxu0 0.0
    %752 = vmatprep.subr.mxu0 0.0
    %753 = vmatpush2.msra.mxu0 0.0
    %754 = vmatprep.subr.mxu0 0.0
    %755 = vmatpush2.msra.mxu0 0.0
    %756 = vmatprep.subr.mxu0 0.0
    %757 = vmatpush2.msra.mxu0 0.0
    %758 = vmatprep.subr.mxu0 0.0
    %759 = vmatpush2.msra.mxu0 0.0
    %760 = vmatprep.subr.mxu0 0.0
    %761 = vmatpush2.msra.mxu0 0.0
    %762 = vmatprep.subr.mxu0 0.0
    %763 = vmatpush2.msra.mxu0 0.0
    %764 = vmatprep.mubr.f32.mxu0 0.0
    %765 = vmatmul.mubr.f32.gmra.mxu0 %v653
    %v766 = vpop.f32.mrf.mxu0
    %v767 = vadd.f32 0.0, %v766
    %v768 = vpop.f32.mrf.mxu0
    %769 = vmatprep.mubr.f32.mxu0 0.0
    %770 = vmatmul.mubr.f32.gmra.mxu0 %v656
    %v771 = vpop.f32.mrf.mxu0
    %v772 = vadd.f32 0.0, %v771
    %v773 = vpop.f32.mrf.mxu0
    %774 = vmatprep.mubr.f32.mxu0 0.0
    %775 = vmatmul.mubr.f32.gmra.mxu0 %v659
    %v776 = vpop.f32.mrf.mxu0
    %v777 = vadd.f32 0.0, %v776
    %v778 = vpop.f32.mrf.mxu0
    %779 = vmatprep.mubr.f32.mxu0 0.0
    %780 = vmatmul.mubr.f32.gmra.mxu0 %v662
    %v781 = vpop.f32.mrf.mxu0
    %v782 = vadd.f32 0.0, %v781
    %v783 = vpop.f32.mrf.mxu0
    %784 = vmatprep.mubr.f32.mxu0 0.0
    %785 = vmatmul.mubr.f32.gmra.mxu0 %v665
    %v786 = vpop.f32.mrf.mxu0
    %v787 = vadd.f32 0.0, %v786
    %v788 = vpop.f32.mrf.mxu0
    %789 = vmatprep.mubr.f32.mxu0 0.0
    %790 = vmatmul.mubr.f32.gmra.mxu0 %v668
    %v791 = vpop.f32.mrf.mxu0
    %v792 = vadd.f32 0.0, %v791
    %v793 = vpop.f32.mrf.mxu0
    %794 = vmatprep.mubr.f32.mxu0 0.0
    %795 = vmatmul.mubr.f32.gmra.mxu0 %v671
    %v796 = vpop.f32.mrf.mxu0
    %v797 = vadd.f32 0.0, %v796
    %v798 = vpop.f32.mrf.mxu0
    %799 = vmatprep.mubr.f32.mxu0 0.0
    %800 = vmatmul.mubr.f32.gmra.mxu0 %v674
    %v801 = vpop.f32.mrf.mxu0
    %v802 = vadd.f32 0.0, %v801
    %v803 = vpop.f32.mrf.mxu0
    %804 = vmatprep.mubr.f32.mxu0 0.0
    %805 = vmatmul.mubr.f32.gmra.mxu0 %v677
    %v806 = vpop.f32.mrf.mxu0
    %v807 = vadd.f32 0.0, %v806
    %v808 = vpop.f32.mrf.mxu0
    %809 = vmatprep.mubr.f32.mxu0 0.0
    %810 = vmatmul.mubr.f32.gmra.mxu0 %v680
    %v811 = vpop.f32.mrf.mxu0
    %v812 = vadd.f32 0.0, %v811
    %v813 = vpop.f32.mrf.mxu0
    %814 = vmatprep.mubr.f32.mxu0 0.0
    %815 = vmatmul.mubr.f32.gmra.mxu0 %v683
    %v816 = vpop.f32.mrf.mxu0
    %v817 = vadd.f32 0.0, %v816
    %v818 = vpop.f32.mrf.mxu0
    %819 = vmatprep.mubr.f32.mxu0 0.0
    %820 = vmatmul.mubr.f32.gmra.mxu0 %v686
    %v821 = vpop.f32.mrf.mxu0
    %v822 = vadd.f32 0.0, %v821
    %v823 = vpop.f32.mrf.mxu0
    %824 = vmatprep.mubr.f32.mxu0 0.0
    %825 = vmatmul.mubr.f32.gmra.mxu0 %v689
    %v826 = vpop.f32.mrf.mxu0
    %v827 = vadd.f32 0.0, %v826
    %v828 = vpop.f32.mrf.mxu0
    %829 = vmatprep.mubr.f32.mxu0 0.0
    %830 = vmatmul.mubr.f32.gmra.mxu0 %v692
    %v831 = vpop.f32.mrf.mxu0
    %v832 = vadd.f32 0.0, %v831
    %v833 = vpop.f32.mrf.mxu0
    %834 = vmatprep.mubr.f32.mxu0 0.0
    %835 = vmatmul.mubr.f32.gmra.mxu0 %v695
    %v836 = vpop.f32.mrf.mxu0
    %v837 = vadd.f32 0.0, %v836
    %v838 = vpop.f32.mrf.mxu0
    %839 = vmatprep.mubr.f32.mxu0 0.0
    %840 = vmatmul.mubr.f32.gmra.mxu0 %v698
    %v841 = vpop.f32.mrf.mxu0
    %v842 = vadd.f32 0.0, %v841
    %v843 = vpop.f32.mrf.mxu0
    %844 = vdwg.mxu0
    %846 = vrot.lane.b32.xlu0 %v772, 112
    %v847 = vpop.permute.xlu0 %846
    %v849 = vadd.f32 %v767, %v847
    %863 = vrot.lane.b32.xlu0 %v777, 112
    %v864 = vpop.permute.xlu0 %863
    %865 = vrot.lane.b32.xlu0 %v782, 112
    %v866 = vpop.permute.xlu0 %865
    %867 = vrot.lane.b32.xlu0 %v787, 112
    %v868 = vpop.permute.xlu0 %867
    %869 = vrot.lane.b32.xlu0 %v792, 112
    %v870 = vpop.permute.xlu0 %869
    %871 = vrot.lane.b32.xlu0 %v797, 112
    %v872 = vpop.permute.xlu0 %871
    %873 = vrot.lane.b32.xlu0 %v802, 112
    %v874 = vpop.permute.xlu0 %873
    %875 = vrot.lane.b32.xlu0 %v807, 112
    %v876 = vpop.permute.xlu0 %875
    %877 = vrot.lane.b32.xlu0 %v812, 112
    %v878 = vpop.permute.xlu0 %877
    %879 = vrot.lane.b32.xlu0 %v817, 112
    %v880 = vpop.permute.xlu0 %879
    %881 = vrot.lane.b32.xlu0 %v822, 112
    %v882 = vpop.permute.xlu0 %881
    %883 = vrot.lane.b32.xlu0 %v827, 112
    %v884 = vpop.permute.xlu0 %883
    %885 = vrot.lane.b32.xlu0 %v832, 112
    %v886 = vpop.permute.xlu0 %885
    %887 = vrot.lane.b32.xlu0 %v837, 112
    %v888 = vpop.permute.xlu0 %887
    %v902 = vadd.f32 %v772, %v864
    %v903 = vadd.f32 %v777, %v866
    %v904 = vadd.f32 %v782, %v868
    %v905 = vadd.f32 %v787, %v870
    %v906 = vadd.f32 %v792, %v872
    %v907 = vadd.f32 %v797, %v874
    %v908 = vadd.f32 %v802, %v876
    %v909 = vadd.f32 %v807, %v878
    %v910 = vadd.f32 %v812, %v880
    %v911 = vadd.f32 %v817, %v882
    %v912 = vadd.f32 %v822, %v884
    %v913 = vadd.f32 %v827, %v886
    %v914 = vadd.f32 %v832, %v888
    %916 = vrot.lane.b32.xlu0 %v777, 96
    %v917 = vpop.permute.xlu0 %916
    %918 = vrot.lane.b32.xlu0 %v782, 96
    %v919 = vpop.permute.xlu0 %918
    %920 = vrot.lane.b32.xlu0 %v787, 96
    %v921 = vpop.permute.xlu0 %920
    %922 = vrot.lane.b32.xlu0 %v792, 96
    %v923 = vpop.permute.xlu0 %922
    %924 = vrot.lane.b32.xlu0 %v797, 96
    %v925 = vpop.permute.xlu0 %924
    %926 = vrot.lane.b32.xlu0 %v802, 96
    %v927 = vpop.permute.xlu0 %926
    %928 = vrot.lane.b32.xlu0 %v807, 96
    %v929 = vpop.permute.xlu0 %928
    %930 = vrot.lane.b32.xlu0 %v812, 96
    %v931 = vpop.permute.xlu0 %930
    %932 = vrot.lane.b32.xlu0 %v817, 96
    %v933 = vpop.permute.xlu0 %932
    %934 = vrot.lane.b32.xlu0 %v822, 96
    %v935 = vpop.permute.xlu0 %934
    %936 = vrot.lane.b32.xlu0 %v827, 96
    %v937 = vpop.permute.xlu0 %936
    %938 = vrot.lane.b32.xlu0 %v832, 96
    %v939 = vpop.permute.xlu0 %938
    %940 = vrot.lane.b32.xlu0 %v837, 96
    %v941 = vpop.permute.xlu0 %940
    %942 = vrot.lane.b32.xlu0 %v842, 96
    %v943 = vpop.permute.xlu0 %942
    %v958 = vadd.f32 %v849, %v917
    %v959 = vadd.f32 %v902, %v919
    %v960 = vadd.f32 %v903, %v921
    %v961 = vadd.f32 %v904, %v923
    %v962 = vadd.f32 %v905, %v925
    %v963 = vadd.f32 %v906, %v927
    %v964 = vadd.f32 %v907, %v929
    %v965 = vadd.f32 %v908, %v931
    %v966 = vadd.f32 %v909, %v933
    %v967 = vadd.f32 %v910, %v935
    %v968 = vadd.f32 %v911, %v937
    %v969 = vadd.f32 %v912, %v939
    %v970 = vadd.f32 %v913, %v941
    %v971 = vadd.f32 %v914, %v943
    %972 = vrot.lane.b32.xlu0 %v842, 112
    %v973 = vpop.permute.xlu0 %972
    %v975 = vadd.f32 %v837, %v973
    %990 = vrot.lane.b32.xlu0 %v958, 16
    %v991 = vpop.permute.xlu0 %990
    %992 = vrot.lane.b32.xlu0 %v959, 16
    %v993 = vpop.permute.xlu0 %992
    %994 = vrot.lane.b32.xlu0 %v960, 16
    %v995 = vpop.permute.xlu0 %994
    %996 = vrot.lane.b32.xlu0 %v961, 16
    %v997 = vpop.permute.xlu0 %996
    %998 = vrot.lane.b32.xlu0 %v962, 16
    %v999 = vpop.permute.xlu0 %998
    %1000 = vrot.lane.b32.xlu0 %v963, 16
    %v1001 = vpop.permute.xlu0 %1000
    %1002 = vrot.lane.b32.xlu0 %v964, 16
    %v1003 = vpop.permute.xlu0 %1002
    %1004 = vrot.lane.b32.xlu0 %v965, 16
    %v1005 = vpop.permute.xlu0 %1004
    %1006 = vrot.lane.b32.xlu0 %v966, 16
    %v1007 = vpop.permute.xlu0 %1006
    %1008 = vrot.lane.b32.xlu0 %v967, 16
    %v1009 = vpop.permute.xlu0 %1008
    %1010 = vrot.lane.b32.xlu0 %v968, 16
    %v1011 = vpop.permute.xlu0 %1010
    %1012 = vrot.lane.b32.xlu0 %v969, 16
    %v1013 = vpop.permute.xlu0 %1012
    %1014 = vrot.lane.b32.xlu0 %v970, 16
    %v1015 = vpop.permute.xlu0 %1014
    %1016 = vrot.lane.b32.xlu0 %v971, 16
    %v1017 = vpop.permute.xlu0 %1016
    %1033 = vrot.lane.b32.xlu0 %v975, 16
    %v1034 = vpop.permute.xlu0 %1033
    %v1037 = vlaneseq
    %v1038 = vshrl.u32 %v1037, 7
    %v1039 = vsub.s32 0, %v1038
    %v1040 = vrot.slane %v650, %v1039
    %1041 = vrot.lane.b32.xlu0 %v1040, 16
    %v1042 = vpop.permute.xlu0 %1041
    %v1044 = vadd.f32 %v849, %v1042
    %v1045 = vadd.f32 %v991, %v1042
    %v1046 = vadd.f32 %v993, %v1042
    %v1047 = vadd.f32 %v995, %v1042
    %v1048 = vadd.f32 %v997, %v1042
    %v1049 = vadd.f32 %v999, %v1042
    %v1050 = vadd.f32 %v1001, %v1042
    %v1051 = vadd.f32 %v1003, %v1042
    %v1052 = vadd.f32 %v1005, %v1042
    %v1053 = vadd.f32 %v1007, %v1042
    %v1054 = vadd.f32 %v1009, %v1042
    %v1055 = vadd.f32 %v1011, %v1042
    %v1056 = vadd.f32 %v1013, %v1042
    %v1057 = vadd.f32 %v1015, %v1042
    %v1058 = vadd.f32 %v1017, %v1042
    %v1059 = vadd.f32 %v1034, %v1042
    %v1060 = vmax.f32 %v1044, 0.0
    %v1061 = vmax.f32 %v1045, 0.0
    %v1062 = vmax.f32 %v1046, 0.0
    %v1063 = vmax.f32 %v1047, 0.0
    %v1064 = vmax.f32 %v1048, 0.0
    %v1065 = vmax.f32 %v1049, 0.0
    %v1066 = vmax.f32 %v1050, 0.0
    %v1067 = vmax.f32 %v1051, 0.0
    %v1068 = vmax.f32 %v1052, 0.0
    %v1069 = vmax.f32 %v1053, 0.0
    %v1070 = vmax.f32 %v1054, 0.0
    %v1071 = vmax.f32 %v1055, 0.0
    %v1072 = vmax.f32 %v1056, 0.0
    %v1073 = vmax.f32 %v1057, 0.0
    %v1074 = vmax.f32 %v1058, 0.0
    %v1075 = vmax.f32 %v1059, 0.0
    %v1076 = vmax.f32 %v1060, %v1061
    %v1077 = vmax.f32 %v1062, %v1063
    %v1078 = vmax.f32 %v1064, %v1065
    %v1079 = vmax.f32 %v1066, %v1067
    %v1080 = vmax.f32 %v1068, %v1069
    %v1081 = vmax.f32 %v1070, %v1071
    %v1082 = vmax.f32 %v1072, %v1073
    %v1083 = vmax.f32 %v1074, %v1075
    %v1084 = vld [vmem:[#allocation15] sm:$0xff]
    %v1085 = vld [vmem:[#allocation15 + $0x8] sm:$0xff]
    %v1086 = vld [vmem:[#allocation17] sm:$0x1]
    %1095 = vrot.lane.b32.xlu0 %v1076, 112
    %v1096 = vpop.permute.xlu0 %1095
    %1097 = vrot.lane.b32.xlu0 %v1077, 112
    %v1098 = vpop.permute.xlu0 %1097
    %1099 = vrot.lane.b32.xlu0 %v1078, 112
    %v1100 = vpop.permute.xlu0 %1099
    %1101 = vrot.lane.b32.xlu0 %v1079, 112
    %v1102 = vpop.permute.xlu0 %1101
    %1103 = vrot.lane.b32.xlu0 %v1080, 112
    %v1104 = vpop.permute.xlu0 %1103
    %1105 = vrot.lane.b32.xlu0 %v1081, 112
    %v1106 = vpop.permute.xlu0 %1105
    %1107 = vrot.lane.b32.xlu0 %v1082, 112
    %v1108 = vpop.permute.xlu0 %1107
    %1109 = vrot.lane.b32.xlu0 %v1083, 112
    %v1110 = vpop.permute.xlu0 %1109
    %v1111 = vsel %vm651, %v1096, 0
    %v1113 = vsel %vm651, %v1098, 0
    %v1115 = vsel %vm651, %v1100, 0
    %v1117 = vsel %vm651, %v1102, 0
    %v1119 = vsel %vm651, %v1104, 0
    %v1121 = vsel %vm651, %v1106, 0
    %v1123 = vsel %vm651, %v1108, 0
    %v1125 = vsel %vm651, %v1110, 0
    %1127 = vmatprep.subr.mxu0 0.0
    %1128 = vmatpush1.msra.mxu0 0.0
    %1129 = vmatprep.subr.mxu0 0.0
    %1130 = vmatpush1.msra.mxu0 0.0
    %1131 = vmatprep.subr.mxu0 0.0
    %1132 = vmatpush1.msra.mxu0 0.0
    %1133 = vmatprep.subr.mxu0 0.0
    %1134 = vmatpush1.msra.mxu0 0.0
    %1135 = vmatprep.subr.mxu0 0.0
    %1136 = vmatpush1.msra.mxu0 0.0
    %1137 = vmatprep.subr.mxu0 0.0
    %1138 = vmatpush1.msra.mxu0 0.0
    %1139 = vmatprep.subr.mxu0 0.0
    %1140 = vmatpush1.msra.mxu0 0.0
    %1141 = vmatprep.subr.mxu0 0.0
    %1142 = vmatpush1.msra.mxu0 0.0
    %1143 = vmatprep.subr.mxu0 0.0
    %1144 = vmatpush1.msra.mxu0 0.0
    %1145 = vmatprep.subr.mxu0 0.0
    %1146 = vmatpush1.msra.mxu0 0.0
    %1147 = vmatprep.subr.mxu0 0.0
    %1148 = vmatpush1.msra.mxu0 0.0
    %1149 = vmatprep.subr.mxu0 0.0
    %1150 = vmatpush1.msra.mxu0 0.0
    %1151 = vmatprep.subr.mxu0 0.0
    %1152 = vmatpush1.msra.mxu0 0.0
    %1153 = vmatprep.subr.mxu0 0.0
    %1154 = vmatpush1.msra.mxu0 0.0
    %1155 = vmatprep.subr.mxu0 0.0
    %1156 = vmatpush1.msra.mxu0 %v1085
    %1157 = vmatprep.subr.mxu0 0.0
    %1158 = vmatpush1.msra.mxu0 %v1084
    %1159 = vmatprep.subr.mxu0 0.0
    %1160 = vmatpush2.msra.mxu0 0.0
    %1161 = vmatprep.subr.mxu0 0.0
    %1162 = vmatpush2.msra.mxu0 0.0
    %1163 = vmatprep.subr.mxu0 0.0
    %1164 = vmatpush2.msra.mxu0 0.0
    %1165 = vmatprep.subr.mxu0 0.0
    %1166 = vmatpush2.msra.mxu0 0.0
    %1167 = vmatprep.subr.mxu0 0.0
    %1168 = vmatpush2.msra.mxu0 0.0
    %1169 = vmatprep.subr.mxu0 0.0
    %1170 = vmatpush2.msra.mxu0 0.0
    %1171 = vmatprep.subr.mxu0 0.0
    %1172 = vmatpush2.msra.mxu0 0.0
    %1173 = vmatprep.subr.mxu0 0.0
    %1174 = vmatpush2.msra.mxu0 0.0
    %1175 = vmatprep.subr.mxu0 0.0
    %1176 = vmatpush2.msra.mxu0 0.0
    %1177 = vmatprep.subr.mxu0 0.0
    %1178 = vmatpush2.msra.mxu0 0.0
    %1179 = vmatprep.subr.mxu0 0.0
    %1180 = vmatpush2.msra.mxu0 0.0
    %1181 = vmatprep.subr.mxu0 0.0
    %1182 = vmatpush2.msra.mxu0 0.0
    %1183 = vmatprep.subr.mxu0 0.0
    %1184 = vmatpush2.msra.mxu0 0.0
    %1185 = vmatprep.subr.mxu0 0.0
    %1186 = vmatpush2.msra.mxu0 0.0
    %1187 = vmatprep.subr.mxu0 0.0
    %1188 = vmatpush2.msra.mxu0 0.0
    %1189 = vmatprep.subr.mxu0 0.0
    %1190 = vmatpush2.msra.mxu0 0.0
    %1191 = vmatprep.mubr.f32.mxu0 0.0
    %1192 = vmatmul.mubr.f32.gmra.mxu0 %v1111
    %v1193 = vpop.f32.mrf.mxu0
    %v1194 = vadd.f32 0.0, %v1193
    %v1195 = vpop.f32.mrf.mxu0
    %1196 = vmatprep.mubr.f32.mxu0 0.0
    %1197 = vmatmul.mubr.f32.gmra.mxu0 %v1113
    %v1198 = vpop.f32.mrf.mxu0
    %v1199 = vadd.f32 0.0, %v1198
    %v1200 = vpop.f32.mrf.mxu0
    %1201 = vmatprep.mubr.f32.mxu0 0.0
    %1202 = vmatmul.mubr.f32.gmra.mxu0 %v1115
    %v1203 = vpop.f32.mrf.mxu0
    %v1204 = vadd.f32 0.0, %v1203
    %v1205 = vpop.f32.mrf.mxu0
    %1206 = vmatprep.mubr.f32.mxu0 0.0
    %1207 = vmatmul.mubr.f32.gmra.mxu0 %v1117
    %v1208 = vpop.f32.mrf.mxu0
    %v1209 = vadd.f32 0.0, %v1208
    %v1210 = vpop.f32.mrf.mxu0
    %1211 = vmatprep.mubr.f32.mxu0 0.0
    %1212 = vmatmul.mubr.f32.gmra.mxu0 %v1119
    %v1213 = vpop.f32.mrf.mxu0
    %v1214 = vadd.f32 0.0, %v1213
    %v1215 = vpop.f32.mrf.mxu0
    %1216 = vmatprep.mubr.f32.mxu0 0.0
    %1217 = vmatmul.mubr.f32.gmra.mxu0 %v1121
    %v1218 = vpop.f32.mrf.mxu0
    %v1219 = vadd.f32 0.0, %v1218
    %v1220 = vpop.f32.mrf.mxu0
    %1221 = vmatprep.mubr.f32.mxu0 0.0
    %1222 = vmatmul.mubr.f32.gmra.mxu0 %v1123
    %v1223 = vpop.f32.mrf.mxu0
    %v1224 = vadd.f32 0.0, %v1223
    %v1225 = vpop.f32.mrf.mxu0
    %1226 = vmatprep.mubr.f32.mxu0 0.0
    %1227 = vmatmul.mubr.f32.gmra.mxu0 %v1125
    %v1228 = vpop.f32.mrf.mxu0
    %v1229 = vadd.f32 0.0, %v1228
    %v1230 = vpop.f32.mrf.mxu0
    %1231 = vdwg.mxu0
    %1233 = vrot.lane.b32.xlu0 %v1199, 96
    %v1234 = vpop.permute.xlu0 %1233
    %v1236 = vadd.f32 %v1194, %v1234
    %1242 = vrot.lane.b32.xlu0 %v1204, 96
    %v1243 = vpop.permute.xlu0 %1242
    %1244 = vrot.lane.b32.xlu0 %v1209, 96
    %v1245 = vpop.permute.xlu0 %1244
    %1246 = vrot.lane.b32.xlu0 %v1214, 96
    %v1247 = vpop.permute.xlu0 %1246
    %1248 = vrot.lane.b32.xlu0 %v1219, 96
    %v1249 = vpop.permute.xlu0 %1248
    %1250 = vrot.lane.b32.xlu0 %v1224, 96
    %v1251 = vpop.permute.xlu0 %1250
    %v1257 = vadd.f32 %v1199, %v1243
    %v1258 = vadd.f32 %v1204, %v1245
    %v1259 = vadd.f32 %v1209, %v1247
    %v1260 = vadd.f32 %v1214, %v1249
    %v1261 = vadd.f32 %v1219, %v1251
    %1263 = vrot.lane.b32.xlu0 %v1204, 64
    %v1264 = vpop.permute.xlu0 %1263
    %1265 = vrot.lane.b32.xlu0 %v1209, 64
    %v1266 = vpop.permute.xlu0 %1265
    %1267 = vrot.lane.b32.xlu0 %v1214, 64
    %v1268 = vpop.permute.xlu0 %1267
    %1269 = vrot.lane.b32.xlu0 %v1219, 64
    %v1270 = vpop.permute.xlu0 %1269
    %1271 = vrot.lane.b32.xlu0 %v1224, 64
    %v1272 = vpop.permute.xlu0 %1271
    %1273 = vrot.lane.b32.xlu0 %v1229, 64
    %v1274 = vpop.permute.xlu0 %1273
    %v1281 = vadd.f32 %v1236, %v1264
    %v1282 = vadd.f32 %v1257, %v1266
    %v1283 = vadd.f32 %v1258, %v1268
    %v1284 = vadd.f32 %v1259, %v1270
    %v1285 = vadd.f32 %v1260, %v1272
    %v1286 = vadd.f32 %v1261, %v1274
    %1287 = vrot.lane.b32.xlu0 %v1229, 96
    %v1288 = vpop.permute.xlu0 %1287
    %v1290 = vadd.f32 %v1224, %v1288
    %1297 = vrot.lane.b32.xlu0 %v1281, 32
    %v1298 = vpop.permute.xlu0 %1297
    %1299 = vrot.lane.b32.xlu0 %v1282, 32
    %v1300 = vpop.permute.xlu0 %1299
    %1301 = vrot.lane.b32.xlu0 %v1283, 32
    %v1302 = vpop.permute.xlu0 %1301
    %1303 = vrot.lane.b32.xlu0 %v1284, 32
    %v1304 = vpop.permute.xlu0 %1303
    %1305 = vrot.lane.b32.xlu0 %v1285, 32
    %v1306 = vpop.permute.xlu0 %1305
    %1307 = vrot.lane.b32.xlu0 %v1286, 32
    %v1308 = vpop.permute.xlu0 %1307
    %1316 = vrot.lane.b32.xlu0 %v1290, 32
    %v1317 = vpop.permute.xlu0 %1316
    %v1320 = vlaneseq
    %v1321 = vshrl.u32 %v1320, 7
    %v1322 = vsub.s32 0, %v1321
    %v1323 = vrot.slane %v1086, %v1322
    %1324 = vrot.lane.b32.xlu0 %v1323, 32
    %v1325 = vpop.permute.xlu0 %1324
    %v1327 = vadd.f32 %v1236, %v1325
    %v1328 = vadd.f32 %v1298, %v1325
    %v1329 = vadd.f32 %v1300, %v1325
    %v1330 = vadd.f32 %v1302, %v1325
    %v1331 = vadd.f32 %v1304, %v1325
    %v1332 = vadd.f32 %v1306, %v1325
    %v1333 = vadd.f32 %v1308, %v1325
    %v1334 = vadd.f32 %v1317, %v1325
    %v1335 = vmax.f32 %v1327, 0.0
    %v1336 = vmax.f32 %v1328, 0.0
    %v1337 = vmax.f32 %v1329, 0.0
    %v1338 = vmax.f32 %v1330, 0.0
    %v1339 = vmax.f32 %v1331, 0.0
    %v1340 = vmax.f32 %v1332, 0.0
    %v1341 = vmax.f32 %v1333, 0.0
    %v1342 = vmax.f32 %v1334, 0.0
    %v1343 = vld [vmem:[#allocation18] sm:$0xff]
    %v1344 = vld [vmem:[#allocation18 + $0x8] sm:$0xff]
    %v1345 = vld [vmem:[#allocation18 + $0x10] sm:$0xff]
    %v1346 = vld [vmem:[#allocation18 + $0x18] sm:$0xff]
    %v1347 = vld [vmem:[#allocation20] sm:$0x1]
    %1356 = vrot.lane.b32.xlu0 %v1335, 96
    %v1357 = vpop.permute.xlu0 %1356
    %1358 = vrot.lane.b32.xlu0 %v1336, 96
    %v1359 = vpop.permute.xlu0 %1358
    %1360 = vrot.lane.b32.xlu0 %v1337, 96
    %v1361 = vpop.permute.xlu0 %1360
    %1362 = vrot.lane.b32.xlu0 %v1338, 96
    %v1363 = vpop.permute.xlu0 %1362
    %1364 = vrot.lane.b32.xlu0 %v1339, 96
    %v1365 = vpop.permute.xlu0 %1364
    %1366 = vrot.lane.b32.xlu0 %v1340, 96
    %v1367 = vpop.permute.xlu0 %1366
    %1368 = vrot.lane.b32.xlu0 %v1341, 96
    %v1369 = vpop.permute.xlu0 %1368
    %1370 = vrot.lane.b32.xlu0 %v1342, 96
    %v1371 = vpop.permute.xlu0 %1370
    %vm1372 = vcmask 261120
    %v1373 = vsel %vm1372, %v1357, 0
    %v1375 = vsel %vm1372, %v1359, 0
    %v1377 = vsel %vm1372, %v1361, 0
    %v1379 = vsel %vm1372, %v1363, 0
    %v1381 = vsel %vm1372, %v1365, 0
    %v1383 = vsel %vm1372, %v1367, 0
    %v1385 = vsel %vm1372, %v1369, 0
    %v1387 = vsel %vm1372, %v1371, 0
    %1389 = vmatprep.subr.mxu0 0.0
    %1390 = vmatpush1.msra.mxu0 0.0
    %1391 = vmatprep.subr.mxu0 0.0
    %1392 = vmatpush1.msra.mxu0 0.0
    %1393 = vmatprep.subr.mxu0 0.0
    %1394 = vmatpush1.msra.mxu0 0.0
    %1395 = vmatprep.subr.mxu0 0.0
    %1396 = vmatpush1.msra.mxu0 0.0
    %1397 = vmatprep.subr.mxu0 0.0
    %1398 = vmatpush1.msra.mxu0 0.0
    %1399 = vmatprep.subr.mxu0 0.0
    %1400 = vmatpush1.msra.mxu0 0.0
    %1401 = vmatprep.subr.mxu0 0.0
    %1402 = vmatpush1.msra.mxu0 0.0
    %1403 = vmatprep.subr.mxu0 0.0
    %1404 = vmatpush1.msra.mxu0 0.0
    %1405 = vmatprep.subr.mxu0 0.0
    %1406 = vmatpush1.msra.mxu0 0.0
    %1407 = vmatprep.subr.mxu0 0.0
    %1408 = vmatpush1.msra.mxu0 0.0
    %1409 = vmatprep.subr.mxu0 0.0
    %1410 = vmatpush1.msra.mxu0 0.0
    %1411 = vmatprep.subr.mxu0 0.0
    %1412 = vmatpush1.msra.mxu0 0.0
    %1413 = vmatprep.subr.mxu0 0.0
    %1414 = vmatpush1.msra.mxu0 %v1346
    %1415 = vmatprep.subr.mxu0 0.0
    %1416 = vmatpush1.msra.mxu0 %v1345
    %1417 = vmatprep.subr.mxu0 0.0
    %1418 = vmatpush1.msra.mxu0 %v1344
    %1419 = vmatprep.subr.mxu0 0.0
    %1420 = vmatpush1.msra.mxu0 %v1343
    %1421 = vmatprep.subr.mxu0 0.0
    %1422 = vmatpush2.msra.mxu0 0.0
    %1423 = vmatprep.subr.mxu0 0.0
    %1424 = vmatpush2.msra.mxu0 0.0
    %1425 = vmatprep.subr.mxu0 0.0
    %1426 = vmatpush2.msra.mxu0 0.0
    %1427 = vmatprep.subr.mxu0 0.0
    %1428 = vmatpush2.msra.mxu0 0.0
    %1429 = vmatprep.subr.mxu0 0.0
    %1430 = vmatpush2.msra.mxu0 0.0
    %1431 = vmatprep.subr.mxu0 0.0
    %1432 = vmatpush2.msra.mxu0 0.0
    %1433 = vmatprep.subr.mxu0 0.0
    %1434 = vmatpush2.msra.mxu0 0.0
    %1435 = vmatprep.subr.mxu0 0.0
    %1436 = vmatpush2.msra.mxu0 0.0
    %1437 = vmatprep.subr.mxu0 0.0
    %1438 = vmatpush2.msra.mxu0 0.0
    %1439 = vmatprep.subr.mxu0 0.0
    %1440 = vmatpush2.msra.mxu0 0.0
    %1441 = vmatprep.subr.mxu0 0.0
    %1442 = vmatpush2.msra.mxu0 0.0
    %1443 = vmatprep.subr.mxu0 0.0
    %1444 = vmatpush2.msra.mxu0 0.0
    %1445 = vmatprep.subr.mxu0 0.0
    %1446 = vmatpush2.msra.mxu0 0.0
    %1447 = vmatprep.subr.mxu0 0.0
    %1448 = vmatpush2.msra.mxu0 0.0
    %1449 = vmatprep.subr.mxu0 0.0
    %1450 = vmatpush2.msra.mxu0 0.0
    %1451 = vmatprep.subr.mxu0 0.0
    %1452 = vmatpush2.msra.mxu0 0.0
    %1453 = vmatprep.mubr.f32.mxu0 0.0
    %1454 = vmatmul.mubr.f32.gmra.mxu0 %v1373
    %v1455 = vpop.f32.mrf.mxu0
    %v1456 = vadd.f32 0.0, %v1455
    %v1457 = vpop.f32.mrf.mxu0
    %1458 = vmatprep.mubr.f32.mxu0 0.0
    %1459 = vmatmul.mubr.f32.gmra.mxu0 %v1375
    %v1460 = vpop.f32.mrf.mxu0
    %v1461 = vadd.f32 0.0, %v1460
    %v1462 = vpop.f32.mrf.mxu0
    %1463 = vmatprep.mubr.f32.mxu0 0.0
    %1464 = vmatmul.mubr.f32.gmra.mxu0 %v1377
    %v1465 = vpop.f32.mrf.mxu0
    %v1466 = vadd.f32 0.0, %v1465
    %v1467 = vpop.f32.mrf.mxu0
    %1468 = vmatprep.mubr.f32.mxu0 0.0
    %1469 = vmatmul.mubr.f32.gmra.mxu0 %v1379
    %v1470 = vpop.f32.mrf.mxu0
    %v1471 = vadd.f32 0.0, %v1470
    %v1472 = vpop.f32.mrf.mxu0
    %1473 = vmatprep.mubr.f32.mxu0 0.0
    %1474 = vmatmul.mubr.f32.gmra.mxu0 %v1381
    %v1475 = vpop.f32.mrf.mxu0
    %v1476 = vadd.f32 0.0, %v1475
    %v1477 = vpop.f32.mrf.mxu0
    %1478 = vmatprep.mubr.f32.mxu0 0.0
    %1479 = vmatmul.mubr.f32.gmra.mxu0 %v1383
    %v1480 = vpop.f32.mrf.mxu0
    %v1481 = vadd.f32 0.0, %v1480
    %v1482 = vpop.f32.mrf.mxu0
    %1483 = vmatprep.mubr.f32.mxu0 0.0
    %1484 = vmatmul.mubr.f32.gmra.mxu0 %v1385
    %v1485 = vpop.f32.mrf.mxu0
    %v1486 = vadd.f32 0.0, %v1485
    %v1487 = vpop.f32.mrf.mxu0
    %1488 = vmatprep.mubr.f32.mxu0 0.0
    %1489 = vmatmul.mubr.f32.gmra.mxu0 %v1387
    %v1490 = vpop.f32.mrf.mxu0
    %v1491 = vadd.f32 0.0, %v1490
    %v1492 = vpop.f32.mrf.mxu0
    %1493 = vdwg.mxu0
    %1495 = vrot.lane.b32.xlu0 %v1461, 96
    %v1496 = vpop.permute.xlu0 %1495
    %v1498 = vadd.f32 %v1456, %v1496
    %1504 = vrot.lane.b32.xlu0 %v1466, 96
    %v1505 = vpop.permute.xlu0 %1504
    %1506 = vrot.lane.b32.xlu0 %v1471, 96
    %v1507 = vpop.permute.xlu0 %1506
    %1508 = vrot.lane.b32.xlu0 %v1476, 96
    %v1509 = vpop.permute.xlu0 %1508
    %1510 = vrot.lane.b32.xlu0 %v1481, 96
    %v1511 = vpop.permute.xlu0 %1510
    %1512 = vrot.lane.b32.xlu0 %v1486, 96
    %v1513 = vpop.permute.xlu0 %1512
    %v1519 = vadd.f32 %v1461, %v1505
    %v1520 = vadd.f32 %v1466, %v1507
    %v1521 = vadd.f32 %v1471, %v1509
    %v1522 = vadd.f32 %v1476, %v1511
    %v1523 = vadd.f32 %v1481, %v1513
    %1525 = vrot.lane.b32.xlu0 %v1466, 64
    %v1526 = vpop.permute.xlu0 %1525
    %1527 = vrot.lane.b32.xlu0 %v1471, 64
    %v1528 = vpop.permute.xlu0 %1527
    %1529 = vrot.lane.b32.xlu0 %v1476, 64
    %v1530 = vpop.permute.xlu0 %1529
    %1531 = vrot.lane.b32.xlu0 %v1481, 64
    %v1532 = vpop.permute.xlu0 %1531
    %1533 = vrot.lane.b32.xlu0 %v1486, 64
    %v1534 = vpop.permute.xlu0 %1533
    %1535 = vrot.lane.b32.xlu0 %v1491, 64
    %v1536 = vpop.permute.xlu0 %1535
    %v1543 = vadd.f32 %v1498, %v1526
    %v1544 = vadd.f32 %v1519, %v1528
    %v1545 = vadd.f32 %v1520, %v1530
    %v1546 = vadd.f32 %v1521, %v1532
    %v1547 = vadd.f32 %v1522, %v1534
    %v1548 = vadd.f32 %v1523, %v1536
    %1549 = vrot.lane.b32.xlu0 %v1491, 96
    %v1550 = vpop.permute.xlu0 %1549
    %v1552 = vadd.f32 %v1486, %v1550
    %1559 = vrot.lane.b32.xlu0 %v1543, 32
    %v1560 = vpop.permute.xlu0 %1559
    %1561 = vrot.lane.b32.xlu0 %v1544, 32
    %v1562 = vpop.permute.xlu0 %1561
    %1563 = vrot.lane.b32.xlu0 %v1545, 32
    %v1564 = vpop.permute.xlu0 %1563
    %1565 = vrot.lane.b32.xlu0 %v1546, 32
    %v1566 = vpop.permute.xlu0 %1565
    %1567 = vrot.lane.b32.xlu0 %v1547, 32
    %v1568 = vpop.permute.xlu0 %1567
    %1569 = vrot.lane.b32.xlu0 %v1548, 32
    %v1570 = vpop.permute.xlu0 %1569
    %1578 = vrot.lane.b32.xlu0 %v1552, 32
    %v1579 = vpop.permute.xlu0 %1578
    %v1582 = vlaneseq
    %v1583 = vshrl.u32 %v1582, 7
    %v1584 = vsub.s32 0, %v1583
    %v1585 = vrot.slane %v1347, %v1584
    %1586 = vrot.lane.b32.xlu0 %v1585, 32
    %v1587 = vpop.permute.xlu0 %1586
    %v1589 = vadd.f32 %v1498, %v1587
    %v1590 = vadd.f32 %v1560, %v1587
    %v1591 = vadd.f32 %v1562, %v1587
    %v1592 = vadd.f32 %v1564, %v1587
    %v1593 = vadd.f32 %v1566, %v1587
    %v1594 = vadd.f32 %v1568, %v1587
    %v1595 = vadd.f32 %v1570, %v1587
    %v1596 = vadd.f32 %v1579, %v1587
    %v1597 = vmax.f32 %v1589, 0.0
    %v1598 = vmax.f32 %v1590, 0.0
    %v1599 = vmax.f32 %v1591, 0.0
    %v1600 = vmax.f32 %v1592, 0.0
    %v1601 = vmax.f32 %v1593, 0.0
    %v1602 = vmax.f32 %v1594, 0.0
    %v1603 = vmax.f32 %v1595, 0.0
    %v1604 = vmax.f32 %v1596, 0.0
    %v1605 = vmax.f32 %v1597, %v1598
    %v1606 = vmax.f32 %v1599, %v1600
    %v1607 = vmax.f32 %v1601, %v1602
    %v1608 = vmax.f32 %v1603, %v1604
    %v1609 = vld [vmem:[#allocation21] sm:$0xff]
    %v1610 = vld [vmem:[#allocation21 + $0x8] sm:$0xff]
    %v1611 = vld [vmem:[#allocation21 + $0x10] sm:$0xff]
    %v1612 = vld [vmem:[#allocation21 + $0x18] sm:$0xff]
    %v1613 = vld [vmem:[#allocation21 + $0x20] sm:$0xff]
    %v1614 = vld [vmem:[#allocation21 + $0x28] sm:$0xff]
    %v1615 = vld [vmem:[#allocation21 + $0x30] sm:$0xff]
    %v1616 = vld [vmem:[#allocation21 + $0x38] sm:$0xff]
    %v1617 = vld [vmem:[#allocation23] sm:$0x1]
    %1622 = vrot.lane.b32.xlu0 %v1605, 96
    %v1623 = vpop.permute.xlu0 %1622
    %1624 = vrot.lane.b32.xlu0 %v1606, 96
    %v1625 = vpop.permute.xlu0 %1624
    %1626 = vrot.lane.b32.xlu0 %v1607, 96
    %v1627 = vpop.permute.xlu0 %1626
    %1628 = vrot.lane.b32.xlu0 %v1608, 96
    %v1629 = vpop.permute.xlu0 %1628
    %v1630 = vsel %vm1372, %v1623, 0
    %v1632 = vsel %vm1372, %v1625, 0
    %v1634 = vsel %vm1372, %v1627, 0
    %v1636 = vsel %vm1372, %v1629, 0
    %1638 = vmatprep.subr.mxu0 0.0
    %1639 = vmatpush1.msra.mxu0 0.0
    %1640 = vmatprep.subr.mxu0 0.0
    %1641 = vmatpush1.msra.mxu0 0.0
    %1642 = vmatprep.subr.mxu0 0.0
    %1643 = vmatpush1.msra.mxu0 0.0
    %1644 = vmatprep.subr.mxu0 0.0
    %1645 = vmatpush1.msra.mxu0 0.0
    %1646 = vmatprep.subr.mxu0 0.0
    %1647 = vmatpush1.msra.mxu0 0.0
    %1648 = vmatprep.subr.mxu0 0.0
    %1649 = vmatpush1.msra.mxu0 0.0
    %1650 = vmatprep.subr.mxu0 0.0
    %1651 = vmatpush1.msra.mxu0 0.0
    %1652 = vmatprep.subr.mxu0 0.0
    %1653 = vmatpush1.msra.mxu0 0.0
    %1654 = vmatprep.subr.mxu0 0.0
    %1655 = vmatpush1.msra.mxu0 0.0
    %1656 = vmatprep.subr.mxu0 0.0
    %1657 = vmatpush1.msra.mxu0 0.0
    %1658 = vmatprep.subr.mxu0 0.0
    %1659 = vmatpush1.msra.mxu0 0.0
    %1660 = vmatprep.subr.mxu0 0.0
    %1661 = vmatpush1.msra.mxu0 0.0
    %1662 = vmatprep.subr.mxu0 %v1616
    %1663 = vmatpush1.msra.mxu0 %v1615
    %1664 = vmatprep.subr.mxu0 %v1614
    %1665 = vmatpush1.msra.mxu0 %v1613
    %1666 = vmatprep.subr.mxu0 %v1612
    %1667 = vmatpush1.msra.mxu0 %v1611
    %1668 = vmatprep.subr.mxu0 %v1610
    %1669 = vmatpush1.msra.mxu0 %v1609
    %1670 = vmatprep.subr.mxu0 0.0
    %1671 = vmatpush2.msra.mxu0 0.0
    %1672 = vmatprep.subr.mxu0 0.0
    %1673 = vmatpush2.msra.mxu0 0.0
    %1674 = vmatprep.subr.mxu0 0.0
    %1675 = vmatpush2.msra.mxu0 0.0
    %1676 = vmatprep.subr.mxu0 0.0
    %1677 = vmatpush2.msra.mxu0 0.0
    %1678 = vmatprep.subr.mxu0 0.0
    %1679 = vmatpush2.msra.mxu0 0.0
    %1680 = vmatprep.subr.mxu0 0.0
    %1681 = vmatpush2.msra.mxu0 0.0
    %1682 = vmatprep.subr.mxu0 0.0
    %1683 = vmatpush2.msra.mxu0 0.0
    %1684 = vmatprep.subr.mxu0 0.0
    %1685 = vmatpush2.msra.mxu0 0.0
    %1686 = vmatprep.subr.mxu0 0.0
    %1687 = vmatpush2.msra.mxu0 0.0
    %1688 = vmatprep.subr.mxu0 0.0
    %1689 = vmatpush2.msra.mxu0 0.0
    %1690 = vmatprep.subr.mxu0 0.0
    %1691 = vmatpush2.msra.mxu0 0.0
    %1692 = vmatprep.subr.mxu0 0.0
    %1693 = vmatpush2.msra.mxu0 0.0
    %1694 = vmatprep.subr.mxu0 0.0
    %1695 = vmatpush2.msra.mxu0 0.0
    %1696 = vmatprep.subr.mxu0 0.0
    %1697 = vmatpush2.msra.mxu0 0.0
    %1698 = vmatprep.subr.mxu0 0.0
    %1699 = vmatpush2.msra.mxu0 0.0
    %1700 = vmatprep.subr.mxu0 0.0
    %1701 = vmatpush2.msra.mxu0 0.0
    %1702 = vmatprep.mubr.f32.mxu0 0.0
    %1703 = vmatmul.mubr.f32.gmra.mxu0 %v1630
    %v1704 = vpop.f32.mrf.mxu0
    %v1705 = vadd.f32 0.0, %v1704
    %v1706 = vpop.f32.mrf.mxu0
    %1707 = vmatprep.mubr.f32.mxu0 0.0
    %1708 = vmatmul.mubr.f32.gmra.mxu0 %v1632
    %v1709 = vpop.f32.mrf.mxu0
    %v1710 = vadd.f32 0.0, %v1709
    %v1711 = vpop.f32.mrf.mxu0
    %v1712 = vadd.f32 0.0, %v1711
    %1713 = vmatprep.mubr.f32.mxu0 0.0
    %1714 = vmatmul.mubr.f32.gmra.mxu0 %v1634
    %v1715 = vpop.f32.mrf.mxu0
    %v1716 = vadd.f32 0.0, %v1715
    %v1717 = vpop.f32.mrf.mxu0
    %v1718 = vadd.f32 0.0, %v1717
    %1719 = vmatprep.mubr.f32.mxu0 0.0
    %1720 = vmatmul.mubr.f32.gmra.mxu0 %v1636
    %v1721 = vpop.f32.mrf.mxu0
    %v1722 = vadd.f32 0.0, %v1721
    %v1723 = vpop.f32.mrf.mxu0
    %v1724 = vadd.f32 0.0, %v1723
    %1725 = vdwg.mxu0
    %1727 = vrot.lane.b32.xlu0 %v1712, 64
    %v1728 = vpop.permute.xlu0 %1727
    %v1730 = vadd.f32 %v1705, %v1728
    %1733 = vrot.lane.b32.xlu0 %v1710, 64
    %v1734 = vpop.permute.xlu0 %1733
    %1735 = vrot.lane.b32.xlu0 %v1716, 64
    %v1736 = vpop.permute.xlu0 %1735
    %v1739 = vadd.f32 %v1705, %v1734
    %v1740 = vadd.f32 %v1710, %v1736
    %v1741 = vadd.f32 %v1739, %v1718
    %v1742 = vadd.f32 %v1740, %v1724
    %1744 = vrot.lane.b32.xlu0 %v1722, 64
    %v1745 = vpop.permute.xlu0 %1744
    %v1747 = vadd.f32 %v1716, %v1745
    %1750 = vrot.lane.b32.xlu0 %v1741, 64
    %v1751 = vpop.permute.xlu0 %1750
    %1752 = vrot.lane.b32.xlu0 %v1742, 64
    %v1753 = vpop.permute.xlu0 %1752
    %1757 = vrot.lane.b32.xlu0 %v1747, 64
    %v1758 = vpop.permute.xlu0 %1757
    %v1761 = vlaneseq
    %v1762 = vshrl.u32 %v1761, 7
    %v1763 = vsub.s32 0, %v1762
    %v1764 = vrot.slane %v1617, %v1763
    %1765 = vrot.lane.b32.xlu0 %v1764, 64
    %v1766 = vpop.permute.xlu0 %1765
    %v1768 = vadd.f32 %v1730, %v1766
    %v1769 = vadd.f32 %v1751, %v1766
    %v1770 = vadd.f32 %v1753, %v1766
    %v1771 = vadd.f32 %v1758, %v1766
    %v1772 = vmax.f32 %v1768, 0.0
    %v1773 = vmax.f32 %v1769, 0.0
    %v1774 = vmax.f32 %v1770, 0.0
    %v1775 = vmax.f32 %v1771, 0.0
    %v1776 = vld [vmem:[#allocation24] sm:$0xff]
    %v1777 = vld [vmem:[#allocation24 + $0x8] sm:$0xff]
    %v1778 = vld [vmem:[#allocation24 + $0x10] sm:$0xff]
    %v1779 = vld [vmem:[#allocation24 + $0x18] sm:$0xff]
    %v1780 = vld [vmem:[#allocation24 + $0x20] sm:$0xff]
    %v1781 = vld [vmem:[#allocation24 + $0x28] sm:$0xff]
    %v1782 = vld [vmem:[#allocation24 + $0x30] sm:$0xff]
    %v1783 = vld [vmem:[#allocation24 + $0x38] sm:$0xff]
    %v1784 = vld [vmem:[#allocation24 + $0x40] sm:$0xff]
    %v1785 = vld [vmem:[#allocation24 + $0x48] sm:$0xff]
    %v1786 = vld [vmem:[#allocation24 + $0x50] sm:$0xff]
    %v1787 = vld [vmem:[#allocation24 + $0x58] sm:$0xff]
    %v1788 = vld [vmem:[#allocation24 + $0x60] sm:$0xff]
    %v1789 = vld [vmem:[#allocation24 + $0x68] sm:$0xff]
    %v1790 = vld [vmem:[#allocation24 + $0x70] sm:$0xff]
    %v1791 = vld [vmem:[#allocation24 + $0x78] sm:$0xff]
    %v1792 = vld [vmem:[#allocation26] sm:$0x1]
    %1797 = vrot.lane.b32.xlu0 %v1772, 64
    %v1798 = vpop.permute.xlu0 %1797
    %1799 = vrot.lane.b32.xlu0 %v1773, 64
    %v1800 = vpop.permute.xlu0 %1799
    %1801 = vrot.lane.b32.xlu0 %v1774, 64
    %v1802 = vpop.permute.xlu0 %1801
    %1803 = vrot.lane.b32.xlu0 %v1775, 64
    %v1804 = vpop.permute.xlu0 %1803
    %vm1805 = vcmask 523264
    %v1806 = vsel %vm1805, %v1798, 0
    %v1808 = vsel %vm1805, %v1800, 0
    %v1810 = vsel %vm1805, %v1802, 0
    %v1812 = vsel %vm1805, %v1804, 0
    %1814 = vmatprep.subr.mxu0 0.0
    %1815 = vmatpush1.msra.mxu0 0.0
    %1816 = vmatprep.subr.mxu0 0.0
    %1817 = vmatpush1.msra.mxu0 0.0
    %1818 = vmatprep.subr.mxu0 0.0
    %1819 = vmatpush1.msra.mxu0 0.0
    %1820 = vmatprep.subr.mxu0 0.0
    %1821 = vmatpush1.msra.mxu0 0.0
    %1822 = vmatprep.subr.mxu0 0.0
    %1823 = vmatpush1.msra.mxu0 0.0
    %1824 = vmatprep.subr.mxu0 0.0
    %1825 = vmatpush1.msra.mxu0 0.0
    %1826 = vmatprep.subr.mxu0 0.0
    %1827 = vmatpush1.msra.mxu0 0.0
    %1828 = vmatprep.subr.mxu0 0.0
    %1829 = vmatpush1.msra.mxu0 0.0
    %1830 = vmatprep.subr.mxu0 %v1791
    %1831 = vmatpush1.msra.mxu0 %v1790
    %1832 = vmatprep.subr.mxu0 %v1789
    %1833 = vmatpush1.msra.mxu0 %v1788
    %1834 = vmatprep.subr.mxu0 %v1787
    %1835 = vmatpush1.msra.mxu0 %v1786
    %1836 = vmatprep.subr.mxu0 %v1785
    %1837 = vmatpush1.msra.mxu0 %v1784
    %1838 = vmatprep.subr.mxu0 %v1783
    %1839 = vmatpush1.msra.mxu0 %v1782
    %1840 = vmatprep.subr.mxu0 %v1781
    %1841 = vmatpush1.msra.mxu0 %v1780
    %1842 = vmatprep.subr.mxu0 %v1779
    %1843 = vmatpush1.msra.mxu0 %v1778
    %1844 = vmatprep.subr.mxu0 %v1777
    %1845 = vmatpush1.msra.mxu0 %v1776
    %1846 = vmatprep.subr.mxu0 0.0
    %1847 = vmatpush2.msra.mxu0 0.0
    %1848 = vmatprep.subr.mxu0 0.0
    %1849 = vmatpush2.msra.mxu0 0.0
    %1850 = vmatprep.subr.mxu0 0.0
    %1851 = vmatpush2.msra.mxu0 0.0
    %1852 = vmatprep.subr.mxu0 0.0
    %1853 = vmatpush2.msra.mxu0 0.0
    %1854 = vmatprep.subr.mxu0 0.0
    %1855 = vmatpush2.msra.mxu0 0.0
    %1856 = vmatprep.subr.mxu0 0.0
    %1857 = vmatpush2.msra.mxu0 0.0
    %1858 = vmatprep.subr.mxu0 0.0
    %1859 = vmatpush2.msra.mxu0 0.0
    %1860 = vmatprep.subr.mxu0 0.0
    %1861 = vmatpush2.msra.mxu0 0.0
    %1862 = vmatprep.subr.mxu0 0.0
    %1863 = vmatpush2.msra.mxu0 0.0
    %1864 = vmatprep.subr.mxu0 0.0
    %1865 = vmatpush2.msra.mxu0 0.0
    %1866 = vmatprep.subr.mxu0 0.0
    %1867 = vmatpush2.msra.mxu0 0.0
    %1868 = vmatprep.subr.mxu0 0.0
    %1869 = vmatpush2.msra.mxu0 0.0
    %1870 = vmatprep.subr.mxu0 0.0
    %1871 = vmatpush2.msra.mxu0 0.0
    %1872 = vmatprep.subr.mxu0 0.0
    %1873 = vmatpush2.msra.mxu0 0.0
    %1874 = vmatprep.subr.mxu0 0.0
    %1875 = vmatpush2.msra.mxu0 0.0
    %1876 = vmatprep.subr.mxu0 0.0
    %1877 = vmatpush2.msra.mxu0 0.0
    %1878 = vmatprep.mubr.f32.mxu0 0.0
    %1879 = vmatmul.mubr.f32.gmra.mxu0 %v1806
    %v1880 = vpop.f32.mrf.mxu0
    %v1881 = vadd.f32 0.0, %v1880
    %v1882 = vpop.f32.mrf.mxu0
    %1883 = vmatprep.mubr.f32.mxu0 0.0
    %1884 = vmatmul.mubr.f32.gmra.mxu0 %v1808
    %v1885 = vpop.f32.mrf.mxu0
    %v1886 = vadd.f32 0.0, %v1885
    %v1887 = vpop.f32.mrf.mxu0
    %v1888 = vadd.f32 0.0, %v1887
    %1889 = vmatprep.mubr.f32.mxu0 0.0
    %1890 = vmatmul.mubr.f32.gmra.mxu0 %v1810
    %v1891 = vpop.f32.mrf.mxu0
    %v1892 = vadd.f32 0.0, %v1891
    %v1893 = vpop.f32.mrf.mxu0
    %v1894 = vadd.f32 0.0, %v1893
    %1895 = vmatprep.mubr.f32.mxu0 0.0
    %1896 = vmatmul.mubr.f32.gmra.mxu0 %v1812
    %v1897 = vpop.f32.mrf.mxu0
    %v1898 = vadd.f32 0.0, %v1897
    %v1899 = vpop.f32.mrf.mxu0
    %v1900 = vadd.f32 0.0, %v1899
    %1901 = vdwg.mxu0
    %1903 = vrot.lane.b32.xlu0 %v1888, 64
    %v1904 = vpop.permute.xlu0 %1903
    %v1906 = vadd.f32 %v1881, %v1904
    %1909 = vrot.lane.b32.xlu0 %v1886, 64
    %v1910 = vpop.permute.xlu0 %1909
    %1911 = vrot.lane.b32.xlu0 %v1892, 64
    %v1912 = vpop.permute.xlu0 %1911
    %v1915 = vadd.f32 %v1881, %v1910
    %v1916 = vadd.f32 %v1886, %v1912
    %v1917 = vadd.f32 %v1915, %v1894
    %v1918 = vadd.f32 %v1916, %v1900
    %1920 = vrot.lane.b32.xlu0 %v1898, 64
    %v1921 = vpop.permute.xlu0 %1920
    %v1923 = vadd.f32 %v1892, %v1921
    %1926 = vrot.lane.b32.xlu0 %v1917, 64
    %v1927 = vpop.permute.xlu0 %1926
    %1928 = vrot.lane.b32.xlu0 %v1918, 64
    %v1929 = vpop.permute.xlu0 %1928
    %1933 = vrot.lane.b32.xlu0 %v1923, 64
    %v1934 = vpop.permute.xlu0 %1933
    %v1937 = vlaneseq
    %v1938 = vshrl.u32 %v1937, 7
    %v1939 = vsub.s32 0, %v1938
    %v1940 = vrot.slane %v1792, %v1939
    %1941 = vrot.lane.b32.xlu0 %v1940, 64
    %v1942 = vpop.permute.xlu0 %1941
    %v1944 = vadd.f32 %v1906, %v1942
    %v1945 = vadd.f32 %v1927, %v1942
    %v1946 = vadd.f32 %v1929, %v1942
    %v1947 = vadd.f32 %v1934, %v1942
    %v1948 = vmax.f32 %v1944, 0.0
    %v1949 = vmax.f32 %v1945, 0.0
    %v1950 = vmax.f32 %v1946, 0.0
    %v1951 = vmax.f32 %v1947, 0.0
    %v1952 = vld [vmem:[#allocation3] sm:$0x1]
    %v1953 = vld [vmem:[#allocation3 + $0x1] sm:$0x1]
    %v1954 = vld [vmem:[#allocation3 + $0x2] sm:$0x1]
    %v1955 = vld [vmem:[#allocation6 + $0x1] sm:$0x1]
    %v1956 = vld [vmem:[#allocation6 + $0x2] sm:$0x1]
    %v1957 = vld [vmem:[#allocation6 + $0x3] sm:$0x1]
    %v1958 = vsub.f32 1.0, %v1952
    %v1959 = vsub.f32 1.0, %v1953
    %v1960 = vsub.f32 1.0, %v1954
    %v1964 = vlaneseq
    %v1965 = vshrl.u32 %v1964, 7
    %v1966 = vsub.s32 0, %v1965
    %v1967 = vrot.slane %v1958, %v1966
    %v1968 = vlaneseq
    %v1969 = vshrl.u32 %v1968, 7
    %v1970 = vsub.s32 0, %v1969
    %v1971 = vrot.slane %v1959, %v1970
    %v1972 = vlaneseq
    %v1973 = vshrl.u32 %v1972, 7
    %v1974 = vsub.s32 0, %v1973
    %v1975 = vrot.slane %v1960, %v1974
    %1976 = vrot.lane.b32.xlu0 %v1967, 64
    %v1977 = vpop.permute.xlu0 %1976
    %1978 = vrot.lane.b32.xlu0 %v1971, 64
    %v1979 = vpop.permute.xlu0 %1978
    %1980 = vrot.lane.b32.xlu0 %v1975, 64
    %v1981 = vpop.permute.xlu0 %1980
    %v1985 = vmul.f32 %v1948, %v1977
    %v1986 = vmul.f32 %v1949, %v1979
    %v1987 = vmul.f32 %v1950, %v1981
    %v1991 = vlaneseq
    %v1992 = vshrl.u32 %v1991, 7
    %v1993 = vsub.s32 0, %v1992
    %v1994 = vrot.slane %v1952, %v1993
    %v1995 = vlaneseq
    %v1996 = vshrl.u32 %v1995, 7
    %v1997 = vsub.s32 0, %v1996
    %v1998 = vrot.slane %v1953, %v1997
    %v1999 = vlaneseq
    %v2000 = vshrl.u32 %v1999, 7
    %v2001 = vsub.s32 0, %v2000
    %v2002 = vrot.slane %v1954, %v2001
    %2003 = vrot.lane.b32.xlu0 %v1994, 64
    %v2004 = vpop.permute.xlu0 %2003
    %2005 = vrot.lane.b32.xlu0 %v1998, 64
    %v2006 = vpop.permute.xlu0 %2005
    %2007 = vrot.lane.b32.xlu0 %v2002, 64
    %v2008 = vpop.permute.xlu0 %2007
    %v2012 = vmul.f32 %v1949, %v2004
    %v2013 = vmul.f32 %v1950, %v2006
    %v2014 = vmul.f32 %v1951, %v2008
    %v2015 = vadd.f32 %v1985, %v2012
    %v2016 = vadd.f32 %v1986, %v2013
    %v2017 = vadd.f32 %v1987, %v2014
    %v2018 = vsub.f32 1.0, %v1955
    %v2019 = vsub.f32 1.0, %v1956
    %v2020 = vsub.f32 1.0, %v1957
    %v2024 = vlaneseq
    %v2025 = vshrl.u32 %v2024, 7
    %v2026 = vsub.s32 0, %v2025
    %v2027 = vrot.slane %v2018, %v2026
    %v2028 = vlaneseq
    %v2029 = vshrl.u32 %v2028, 7
    %v2030 = vsub.s32 0, %v2029
    %v2031 = vrot.slane %v2019, %v2030
    %v2032 = vlaneseq
    %v2033 = vshrl.u32 %v2032, 7
    %v2034 = vsub.s32 0, %v2033
    %v2035 = vrot.slane %v2020, %v2034
    %2036 = vrot.lane.b32.xlu0 %v2027, 64
    %v2037 = vpop.permute.xlu0 %2036
    %2038 = vrot.lane.b32.xlu0 %v2031, 64
    %v2039 = vpop.permute.xlu0 %2038
    %2040 = vrot.lane.b32.xlu0 %v2035, 64
    %v2041 = vpop.permute.xlu0 %2040
    %v2045 = vmul.f32 %v1948, %v2037
    %v2046 = vmul.f32 %v1949, %v2039
    %v2047 = vmul.f32 %v1950, %v2041
    %v2051 = vlaneseq
    %v2052 = vshrl.u32 %v2051, 7
    %v2053 = vsub.s32 0, %v2052
    %v2054 = vrot.slane %v1955, %v2053
    %v2055 = vlaneseq
    %v2056 = vshrl.u32 %v2055, 7
    %v2057 = vsub.s32 0, %v2056
    %v2058 = vrot.slane %v1956, %v2057
    %v2059 = vlaneseq
    %v2060 = vshrl.u32 %v2059, 7
    %v2061 = vsub.s32 0, %v2060
    %v2062 = vrot.slane %v1957, %v2061
    %2063 = vrot.lane.b32.xlu0 %v2054, 64
    %v2064 = vpop.permute.xlu0 %2063
    %2065 = vrot.lane.b32.xlu0 %v2058, 64
    %v2066 = vpop.permute.xlu0 %2065
    %2067 = vrot.lane.b32.xlu0 %v2062, 64
    %v2068 = vpop.permute.xlu0 %2067
    %v2072 = vmul.f32 %v1949, %v2064
    %v2073 = vmul.f32 %v1950, %v2066
    %v2074 = vmul.f32 %v1951, %v2068
    %v2075 = vadd.f32 %v2045, %v2072
    %v2076 = vadd.f32 %v2046, %v2073
    %v2077 = vadd.f32 %v2047, %v2074
    %v2078 = vld [vmem:[#allocation27] sm:$0xff]
    %v2079 = vld [vmem:[#allocation27 + $0x8] sm:$0xff]
    %v2080 = vld [vmem:[#allocation27 + $0x10] sm:$0xff]
    %v2081 = vld [vmem:[#allocation27 + $0x18] sm:$0xff]
    %v2082 = vld [vmem:[#allocation27 + $0x20] sm:$0xff]
    %v2083 = vld [vmem:[#allocation27 + $0x28] sm:$0xff]
    %v2084 = vld [vmem:[#allocation27 + $0x30] sm:$0xff]
    %v2085 = vld [vmem:[#allocation27 + $0x38] sm:$0xff]
    %v2086 = vld [vmem:[%s37] sm:$0xff]
    %v2087 = vld [vmem:[%s37 + $0x8] sm:$0xff]
    %v2088 = vld [vmem:[%s37 + $0x10] sm:$0xff]
    %v2089 = vld [vmem:[%s37 + $0x18] sm:$0xff]
    %v2090 = vld [vmem:[#allocation29] sm:$0x1]
    %2099 = vrot.lane.b32.xlu0 %v1597, 96
    %v2100 = vpop.permute.xlu0 %2099
    %2101 = vrot.lane.b32.xlu0 %v1598, 96
    %v2102 = vpop.permute.xlu0 %2101
    %2103 = vrot.lane.b32.xlu0 %v1599, 96
    %v2104 = vpop.permute.xlu0 %2103
    %2105 = vrot.lane.b32.xlu0 %v1600, 96
    %v2106 = vpop.permute.xlu0 %2105
    %2107 = vrot.lane.b32.xlu0 %v1601, 96
    %v2108 = vpop.permute.xlu0 %2107
    %2109 = vrot.lane.b32.xlu0 %v1602, 96
    %v2110 = vpop.permute.xlu0 %2109
    %2111 = vrot.lane.b32.xlu0 %v1603, 96
    %v2112 = vpop.permute.xlu0 %2111
    %2113 = vrot.lane.b32.xlu0 %v1604, 96
    %v2114 = vpop.permute.xlu0 %2113
    %v2115 = vsel %vm1372, %v2100, 0
    %v2117 = vsel %vm1372, %v2102, 0
    %v2119 = vsel %vm1372, %v2104, 0
    %v2121 = vsel %vm1372, %v2106, 0
    %v2123 = vsel %vm1372, %v2108, 0
    %v2125 = vsel %vm1372, %v2110, 0
    %v2127 = vsel %vm1372, %v2112, 0
    %v2129 = vsel %vm1372, %v2114, 0
    %2131 = vmatprep.subr.mxu0 0.0
    %2132 = vmatpush1.msra.mxu0 0.0
    %2133 = vmatprep.subr.mxu0 0.0
    %2134 = vmatpush1.msra.mxu0 0.0
    %2135 = vmatprep.subr.mxu0 0.0
    %2136 = vmatpush1.msra.mxu0 0.0
    %2137 = vmatprep.subr.mxu0 0.0
    %2138 = vmatpush1.msra.mxu0 0.0
    %2139 = vmatprep.subr.mxu0 0.0
    %2140 = vmatpush1.msra.mxu0 0.0
    %2141 = vmatprep.subr.mxu0 0.0
    %2142 = vmatpush1.msra.mxu0 0.0
    %2143 = vmatprep.subr.mxu0 0.0
    %2144 = vmatpush1.msra.mxu0 0.0
    %2145 = vmatprep.subr.mxu0 0.0
    %2146 = vmatpush1.msra.mxu0 0.0
    %2147 = vmatprep.subr.mxu0 0.0
    %2148 = vmatpush1.msra.mxu0 0.0
    %2149 = vmatprep.subr.mxu0 0.0
    %2150 = vmatpush1.msra.mxu0 0.0
    %2151 = vmatprep.subr.mxu0 0.0
    %2152 = vmatpush1.msra.mxu0 0.0
    %2153 = vmatprep.subr.mxu0 0.0
    %2154 = vmatpush1.msra.mxu0 0.0
    %2155 = vmatprep.subr.mxu0 0.0
    %2156 = vmatpush1.msra.mxu0 %v2089
    %2157 = vmatprep.subr.mxu0 0.0
    %2158 = vmatpush1.msra.mxu0 %v2088
    %2159 = vmatprep.subr.mxu0 0.0
    %2160 = vmatpush1.msra.mxu0 %v2087
    %2161 = vmatprep.subr.mxu0 0.0
    %2162 = vmatpush1.msra.mxu0 %v2086
    %2163 = vmatprep.subr.mxu0 0.0
    %2164 = vmatpush2.msra.mxu0 0.0
    %2165 = vmatprep.subr.mxu0 0.0
    %2166 = vmatpush2.msra.mxu0 0.0
    %2167 = vmatprep.subr.mxu0 0.0
    %2168 = vmatpush2.msra.mxu0 0.0
    %2169 = vmatprep.subr.mxu0 0.0
    %2170 = vmatpush2.msra.mxu0 0.0
    %2171 = vmatprep.subr.mxu0 0.0
    %2172 = vmatpush2.msra.mxu0 0.0
    %2173 = vmatprep.subr.mxu0 0.0
    %2174 = vmatpush2.msra.mxu0 0.0
    %2175 = vmatprep.subr.mxu0 0.0
    %2176 = vmatpush2.msra.mxu0 0.0
    %2177 = vmatprep.subr.mxu0 0.0
    %2178 = vmatpush2.msra.mxu0 0.0
    %2179 = vmatprep.subr.mxu0 0.0
    %2180 = vmatpush2.msra.mxu0 0.0
    %2181 = vmatprep.subr.mxu0 0.0
    %2182 = vmatpush2.msra.mxu0 0.0
    %2183 = vmatprep.subr.mxu0 0.0
    %2184 = vmatpush2.msra.mxu0 0.0
    %2185 = vmatprep.subr.mxu0 0.0
    %2186 = vmatpush2.msra.mxu0 0.0
    %2187 = vmatprep.subr.mxu0 0.0
    %2188 = vmatpush2.msra.mxu0 0.0
    %2189 = vmatprep.subr.mxu0 0.0
    %2190 = vmatpush2.msra.mxu0 0.0
    %2191 = vmatprep.subr.mxu0 0.0
    %2192 = vmatpush2.msra.mxu0 0.0
    %2193 = vmatprep.subr.mxu0 0.0
    %2194 = vmatpush2.msra.mxu0 0.0
    %2195 = vmatprep.mubr.f32.mxu0 0.0
    %2196 = vmatmul.mubr.f32.gmra.mxu0 %v2115
    %v2197 = vpop.f32.mrf.mxu0
    %v2198 = vadd.f32 0.0, %v2197
    %v2199 = vpop.f32.mrf.mxu0
    %2200 = vmatprep.mubr.f32.mxu0 0.0
    %2201 = vmatmul.mubr.f32.gmra.mxu0 %v2117
    %v2202 = vpop.f32.mrf.mxu0
    %v2203 = vadd.f32 0.0, %v2202
    %v2204 = vpop.f32.mrf.mxu0
    %2205 = vmatprep.mubr.f32.mxu0 0.0
    %2206 = vmatmul.mubr.f32.gmra.mxu0 %v2119
    %v2207 = vpop.f32.mrf.mxu0
    %v2208 = vadd.f32 0.0, %v2207
    %v2209 = vpop.f32.mrf.mxu0
    %2210 = vmatprep.mubr.f32.mxu0 0.0
    %2211 = vmatmul.mubr.f32.gmra.mxu0 %v2121
    %v2212 = vpop.f32.mrf.mxu0
    %v2213 = vadd.f32 0.0, %v2212
    %v2214 = vpop.f32.mrf.mxu0
    %2215 = vmatprep.mubr.f32.mxu0 0.0
    %2216 = vmatmul.mubr.f32.gmra.mxu0 %v2123
    %v2217 = vpop.f32.mrf.mxu0
    %v2218 = vadd.f32 0.0, %v2217
    %v2219 = vpop.f32.mrf.mxu0
    %2220 = vmatprep.mubr.f32.mxu0 0.0
    %2221 = vmatmul.mubr.f32.gmra.mxu0 %v2125
    %v2222 = vpop.f32.mrf.mxu0
    %v2223 = vadd.f32 0.0, %v2222
    %v2224 = vpop.f32.mrf.mxu0
    %2225 = vmatprep.mubr.f32.mxu0 0.0
    %2226 = vmatmul.mubr.f32.gmra.mxu0 %v2127
    %v2227 = vpop.f32.mrf.mxu0
    %v2228 = vadd.f32 0.0, %v2227
    %v2229 = vpop.f32.mrf.mxu0
    %2230 = vmatprep.mubr.f32.mxu0 0.0
    %2231 = vmatmul.mubr.f32.gmra.mxu0 %v2129
    %v2232 = vpop.f32.mrf.mxu0
    %v2233 = vadd.f32 0.0, %v2232
    %v2234 = vpop.f32.mrf.mxu0
    %2235 = vdwg.mxu0
    %2244 = vrot.lane.b32.xlu0 %v1948, 64
    %v2245 = vpop.permute.xlu0 %2244
    %2246 = vrot.lane.b32.xlu0 %v2015, 64
    %v2247 = vpop.permute.xlu0 %2246
    %2248 = vrot.lane.b32.xlu0 %v2075, 64
    %v2249 = vpop.permute.xlu0 %2248
    %2250 = vrot.lane.b32.xlu0 %v2016, 64
    %v2251 = vpop.permute.xlu0 %2250
    %2252 = vrot.lane.b32.xlu0 %v2076, 64
    %v2253 = vpop.permute.xlu0 %2252
    %2254 = vrot.lane.b32.xlu0 %v2017, 64
    %v2255 = vpop.permute.xlu0 %2254
    %2256 = vrot.lane.b32.xlu0 %v2077, 64
    %v2257 = vpop.permute.xlu0 %2256
    %2258 = vrot.lane.b32.xlu0 %v1951, 64
    %v2259 = vpop.permute.xlu0 %2258
    %v2260 = vsel %vm1805, %v2245, 0
    %v2262 = vsel %vm1805, %v2247, 0
    %v2264 = vsel %vm1805, %v2249, 0
    %v2266 = vsel %vm1805, %v2251, 0
    %v2268 = vsel %vm1805, %v2253, 0
    %v2270 = vsel %vm1805, %v2255, 0
    %v2272 = vsel %vm1805, %v2257, 0
    %v2274 = vsel %vm1805, %v2259, 0
    %2276 = vmatprep.subr.mxu0 0.0
    %2277 = vmatpush1.msra.mxu0 0.0
    %2278 = vmatprep.subr.mxu0 0.0
    %2279 = vmatpush1.msra.mxu0 0.0
    %2280 = vmatprep.subr.mxu0 0.0
    %2281 = vmatpush1.msra.mxu0 0.0
    %2282 = vmatprep.subr.mxu0 0.0
    %2283 = vmatpush1.msra.mxu0 0.0
    %2284 = vmatprep.subr.mxu0 0.0
    %2285 = vmatpush1.msra.mxu0 0.0
    %2286 = vmatprep.subr.mxu0 0.0
    %2287 = vmatpush1.msra.mxu0 0.0
    %2288 = vmatprep.subr.mxu0 0.0
    %2289 = vmatpush1.msra.mxu0 0.0
    %2290 = vmatprep.subr.mxu0 0.0
    %2291 = vmatpush1.msra.mxu0 0.0
    %2292 = vmatprep.subr.mxu0 0.0
    %2293 = vmatpush1.msra.mxu0 %v2085
    %2294 = vmatprep.subr.mxu0 0.0
    %2295 = vmatpush1.msra.mxu0 %v2084
    %2296 = vmatprep.subr.mxu0 0.0
    %2297 = vmatpush1.msra.mxu0 %v2083
    %2298 = vmatprep.subr.mxu0 0.0
    %2299 = vmatpush1.msra.mxu0 %v2082
    %2300 = vmatprep.subr.mxu0 0.0
    %2301 = vmatpush1.msra.mxu0 %v2081
    %2302 = vmatprep.subr.mxu0 0.0
    %2303 = vmatpush1.msra.mxu0 %v2080
    %2304 = vmatprep.subr.mxu0 0.0
    %2305 = vmatpush1.msra.mxu0 %v2079
    %2306 = vmatprep.subr.mxu0 0.0
    %2307 = vmatpush1.msra.mxu0 %v2078
    %2308 = vmatprep.subr.mxu0 0.0
    %2309 = vmatpush2.msra.mxu0 0.0
    %2310 = vmatprep.subr.mxu0 0.0
    %2311 = vmatpush2.msra.mxu0 0.0
    %2312 = vmatprep.subr.mxu0 0.0
    %2313 = vmatpush2.msra.mxu0 0.0
    %2314 = vmatprep.subr.mxu0 0.0
    %2315 = vmatpush2.msra.mxu0 0.0
    %2316 = vmatprep.subr.mxu0 0.0
    %2317 = vmatpush2.msra.mxu0 0.0
    %2318 = vmatprep.subr.mxu0 0.0
    %2319 = vmatpush2.msra.mxu0 0.0
    %2320 = vmatprep.subr.mxu0 0.0
    %2321 = vmatpush2.msra.mxu0 0.0
    %2322 = vmatprep.subr.mxu0 0.0
    %2323 = vmatpush2.msra.mxu0 0.0
    %2324 = vmatprep.subr.mxu0 0.0
    %2325 = vmatpush2.msra.mxu0 0.0
    %2326 = vmatprep.subr.mxu0 0.0
    %2327 = vmatpush2.msra.mxu0 0.0
    %2328 = vmatprep.subr.mxu0 0.0
    %2329 = vmatpush2.msra.mxu0 0.0
    %2330 = vmatprep.subr.mxu0 0.0
    %2331 = vmatpush2.msra.mxu0 0.0
    %2332 = vmatprep.subr.mxu0 0.0
    %2333 = vmatpush2.msra.mxu0 0.0
    %2334 = vmatprep.subr.mxu0 0.0
    %2335 = vmatpush2.msra.mxu0 0.0
    %2336 = vmatprep.subr.mxu0 0.0
    %2337 = vmatpush2.msra.mxu0 0.0
    %2338 = vmatprep.subr.mxu0 0.0
    %2339 = vmatpush2.msra.mxu0 0.0
    %2340 = vmatprep.mubr.f32.mxu0 0.0
    %2341 = vmatmul.mubr.f32.gmra.mxu0 %v2260
    %v2342 = vpop.f32.mrf.mxu0
    %v2343 = vadd.f32 %v2198, %v2342
    %v2344 = vpop.f32.mrf.mxu0
    %2345 = vmatprep.mubr.f32.mxu0 0.0
    %2346 = vmatmul.mubr.f32.gmra.mxu0 %v2262
    %v2347 = vpop.f32.mrf.mxu0
    %v2348 = vadd.f32 %v2203, %v2347
    %v2349 = vpop.f32.mrf.mxu0
    %2350 = vmatprep.mubr.f32.mxu0 0.0
    %2351 = vmatmul.mubr.f32.gmra.mxu0 %v2264
    %v2352 = vpop.f32.mrf.mxu0
    %v2353 = vadd.f32 %v2208, %v2352
    %v2354 = vpop.f32.mrf.mxu0
    %2355 = vmatprep.mubr.f32.mxu0 0.0
    %2356 = vmatmul.mubr.f32.gmra.mxu0 %v2266
    %v2357 = vpop.f32.mrf.mxu0
    %v2358 = vadd.f32 %v2213, %v2357
    %v2359 = vpop.f32.mrf.mxu0
    %2360 = vmatprep.mubr.f32.mxu0 0.0
    %2361 = vmatmul.mubr.f32.gmra.mxu0 %v2268
    %v2362 = vpop.f32.mrf.mxu0
    %v2363 = vadd.f32 %v2218, %v2362
    %v2364 = vpop.f32.mrf.mxu0
    %2365 = vmatprep.mubr.f32.mxu0 0.0
    %2366 = vmatmul.mubr.f32.gmra.mxu0 %v2270
    %v2367 = vpop.f32.mrf.mxu0
    %v2368 = vadd.f32 %v2223, %v2367
    %v2369 = vpop.f32.mrf.mxu0
    %2370 = vmatprep.mubr.f32.mxu0 0.0
    %2371 = vmatmul.mubr.f32.gmra.mxu0 %v2272
    %v2372 = vpop.f32.mrf.mxu0
    %v2373 = vadd.f32 %v2228, %v2372
    %v2374 = vpop.f32.mrf.mxu0
    %2375 = vmatprep.mubr.f32.mxu0 0.0
    %2376 = vmatmul.mubr.f32.gmra.mxu0 %v2274
    %v2377 = vpop.f32.mrf.mxu0
    %v2378 = vadd.f32 %v2233, %v2377
    %v2379 = vpop.f32.mrf.mxu0
    %2380 = vdwg.mxu0
    %2382 = vrot.lane.b32.xlu0 %v2348, 96
    %v2383 = vpop.permute.xlu0 %2382
    %v2385 = vadd.f32 %v2343, %v2383
    %2391 = vrot.lane.b32.xlu0 %v2353, 96
    %v2392 = vpop.permute.xlu0 %2391
    %2393 = vrot.lane.b32.xlu0 %v2358, 96
    %v2394 = vpop.permute.xlu0 %2393
    %2395 = vrot.lane.b32.xlu0 %v2363, 96
    %v2396 = vpop.permute.xlu0 %2395
    %2397 = vrot.lane.b32.xlu0 %v2368, 96
    %v2398 = vpop.permute.xlu0 %2397
    %2399 = vrot.lane.b32.xlu0 %v2373, 96
    %v2400 = vpop.permute.xlu0 %2399
    %v2406 = vadd.f32 %v2348, %v2392
    %v2407 = vadd.f32 %v2353, %v2394
    %v2408 = vadd.f32 %v2358, %v2396
    %v2409 = vadd.f32 %v2363, %v2398
    %v2410 = vadd.f32 %v2368, %v2400
    %2412 = vrot.lane.b32.xlu0 %v2353, 64
    %v2413 = vpop.permute.xlu0 %2412
    %2414 = vrot.lane.b32.xlu0 %v2358, 64
    %v2415 = vpop.permute.xlu0 %2414
    %2416 = vrot.lane.b32.xlu0 %v2363, 64
    %v2417 = vpop.permute.xlu0 %2416
    %2418 = vrot.lane.b32.xlu0 %v2368, 64
    %v2419 = vpop.permute.xlu0 %2418
    %2420 = vrot.lane.b32.xlu0 %v2373, 64
    %v2421 = vpop.permute.xlu0 %2420
    %2422 = vrot.lane.b32.xlu0 %v2378, 64
    %v2423 = vpop.permute.xlu0 %2422
    %v2430 = vadd.f32 %v2385, %v2413
    %v2431 = vadd.f32 %v2406, %v2415
    %v2432 = vadd.f32 %v2407, %v2417
    %v2433 = vadd.f32 %v2408, %v2419
    %v2434 = vadd.f32 %v2409, %v2421
    %v2435 = vadd.f32 %v2410, %v2423
    %2436 = vrot.lane.b32.xlu0 %v2378, 96
    %v2437 = vpop.permute.xlu0 %2436
    %v2439 = vadd.f32 %v2373, %v2437
    %2446 = vrot.lane.b32.xlu0 %v2430, 32
    %v2447 = vpop.permute.xlu0 %2446
    %2448 = vrot.lane.b32.xlu0 %v2431, 32
    %v2449 = vpop.permute.xlu0 %2448
    %2450 = vrot.lane.b32.xlu0 %v2432, 32
    %v2451 = vpop.permute.xlu0 %2450
    %2452 = vrot.lane.b32.xlu0 %v2433, 32
    %v2453 = vpop.permute.xlu0 %2452
    %2454 = vrot.lane.b32.xlu0 %v2434, 32
    %v2455 = vpop.permute.xlu0 %2454
    %2456 = vrot.lane.b32.xlu0 %v2435, 32
    %v2457 = vpop.permute.xlu0 %2456
    %2465 = vrot.lane.b32.xlu0 %v2439, 32
    %v2466 = vpop.permute.xlu0 %2465
    %v2469 = vlaneseq
    %v2470 = vshrl.u32 %v2469, 7
    %v2471 = vsub.s32 0, %v2470
    %v2472 = vrot.slane %v2090, %v2471
    %2473 = vrot.lane.b32.xlu0 %v2472, 32
    %v2474 = vpop.permute.xlu0 %2473
    %v2476 = vadd.f32 %v2385, %v2474
    %v2477 = vadd.f32 %v2447, %v2474
    %v2478 = vadd.f32 %v2449, %v2474
    %v2479 = vadd.f32 %v2451, %v2474
    %v2480 = vadd.f32 %v2453, %v2474
    %v2481 = vadd.f32 %v2455, %v2474
    %v2482 = vadd.f32 %v2457, %v2474
    %v2483 = vadd.f32 %v2466, %v2474
    %v2484 = vmax.f32 %v2476, 0.0
    %v2485 = vmax.f32 %v2477, 0.0
    %v2486 = vmax.f32 %v2478, 0.0
    %v2487 = vmax.f32 %v2479, 0.0
    %v2488 = vmax.f32 %v2480, 0.0
    %v2489 = vmax.f32 %v2481, 0.0
    %v2490 = vmax.f32 %v2482, 0.0
    %v2491 = vmax.f32 %v2483, 0.0
    %v2492 = vld [vmem:[#allocation30] sm:$0xff]
    %v2493 = vld [vmem:[#allocation30 + $0x8] sm:$0xff]
    %v2494 = vld [vmem:[#allocation30 + $0x10] sm:$0xff]
    %v2495 = vld [vmem:[#allocation30 + $0x18] sm:$0xff]
    %v2496 = vld [vmem:[#allocation32] sm:$0x1]
    %2505 = vrot.lane.b32.xlu0 %v2484, 96
    %v2506 = vpop.permute.xlu0 %2505
    %2507 = vrot.lane.b32.xlu0 %v2485, 96
    %v2508 = vpop.permute.xlu0 %2507
    %2509 = vrot.lane.b32.xlu0 %v2486, 96
    %v2510 = vpop.permute.xlu0 %2509
    %2511 = vrot.lane.b32.xlu0 %v2487, 96
    %v2512 = vpop.permute.xlu0 %2511
    %2513 = vrot.lane.b32.xlu0 %v2488, 96
    %v2514 = vpop.permute.xlu0 %2513
    %2515 = vrot.lane.b32.xlu0 %v2489, 96
    %v2516 = vpop.permute.xlu0 %2515
    %2517 = vrot.lane.b32.xlu0 %v2490, 96
    %v2518 = vpop.permute.xlu0 %2517
    %2519 = vrot.lane.b32.xlu0 %v2491, 96
    %v2520 = vpop.permute.xlu0 %2519
    %v2521 = vsel %vm1372, %v2506, 0
    %v2523 = vsel %vm1372, %v2508, 0
    %v2525 = vsel %vm1372, %v2510, 0
    %v2527 = vsel %vm1372, %v2512, 0
    %v2529 = vsel %vm1372, %v2514, 0
    %v2531 = vsel %vm1372, %v2516, 0
    %v2533 = vsel %vm1372, %v2518, 0
    %v2535 = vsel %vm1372, %v2520, 0
    %2537 = vmatprep.subr.mxu0 0.0
    %2538 = vmatpush1.msra.mxu0 0.0
    %2539 = vmatprep.subr.mxu0 0.0
    %2540 = vmatpush1.msra.mxu0 0.0
    %2541 = vmatprep.subr.mxu0 0.0
    %2542 = vmatpush1.msra.mxu0 0.0
    %2543 = vmatprep.subr.mxu0 0.0
    %2544 = vmatpush1.msra.mxu0 0.0
    %2545 = vmatprep.subr.mxu0 0.0
    %2546 = vmatpush1.msra.mxu0 0.0
    %2547 = vmatprep.subr.mxu0 0.0
    %2548 = vmatpush1.msra.mxu0 0.0
    %2549 = vmatprep.subr.mxu0 0.0
    %2550 = vmatpush1.msra.mxu0 0.0
    %2551 = vmatprep.subr.mxu0 0.0
    %2552 = vmatpush1.msra.mxu0 0.0
    %2553 = vmatprep.subr.mxu0 0.0
    %2554 = vmatpush1.msra.mxu0 0.0
    %2555 = vmatprep.subr.mxu0 0.0
    %2556 = vmatpush1.msra.mxu0 0.0
    %2557 = vmatprep.subr.mxu0 0.0
    %2558 = vmatpush1.msra.mxu0 0.0
    %2559 = vmatprep.subr.mxu0 0.0
    %2560 = vmatpush1.msra.mxu0 0.0
    %2561 = vmatprep.subr.mxu0 0.0
    %2562 = vmatpush1.msra.mxu0 %v2495
    %2563 = vmatprep.subr.mxu0 0.0
    %2564 = vmatpush1.msra.mxu0 %v2494
    %2565 = vmatprep.subr.mxu0 0.0
    %2566 = vmatpush1.msra.mxu0 %v2493
    %2567 = vmatprep.subr.mxu0 0.0
    %2568 = vmatpush1.msra.mxu0 %v2492
    %2569 = vmatprep.subr.mxu0 0.0
    %2570 = vmatpush2.msra.mxu0 0.0
    %2571 = vmatprep.subr.mxu0 0.0
    %2572 = vmatpush2.msra.mxu0 0.0
    %2573 = vmatprep.subr.mxu0 0.0
    %2574 = vmatpush2.msra.mxu0 0.0
    %2575 = vmatprep.subr.mxu0 0.0
    %2576 = vmatpush2.msra.mxu0 0.0
    %2577 = vmatprep.subr.mxu0 0.0
    %2578 = vmatpush2.msra.mxu0 0.0
    %2579 = vmatprep.subr.mxu0 0.0
    %2580 = vmatpush2.msra.mxu0 0.0
    %2581 = vmatprep.subr.mxu0 0.0
    %2582 = vmatpush2.msra.mxu0 0.0
    %2583 = vmatprep.subr.mxu0 0.0
    %2584 = vmatpush2.msra.mxu0 0.0
    %2585 = vmatprep.subr.mxu0 0.0
    %2586 = vmatpush2.msra.mxu0 0.0
    %2587 = vmatprep.subr.mxu0 0.0
    %2588 = vmatpush2.msra.mxu0 0.0
    %2589 = vmatprep.subr.mxu0 0.0
    %2590 = vmatpush2.msra.mxu0 0.0
    %2591 = vmatprep.subr.mxu0 0.0
    %2592 = vmatpush2.msra.mxu0 0.0
    %2593 = vmatprep.subr.mxu0 0.0
    %2594 = vmatpush2.msra.mxu0 0.0
    %2595 = vmatprep.subr.mxu0 0.0
    %2596 = vmatpush2.msra.mxu0 0.0
    %2597 = vmatprep.subr.mxu0 0.0
    %2598 = vmatpush2.msra.mxu0 0.0
    %2599 = vmatprep.subr.mxu0 0.0
    %2600 = vmatpush2.msra.mxu0 0.0
    %2601 = vmatprep.mubr.f32.mxu0 0.0
    %2602 = vmatmul.mubr.f32.gmra.mxu0 %v2521
    %v2603 = vpop.f32.mrf.mxu0
    %v2604 = vadd.f32 0.0, %v2603
    %v2605 = vpop.f32.mrf.mxu0
    %2606 = vmatprep.mubr.f32.mxu0 0.0
    %2607 = vmatmul.mubr.f32.gmra.mxu0 %v2523
    %v2608 = vpop.f32.mrf.mxu0
    %v2609 = vadd.f32 0.0, %v2608
    %v2610 = vpop.f32.mrf.mxu0
    %2611 = vmatprep.mubr.f32.mxu0 0.0
    %2612 = vmatmul.mubr.f32.gmra.mxu0 %v2525
    %v2613 = vpop.f32.mrf.mxu0
    %v2614 = vadd.f32 0.0, %v2613
    %v2615 = vpop.f32.mrf.mxu0
    %2616 = vmatprep.mubr.f32.mxu0 0.0
    %2617 = vmatmul.mubr.f32.gmra.mxu0 %v2527
    %v2618 = vpop.f32.mrf.mxu0
    %v2619 = vadd.f32 0.0, %v2618
    %v2620 = vpop.f32.mrf.mxu0
    %2621 = vmatprep.mubr.f32.mxu0 0.0
    %2622 = vmatmul.mubr.f32.gmra.mxu0 %v2529
    %v2623 = vpop.f32.mrf.mxu0
    %v2624 = vadd.f32 0.0, %v2623
    %v2625 = vpop.f32.mrf.mxu0
    %2626 = vmatprep.mubr.f32.mxu0 0.0
    %2627 = vmatmul.mubr.f32.gmra.mxu0 %v2531
    %v2628 = vpop.f32.mrf.mxu0
    %v2629 = vadd.f32 0.0, %v2628
    %v2630 = vpop.f32.mrf.mxu0
    %2631 = vmatprep.mubr.f32.mxu0 0.0
    %2632 = vmatmul.mubr.f32.gmra.mxu0 %v2533
    %v2633 = vpop.f32.mrf.mxu0
    %v2634 = vadd.f32 0.0, %v2633
    %v2635 = vpop.f32.mrf.mxu0
    %2636 = vmatprep.mubr.f32.mxu0 0.0
    %2637 = vmatmul.mubr.f32.gmra.mxu0 %v2535
    %v2638 = vpop.f32.mrf.mxu0
    %v2639 = vadd.f32 0.0, %v2638
    %v2640 = vpop.f32.mrf.mxu0
    %2641 = vdwg.mxu0
    %2643 = vrot.lane.b32.xlu0 %v2609, 96
    %v2644 = vpop.permute.xlu0 %2643
    %v2646 = vadd.f32 %v2604, %v2644
    %2652 = vrot.lane.b32.xlu0 %v2614, 96
    %v2653 = vpop.permute.xlu0 %2652
    %2654 = vrot.lane.b32.xlu0 %v2619, 96
    %v2655 = vpop.permute.xlu0 %2654
    %2656 = vrot.lane.b32.xlu0 %v2624, 96
    %v2657 = vpop.permute.xlu0 %2656
    %2658 = vrot.lane.b32.xlu0 %v2629, 96
    %v2659 = vpop.permute.xlu0 %2658
    %2660 = vrot.lane.b32.xlu0 %v2634, 96
    %v2661 = vpop.permute.xlu0 %2660
    %v2667 = vadd.f32 %v2609, %v2653
    %v2668 = vadd.f32 %v2614, %v2655
    %v2669 = vadd.f32 %v2619, %v2657
    %v2670 = vadd.f32 %v2624, %v2659
    %v2671 = vadd.f32 %v2629, %v2661
    %2673 = vrot.lane.b32.xlu0 %v2614, 64
    %v2674 = vpop.permute.xlu0 %2673
    %2675 = vrot.lane.b32.xlu0 %v2619, 64
    %v2676 = vpop.permute.xlu0 %2675
    %2677 = vrot.lane.b32.xlu0 %v2624, 64
    %v2678 = vpop.permute.xlu0 %2677
    %2679 = vrot.lane.b32.xlu0 %v2629, 64
    %v2680 = vpop.permute.xlu0 %2679
    %2681 = vrot.lane.b32.xlu0 %v2634, 64
    %v2682 = vpop.permute.xlu0 %2681
    %2683 = vrot.lane.b32.xlu0 %v2639, 64
    %v2684 = vpop.permute.xlu0 %2683
    %v2691 = vadd.f32 %v2646, %v2674
    %v2692 = vadd.f32 %v2667, %v2676
    %v2693 = vadd.f32 %v2668, %v2678
    %v2694 = vadd.f32 %v2669, %v2680
    %v2695 = vadd.f32 %v2670, %v2682
    %v2696 = vadd.f32 %v2671, %v2684
    %2697 = vrot.lane.b32.xlu0 %v2639, 96
    %v2698 = vpop.permute.xlu0 %2697
    %v2700 = vadd.f32 %v2634, %v2698
    %2707 = vrot.lane.b32.xlu0 %v2691, 32
    %v2708 = vpop.permute.xlu0 %2707
    %2709 = vrot.lane.b32.xlu0 %v2692, 32
    %v2710 = vpop.permute.xlu0 %2709
    %2711 = vrot.lane.b32.xlu0 %v2693, 32
    %v2712 = vpop.permute.xlu0 %2711
    %2713 = vrot.lane.b32.xlu0 %v2694, 32
    %v2714 = vpop.permute.xlu0 %2713
    %2715 = vrot.lane.b32.xlu0 %v2695, 32
    %v2716 = vpop.permute.xlu0 %2715
    %2717 = vrot.lane.b32.xlu0 %v2696, 32
    %v2718 = vpop.permute.xlu0 %2717
    %2726 = vrot.lane.b32.xlu0 %v2700, 32
    %v2727 = vpop.permute.xlu0 %2726
    %v2730 = vlaneseq
    %v2731 = vshrl.u32 %v2730, 7
    %v2732 = vsub.s32 0, %v2731
    %v2733 = vrot.slane %v2496, %v2732
    %2734 = vrot.lane.b32.xlu0 %v2733, 32
    %v2735 = vpop.permute.xlu0 %2734
    %v2737 = vadd.f32 %v2646, %v2735
    %v2738 = vadd.f32 %v2708, %v2735
    %v2739 = vadd.f32 %v2710, %v2735
    %v2740 = vadd.f32 %v2712, %v2735
    %v2741 = vadd.f32 %v2714, %v2735
    %v2742 = vadd.f32 %v2716, %v2735
    %v2743 = vadd.f32 %v2718, %v2735
    %v2744 = vadd.f32 %v2727, %v2735
    %v2745 = vmax.f32 %v2737, 0.0
    %v2746 = vmax.f32 %v2738, 0.0
    %v2747 = vmax.f32 %v2739, 0.0
    %v2748 = vmax.f32 %v2740, 0.0
    %v2749 = vmax.f32 %v2741, 0.0
    %v2750 = vmax.f32 %v2742, 0.0
    %v2751 = vmax.f32 %v2743, 0.0
    %v2752 = vmax.f32 %v2744, 0.0
    %v2753 = vld [vmem:[#allocation8] sm:$0x1]
    %v2754 = vld [vmem:[#allocation8 + $0x1] sm:$0x1]
    %v2755 = vld [vmem:[#allocation8 + $0x2] sm:$0x1]
    %v2756 = vld [vmem:[#allocation8 + $0x3] sm:$0x1]
    %v2757 = vld [vmem:[#allocation8 + $0x4] sm:$0x1]
    %v2758 = vld [vmem:[#allocation8 + $0x5] sm:$0x1]
    %v2759 = vld [vmem:[#allocation8 + $0x6] sm:$0x1]
    %v2760 = vld [vmem:[#allocation9 + $0x1] sm:$0x1]
    %v2761 = vld [vmem:[#allocation9 + $0x2] sm:$0x1]
    %v2762 = vld [vmem:[#allocation9 + $0x3] sm:$0x1]
    %v2763 = vld [vmem:[#allocation9 + $0x4] sm:$0x1]
    %v2764 = vld [vmem:[#allocation9 + $0x5] sm:$0x1]
    %v2765 = vld [vmem:[#allocation9 + $0x6] sm:$0x1]
    %v2766 = vld [vmem:[#allocation9 + $0x7] sm:$0x1]
    %v2767 = vsub.f32 1.0, %v2753
    %v2768 = vsub.f32 1.0, %v2754
    %v2769 = vsub.f32 1.0, %v2755
    %v2770 = vsub.f32 1.0, %v2756
    %v2771 = vsub.f32 1.0, %v2757
    %v2772 = vsub.f32 1.0, %v2758
    %v2773 = vsub.f32 1.0, %v2759
    %v2781 = vlaneseq
    %v2782 = vshrl.u32 %v2781, 7
    %v2783 = vsub.s32 0, %v2782
    %v2784 = vrot.slane %v2767, %v2783
    %v2785 = vlaneseq
    %v2786 = vshrl.u32 %v2785, 7
    %v2787 = vsub.s32 0, %v2786
    %v2788 = vrot.slane %v2768, %v2787
    %v2789 = vlaneseq
    %v2790 = vshrl.u32 %v2789, 7
    %v2791 = vsub.s32 0, %v2790
    %v2792 = vrot.slane %v2769, %v2791
    %v2793 = vlaneseq
    %v2794 = vshrl.u32 %v2793, 7
    %v2795 = vsub.s32 0, %v2794
    %v2796 = vrot.slane %v2770, %v2795
    %v2797 = vlaneseq
    %v2798 = vshrl.u32 %v2797, 7
    %v2799 = vsub.s32 0, %v2798
    %v2800 = vrot.slane %v2771, %v2799
    %v2801 = vlaneseq
    %v2802 = vshrl.u32 %v2801, 7
    %v2803 = vsub.s32 0, %v2802
    %v2804 = vrot.slane %v2772, %v2803
    %v2805 = vlaneseq
    %v2806 = vshrl.u32 %v2805, 7
    %v2807 = vsub.s32 0, %v2806
    %v2808 = vrot.slane %v2773, %v2807
    %2809 = vrot.lane.b32.xlu0 %v2784, 32
    %v2810 = vpop.permute.xlu0 %2809
    %2811 = vrot.lane.b32.xlu0 %v2788, 32
    %v2812 = vpop.permute.xlu0 %2811
    %2813 = vrot.lane.b32.xlu0 %v2792, 32
    %v2814 = vpop.permute.xlu0 %2813
    %2815 = vrot.lane.b32.xlu0 %v2796, 32
    %v2816 = vpop.permute.xlu0 %2815
    %2817 = vrot.lane.b32.xlu0 %v2800, 32
    %v2818 = vpop.permute.xlu0 %2817
    %2819 = vrot.lane.b32.xlu0 %v2804, 32
    %v2820 = vpop.permute.xlu0 %2819
    %2821 = vrot.lane.b32.xlu0 %v2808, 32
    %v2822 = vpop.permute.xlu0 %2821
    %v2830 = vmul.f32 %v2745, %v2810
    %v2831 = vmul.f32 %v2746, %v2812
    %v2832 = vmul.f32 %v2747, %v2814
    %v2833 = vmul.f32 %v2748, %v2816
    %v2834 = vmul.f32 %v2749, %v2818
    %v2835 = vmul.f32 %v2750, %v2820
    %v2836 = vmul.f32 %v2751, %v2822
    %v2844 = vlaneseq
    %v2845 = vshrl.u32 %v2844, 7
    %v2846 = vsub.s32 0, %v2845
    %v2847 = vrot.slane %v2753, %v2846
    %v2848 = vlaneseq
    %v2849 = vshrl.u32 %v2848, 7
    %v2850 = vsub.s32 0, %v2849
    %v2851 = vrot.slane %v2754, %v2850
    %v2852 = vlaneseq
    %v2853 = vshrl.u32 %v2852, 7
    %v2854 = vsub.s32 0, %v2853
    %v2855 = vrot.slane %v2755, %v2854
    %v2856 = vlaneseq
    %v2857 = vshrl.u32 %v2856, 7
    %v2858 = vsub.s32 0, %v2857
    %v2859 = vrot.slane %v2756, %v2858
    %v2860 = vlaneseq
    %v2861 = vshrl.u32 %v2860, 7
    %v2862 = vsub.s32 0, %v2861
    %v2863 = vrot.slane %v2757, %v2862
    %v2864 = vlaneseq
    %v2865 = vshrl.u32 %v2864, 7
    %v2866 = vsub.s32 0, %v2865
    %v2867 = vrot.slane %v2758, %v2866
    %v2868 = vlaneseq
    %v2869 = vshrl.u32 %v2868, 7
    %v2870 = vsub.s32 0, %v2869
    %v2871 = vrot.slane %v2759, %v2870
    %2872 = vrot.lane.b32.xlu0 %v2847, 32
    %v2873 = vpop.permute.xlu0 %2872
    %2874 = vrot.lane.b32.xlu0 %v2851, 32
    %v2875 = vpop.permute.xlu0 %2874
    %2876 = vrot.lane.b32.xlu0 %v2855, 32
    %v2877 = vpop.permute.xlu0 %2876
    %2878 = vrot.lane.b32.xlu0 %v2859, 32
    %v2879 = vpop.permute.xlu0 %2878
    %2880 = vrot.lane.b32.xlu0 %v2863, 32
    %v2881 = vpop.permute.xlu0 %2880
    %2882 = vrot.lane.b32.xlu0 %v2867, 32
    %v2883 = vpop.permute.xlu0 %2882
    %2884 = vrot.lane.b32.xlu0 %v2871, 32
    %v2885 = vpop.permute.xlu0 %2884
    %v2893 = vmul.f32 %v2746, %v2873
    %v2894 = vmul.f32 %v2747, %v2875
    %v2895 = vmul.f32 %v2748, %v2877
    %v2896 = vmul.f32 %v2749, %v2879
    %v2897 = vmul.f32 %v2750, %v2881
    %v2898 = vmul.f32 %v2751, %v2883
    %v2899 = vmul.f32 %v2752, %v2885
    %v2900 = vadd.f32 %v2830, %v2893
    %v2901 = vadd.f32 %v2831, %v2894
    %v2902 = vadd.f32 %v2832, %v2895
    %v2903 = vadd.f32 %v2833, %v2896
    %v2904 = vadd.f32 %v2834, %v2897
    %v2905 = vadd.f32 %v2835, %v2898
    %v2906 = vadd.f32 %v2836, %v2899
    %v2907 = vsub.f32 1.0, %v2760
    %v2908 = vsub.f32 1.0, %v2761
    %v2909 = vsub.f32 1.0, %v2762
    %v2910 = vsub.f32 1.0, %v2763
    %v2911 = vsub.f32 1.0, %v2764
    %v2912 = vsub.f32 1.0, %v2765
    %v2913 = vsub.f32 1.0, %v2766
    %v2921 = vlaneseq
    %v2922 = vshrl.u32 %v2921, 7
    %v2923 = vsub.s32 0, %v2922
    %v2924 = vrot.slane %v2907, %v2923
    %v2925 = vlaneseq
    %v2926 = vshrl.u32 %v2925, 7
    %v2927 = vsub.s32 0, %v2926
    %v2928 = vrot.slane %v2908, %v2927
    %v2929 = vlaneseq
    %v2930 = vshrl.u32 %v2929, 7
    %v2931 = vsub.s32 0, %v2930
    %v2932 = vrot.slane %v2909, %v2931
    %v2933 = vlaneseq
    %v2934 = vshrl.u32 %v2933, 7
    %v2935 = vsub.s32 0, %v2934
    %v2936 = vrot.slane %v2910, %v2935
    %v2937 = vlaneseq
    %v2938 = vshrl.u32 %v2937, 7
    %v2939 = vsub.s32 0, %v2938
    %v2940 = vrot.slane %v2911, %v2939
    %v2941 = vlaneseq
    %v2942 = vshrl.u32 %v2941, 7
    %v2943 = vsub.s32 0, %v2942
    %v2944 = vrot.slane %v2912, %v2943
    %v2945 = vlaneseq
    %v2946 = vshrl.u32 %v2945, 7
    %v2947 = vsub.s32 0, %v2946
    %v2948 = vrot.slane %v2913, %v2947
    %2949 = vrot.lane.b32.xlu0 %v2924, 32
    %v2950 = vpop.permute.xlu0 %2949
    %2951 = vrot.lane.b32.xlu0 %v2928, 32
    %v2952 = vpop.permute.xlu0 %2951
    %2953 = vrot.lane.b32.xlu0 %v2932, 32
    %v2954 = vpop.permute.xlu0 %2953
    %2955 = vrot.lane.b32.xlu0 %v2936, 32
    %v2956 = vpop.permute.xlu0 %2955
    %2957 = vrot.lane.b32.xlu0 %v2940, 32
    %v2958 = vpop.permute.xlu0 %2957
    %2959 = vrot.lane.b32.xlu0 %v2944, 32
    %v2960 = vpop.permute.xlu0 %2959
    %2961 = vrot.lane.b32.xlu0 %v2948, 32
    %v2962 = vpop.permute.xlu0 %2961
    %v2970 = vmul.f32 %v2745, %v2950
    %v2971 = vmul.f32 %v2746, %v2952
    %v2972 = vmul.f32 %v2747, %v2954
    %v2973 = vmul.f32 %v2748, %v2956
    %v2974 = vmul.f32 %v2749, %v2958
    %v2975 = vmul.f32 %v2750, %v2960
    %v2976 = vmul.f32 %v2751, %v2962
    %v2984 = vlaneseq
    %v2985 = vshrl.u32 %v2984, 7
    %v2986 = vsub.s32 0, %v2985
    %v2987 = vrot.slane %v2760, %v2986
    %v2988 = vlaneseq
    %v2989 = vshrl.u32 %v2988, 7
    %v2990 = vsub.s32 0, %v2989
    %v2991 = vrot.slane %v2761, %v2990
    %v2992 = vlaneseq
    %v2993 = vshrl.u32 %v2992, 7
    %v2994 = vsub.s32 0, %v2993
    %v2995 = vrot.slane %v2762, %v2994
    %v2996 = vlaneseq
    %v2997 = vshrl.u32 %v2996, 7
    %v2998 = vsub.s32 0, %v2997
    %v2999 = vrot.slane %v2763, %v2998
    %v3000 = vlaneseq
    %v3001 = vshrl.u32 %v3000, 7
    %v3002 = vsub.s32 0, %v3001
    %v3003 = vrot.slane %v2764, %v3002
    %v3004 = vlaneseq
    %v3005 = vshrl.u32 %v3004, 7
    %v3006 = vsub.s32 0, %v3005
    %v3007 = vrot.slane %v2765, %v3006
    %v3008 = vlaneseq
    %v3009 = vshrl.u32 %v3008, 7
    %v3010 = vsub.s32 0, %v3009
    %v3011 = vrot.slane %v2766, %v3010
    %3012 = vrot.lane.b32.xlu0 %v2987, 32
    %v3013 = vpop.permute.xlu0 %3012
    %3014 = vrot.lane.b32.xlu0 %v2991, 32
    %v3015 = vpop.permute.xlu0 %3014
    %3016 = vrot.lane.b32.xlu0 %v2995, 32
    %v3017 = vpop.permute.xlu0 %3016
    %3018 = vrot.lane.b32.xlu0 %v2999, 32
    %v3019 = vpop.permute.xlu0 %3018
    %3020 = vrot.lane.b32.xlu0 %v3003, 32
    %v3021 = vpop.permute.xlu0 %3020
    %3022 = vrot.lane.b32.xlu0 %v3007, 32
    %v3023 = vpop.permute.xlu0 %3022
    %3024 = vrot.lane.b32.xlu0 %v3011, 32
    %v3025 = vpop.permute.xlu0 %3024
    %v3033 = vmul.f32 %v2746, %v3013
    %v3034 = vmul.f32 %v2747, %v3015
    %v3035 = vmul.f32 %v2748, %v3017
    %v3036 = vmul.f32 %v2749, %v3019
    %v3037 = vmul.f32 %v2750, %v3021
    %v3038 = vmul.f32 %v2751, %v3023
    %v3039 = vmul.f32 %v2752, %v3025
    %v3040 = vadd.f32 %v2970, %v3033
    %v3041 = vadd.f32 %v2971, %v3034
    %v3042 = vadd.f32 %v2972, %v3035
    %v3043 = vadd.f32 %v2973, %v3036
    %v3044 = vadd.f32 %v2974, %v3037
    %v3045 = vadd.f32 %v2975, %v3038
    %v3046 = vadd.f32 %v2976, %v3039
    %v3047 = vld [vmem:[#allocation33] sm:$0xff]
    %v3048 = vld [vmem:[#allocation33 + $0x8] sm:$0xff]
    %v3049 = vld [vmem:[#allocation33 + $0x10] sm:$0xff]
    %v3050 = vld [vmem:[#allocation33 + $0x18] sm:$0xff]
    %v3051 = vld [vmem:[%s47] sm:$0xff]
    %v3052 = vld [vmem:[%s47 + $0x8] sm:$0xff]
    %v3053 = vld [vmem:[%s49] sm:$0x1]
    %3070 = vrot.lane.b32.xlu0 %v1060, 112
    %v3071 = vpop.permute.xlu0 %3070
    %3072 = vrot.lane.b32.xlu0 %v1061, 112
    %v3073 = vpop.permute.xlu0 %3072
    %3074 = vrot.lane.b32.xlu0 %v1062, 112
    %v3075 = vpop.permute.xlu0 %3074
    %3076 = vrot.lane.b32.xlu0 %v1063, 112
    %v3077 = vpop.permute.xlu0 %3076
    %3078 = vrot.lane.b32.xlu0 %v1064, 112
    %v3079 = vpop.permute.xlu0 %3078
    %3080 = vrot.lane.b32.xlu0 %v1065, 112
    %v3081 = vpop.permute.xlu0 %3080
    %3082 = vrot.lane.b32.xlu0 %v1066, 112
    %v3083 = vpop.permute.xlu0 %3082
    %3084 = vrot.lane.b32.xlu0 %v1067, 112
    %v3085 = vpop.permute.xlu0 %3084
    %3086 = vrot.lane.b32.xlu0 %v1068, 112
    %v3087 = vpop.permute.xlu0 %3086
    %3088 = vrot.lane.b32.xlu0 %v1069, 112
    %v3089 = vpop.permute.xlu0 %3088
    %3090 = vrot.lane.b32.xlu0 %v1070, 112
    %v3091 = vpop.permute.xlu0 %3090
    %3092 = vrot.lane.b32.xlu0 %v1071, 112
    %v3093 = vpop.permute.xlu0 %3092
    %3094 = vrot.lane.b32.xlu0 %v1072, 112
    %v3095 = vpop.permute.xlu0 %3094
    %3096 = vrot.lane.b32.xlu0 %v1073, 112
    %v3097 = vpop.permute.xlu0 %3096
    %3098 = vrot.lane.b32.xlu0 %v1074, 112
    %v3099 = vpop.permute.xlu0 %3098
    %3100 = vrot.lane.b32.xlu0 %v1075, 112
    %v3101 = vpop.permute.xlu0 %3100
    %v3102 = vsel %vm651, %v3071, 0
    %v3104 = vsel %vm651, %v3073, 0
    %v3106 = vsel %vm651, %v3075, 0
    %v3108 = vsel %vm651, %v3077, 0
    %v3110 = vsel %vm651, %v3079, 0
    %v3112 = vsel %vm651, %v3081, 0
    %v3114 = vsel %vm651, %v3083, 0
    %v3116 = vsel %vm651, %v3085, 0
    %v3118 = vsel %vm651, %v3087, 0
    %v3120 = vsel %vm651, %v3089, 0
    %v3122 = vsel %vm651, %v3091, 0
    %v3124 = vsel %vm651, %v3093, 0
    %v3126 = vsel %vm651, %v3095, 0
    %v3128 = vsel %vm651, %v3097, 0
    %v3130 = vsel %vm651, %v3099, 0
    %v3132 = vsel %vm651, %v3101, 0
    %3134 = vmatprep.subr.mxu0 0.0
    %3135 = vmatpush1.msra.mxu0 0.0
    %3136 = vmatprep.subr.mxu0 0.0
    %3137 = vmatpush1.msra.mxu0 0.0
    %3138 = vmatprep.subr.mxu0 0.0
    %3139 = vmatpush1.msra.mxu0 0.0
    %3140 = vmatprep.subr.mxu0 0.0
    %3141 = vmatpush1.msra.mxu0 0.0
    %3142 = vmatprep.subr.mxu0 0.0
    %3143 = vmatpush1.msra.mxu0 0.0
    %3144 = vmatprep.subr.mxu0 0.0
    %3145 = vmatpush1.msra.mxu0 0.0
    %3146 = vmatprep.subr.mxu0 0.0
    %3147 = vmatpush1.msra.mxu0 0.0
    %3148 = vmatprep.subr.mxu0 0.0
    %3149 = vmatpush1.msra.mxu0 0.0
    %3150 = vmatprep.subr.mxu0 0.0
    %3151 = vmatpush1.msra.mxu0 0.0
    %3152 = vmatprep.subr.mxu0 0.0
    %3153 = vmatpush1.msra.mxu0 0.0
    %3154 = vmatprep.subr.mxu0 0.0
    %3155 = vmatpush1.msra.mxu0 0.0
    %3156 = vmatprep.subr.mxu0 0.0
    %3157 = vmatpush1.msra.mxu0 0.0
    %3158 = vmatprep.subr.mxu0 0.0
    %3159 = vmatpush1.msra.mxu0 0.0
    %3160 = vmatprep.subr.mxu0 0.0
    %3161 = vmatpush1.msra.mxu0 0.0
    %3162 = vmatprep.subr.mxu0 0.0
    %3163 = vmatpush1.msra.mxu0 %v3052
    %3164 = vmatprep.subr.mxu0 0.0
    %3165 = vmatpush1.msra.mxu0 %v3051
    %3166 = vmatprep.subr.mxu0 0.0
    %3167 = vmatpush2.msra.mxu0 0.0
    %3168 = vmatprep.subr.mxu0 0.0
    %3169 = vmatpush2.msra.mxu0 0.0
    %3170 = vmatprep.subr.mxu0 0.0
    %3171 = vmatpush2.msra.mxu0 0.0
    %3172 = vmatprep.subr.mxu0 0.0
    %3173 = vmatpush2.msra.mxu0 0.0
    %3174 = vmatprep.subr.mxu0 0.0
    %3175 = vmatpush2.msra.mxu0 0.0
    %3176 = vmatprep.subr.mxu0 0.0
    %3177 = vmatpush2.msra.mxu0 0.0
    %3178 = vmatprep.subr.mxu0 0.0
    %3179 = vmatpush2.msra.mxu0 0.0
    %3180 = vmatprep.subr.mxu0 0.0
    %3181 = vmatpush2.msra.mxu0 0.0
    %3182 = vmatprep.subr.mxu0 0.0
    %3183 = vmatpush2.msra.mxu0 0.0
    %3184 = vmatprep.subr.mxu0 0.0
    %3185 = vmatpush2.msra.mxu0 0.0
    %3186 = vmatprep.subr.mxu0 0.0
    %3187 = vmatpush2.msra.mxu0 0.0
    %3188 = vmatprep.subr.mxu0 0.0
    %3189 = vmatpush2.msra.mxu0 0.0
    %3190 = vmatprep.subr.mxu0 0.0
    %3191 = vmatpush2.msra.mxu0 0.0
    %3192 = vmatprep.subr.mxu0 0.0
    %3193 = vmatpush2.msra.mxu0 0.0
    %3194 = vmatprep.subr.mxu0 0.0
    %3195 = vmatpush2.msra.mxu0 0.0
    %3196 = vmatprep.subr.mxu0 0.0
    %3197 = vmatpush2.msra.mxu0 0.0
    %3198 = vmatprep.mubr.f32.mxu0 0.0
    %3199 = vmatmul.mubr.f32.gmra.mxu0 %v3102
    %v3200 = vpop.f32.mrf.mxu0
    %v3201 = vadd.f32 0.0, %v3200
    %v3202 = vpop.f32.mrf.mxu0
    %3203 = vmatprep.mubr.f32.mxu0 0.0
    %3204 = vmatmul.mubr.f32.gmra.mxu0 %v3104
    %v3205 = vpop.f32.mrf.mxu0
    %v3206 = vadd.f32 0.0, %v3205
    %v3207 = vpop.f32.mrf.mxu0
    %3208 = vmatprep.mubr.f32.mxu0 0.0
    %3209 = vmatmul.mubr.f32.gmra.mxu0 %v3106
    %v3210 = vpop.f32.mrf.mxu0
    %v3211 = vadd.f32 0.0, %v3210
    %v3212 = vpop.f32.mrf.mxu0
    %3213 = vmatprep.mubr.f32.mxu0 0.0
    %3214 = vmatmul.mubr.f32.gmra.mxu0 %v3108
    %v3215 = vpop.f32.mrf.mxu0
    %v3216 = vadd.f32 0.0, %v3215
    %v3217 = vpop.f32.mrf.mxu0
    %3218 = vmatprep.mubr.f32.mxu0 0.0
    %3219 = vmatmul.mubr.f32.gmra.mxu0 %v3110
    %v3220 = vpop.f32.mrf.mxu0
    %v3221 = vadd.f32 0.0, %v3220
    %v3222 = vpop.f32.mrf.mxu0
    %3223 = vmatprep.mubr.f32.mxu0 0.0
    %3224 = vmatmul.mubr.f32.gmra.mxu0 %v3112
    %v3225 = vpop.f32.mrf.mxu0
    %v3226 = vadd.f32 0.0, %v3225
    %v3227 = vpop.f32.mrf.mxu0
    %3228 = vmatprep.mubr.f32.mxu0 0.0
    %3229 = vmatmul.mubr.f32.gmra.mxu0 %v3114
    %v3230 = vpop.f32.mrf.mxu0
    %v3231 = vadd.f32 0.0, %v3230
    %v3232 = vpop.f32.mrf.mxu0
    %3233 = vmatprep.mubr.f32.mxu0 0.0
    %3234 = vmatmul.mubr.f32.gmra.mxu0 %v3116
    %v3235 = vpop.f32.mrf.mxu0
    %v3236 = vadd.f32 0.0, %v3235
    %v3237 = vpop.f32.mrf.mxu0
    %3238 = vmatprep.mubr.f32.mxu0 0.0
    %3239 = vmatmul.mubr.f32.gmra.mxu0 %v3118
    %v3240 = vpop.f32.mrf.mxu0
    %v3241 = vadd.f32 0.0, %v3240
    %v3242 = vpop.f32.mrf.mxu0
    %3243 = vmatprep.mubr.f32.mxu0 0.0
    %3244 = vmatmul.mubr.f32.gmra.mxu0 %v3120
    %v3245 = vpop.f32.mrf.mxu0
    %v3246 = vadd.f32 0.0, %v3245
    %v3247 = vpop.f32.mrf.mxu0
    %3248 = vmatprep.mubr.f32.mxu0 0.0
    %3249 = vmatmul.mubr.f32.gmra.mxu0 %v3122
    %v3250 = vpop.f32.mrf.mxu0
    %v3251 = vadd.f32 0.0, %v3250
    %v3252 = vpop.f32.mrf.mxu0
    %3253 = vmatprep.mubr.f32.mxu0 0.0
    %3254 = vmatmul.mubr.f32.gmra.mxu0 %v3124
    %v3255 = vpop.f32.mrf.mxu0
    %v3256 = vadd.f32 0.0, %v3255
    %v3257 = vpop.f32.mrf.mxu0
    %3258 = vmatprep.mubr.f32.mxu0 0.0
    %3259 = vmatmul.mubr.f32.gmra.mxu0 %v3126
    %v3260 = vpop.f32.mrf.mxu0
    %v3261 = vadd.f32 0.0, %v3260
    %v3262 = vpop.f32.mrf.mxu0
    %3263 = vmatprep.mubr.f32.mxu0 0.0
    %3264 = vmatmul.mubr.f32.gmra.mxu0 %v3128
    %v3265 = vpop.f32.mrf.mxu0
    %v3266 = vadd.f32 0.0, %v3265
    %v3267 = vpop.f32.mrf.mxu0
    %3268 = vmatprep.mubr.f32.mxu0 0.0
    %3269 = vmatmul.mubr.f32.gmra.mxu0 %v3130
    %v3270 = vpop.f32.mrf.mxu0
    %v3271 = vadd.f32 0.0, %v3270
    %v3272 = vpop.f32.mrf.mxu0
    %3273 = vmatprep.mubr.f32.mxu0 0.0
    %3274 = vmatmul.mubr.f32.gmra.mxu0 %v3132
    %v3275 = vpop.f32.mrf.mxu0
    %v3276 = vadd.f32 0.0, %v3275
    %v3277 = vpop.f32.mrf.mxu0
    %3278 = vdwg.mxu0
    %3295 = vrot.lane.b32.xlu0 %v2745, 96
    %v3296 = vpop.permute.xlu0 %3295
    %3297 = vrot.lane.b32.xlu0 %v2900, 96
    %v3298 = vpop.permute.xlu0 %3297
    %3299 = vrot.lane.b32.xlu0 %v3040, 96
    %v3300 = vpop.permute.xlu0 %3299
    %3301 = vrot.lane.b32.xlu0 %v2901, 96
    %v3302 = vpop.permute.xlu0 %3301
    %3303 = vrot.lane.b32.xlu0 %v3041, 96
    %v3304 = vpop.permute.xlu0 %3303
    %3305 = vrot.lane.b32.xlu0 %v2902, 96
    %v3306 = vpop.permute.xlu0 %3305
    %3307 = vrot.lane.b32.xlu0 %v3042, 96
    %v3308 = vpop.permute.xlu0 %3307
    %3309 = vrot.lane.b32.xlu0 %v2903, 96
    %v3310 = vpop.permute.xlu0 %3309
    %3311 = vrot.lane.b32.xlu0 %v3043, 96
    %v3312 = vpop.permute.xlu0 %3311
    %3313 = vrot.lane.b32.xlu0 %v2904, 96
    %v3314 = vpop.permute.xlu0 %3313
    %3315 = vrot.lane.b32.xlu0 %v3044, 96
    %v3316 = vpop.permute.xlu0 %3315
    %3317 = vrot.lane.b32.xlu0 %v2905, 96
    %v3318 = vpop.permute.xlu0 %3317
    %3319 = vrot.lane.b32.xlu0 %v3045, 96
    %v3320 = vpop.permute.xlu0 %3319
    %3321 = vrot.lane.b32.xlu0 %v2906, 96
    %v3322 = vpop.permute.xlu0 %3321
    %3323 = vrot.lane.b32.xlu0 %v3046, 96
    %v3324 = vpop.permute.xlu0 %3323
    %3325 = vrot.lane.b32.xlu0 %v2752, 96
    %v3326 = vpop.permute.xlu0 %3325
    %v3327 = vsel %vm1372, %v3296, 0
    %v3329 = vsel %vm1372, %v3298, 0
    %v3331 = vsel %vm1372, %v3300, 0
    %v3333 = vsel %vm1372, %v3302, 0
    %v3335 = vsel %vm1372, %v3304, 0
    %v3337 = vsel %vm1372, %v3306, 0
    %v3339 = vsel %vm1372, %v3308, 0
    %v3341 = vsel %vm1372, %v3310, 0
    %v3343 = vsel %vm1372, %v3312, 0
    %v3345 = vsel %vm1372, %v3314, 0
    %v3347 = vsel %vm1372, %v3316, 0
    %v3349 = vsel %vm1372, %v3318, 0
    %v3351 = vsel %vm1372, %v3320, 0
    %v3353 = vsel %vm1372, %v3322, 0
    %v3355 = vsel %vm1372, %v3324, 0
    %v3357 = vsel %vm1372, %v3326, 0
    %3359 = vmatprep.subr.mxu0 0.0
    %3360 = vmatpush1.msra.mxu0 0.0
    %3361 = vmatprep.subr.mxu0 0.0
    %3362 = vmatpush1.msra.mxu0 0.0
    %3363 = vmatprep.subr.mxu0 0.0
    %3364 = vmatpush1.msra.mxu0 0.0
    %3365 = vmatprep.subr.mxu0 0.0
    %3366 = vmatpush1.msra.mxu0 0.0
    %3367 = vmatprep.subr.mxu0 0.0
    %3368 = vmatpush1.msra.mxu0 0.0
    %3369 = vmatprep.subr.mxu0 0.0
    %3370 = vmatpush1.msra.mxu0 0.0
    %3371 = vmatprep.subr.mxu0 0.0
    %3372 = vmatpush1.msra.mxu0 0.0
    %3373 = vmatprep.subr.mxu0 0.0
    %3374 = vmatpush1.msra.mxu0 0.0
    %3375 = vmatprep.subr.mxu0 0.0
    %3376 = vmatpush1.msra.mxu0 0.0
    %3377 = vmatprep.subr.mxu0 0.0
    %3378 = vmatpush1.msra.mxu0 0.0
    %3379 = vmatprep.subr.mxu0 0.0
    %3380 = vmatpush1.msra.mxu0 0.0
    %3381 = vmatprep.subr.mxu0 0.0
    %3382 = vmatpush1.msra.mxu0 0.0
    %3383 = vmatprep.subr.mxu0 0.0
    %3384 = vmatpush1.msra.mxu0 %v3050
    %3385 = vmatprep.subr.mxu0 0.0
    %3386 = vmatpush1.msra.mxu0 %v3049
    %3387 = vmatprep.subr.mxu0 0.0
    %3388 = vmatpush1.msra.mxu0 %v3048
    %3389 = vmatprep.subr.mxu0 0.0
    %3390 = vmatpush1.msra.mxu0 %v3047
    %3391 = vmatprep.subr.mxu0 0.0
    %3392 = vmatpush2.msra.mxu0 0.0
    %3393 = vmatprep.subr.mxu0 0.0
    %3394 = vmatpush2.msra.mxu0 0.0
    %3395 = vmatprep.subr.mxu0 0.0
    %3396 = vmatpush2.msra.mxu0 0.0
    %3397 = vmatprep.subr.mxu0 0.0
    %3398 = vmatpush2.msra.mxu0 0.0
    %3399 = vmatprep.subr.mxu0 0.0
    %3400 = vmatpush2.msra.mxu0 0.0
    %3401 = vmatprep.subr.mxu0 0.0
    %3402 = vmatpush2.msra.mxu0 0.0
    %3403 = vmatprep.subr.mxu0 0.0
    %3404 = vmatpush2.msra.mxu0 0.0
    %3405 = vmatprep.subr.mxu0 0.0
    %3406 = vmatpush2.msra.mxu0 0.0
    %3407 = vmatprep.subr.mxu0 0.0
    %3408 = vmatpush2.msra.mxu0 0.0
    %3409 = vmatprep.subr.mxu0 0.0
    %3410 = vmatpush2.msra.mxu0 0.0
    %3411 = vmatprep.subr.mxu0 0.0
    %3412 = vmatpush2.msra.mxu0 0.0
    %3413 = vmatprep.subr.mxu0 0.0
    %3414 = vmatpush2.msra.mxu0 0.0
    %3415 = vmatprep.subr.mxu0 0.0
    %3416 = vmatpush2.msra.mxu0 0.0
    %3417 = vmatprep.subr.mxu0 0.0
    %3418 = vmatpush2.msra.mxu0 0.0
    %3419 = vmatprep.subr.mxu0 0.0
    %3420 = vmatpush2.msra.mxu0 0.0
    %3421 = vmatprep.subr.mxu0 0.0
    %3422 = vmatpush2.msra.mxu0 0.0
    %3423 = vmatprep.mubr.f32.mxu0 0.0
    %3424 = vmatmul.mubr.f32.gmra.mxu0 %v3327
    %v3425 = vpop.f32.mrf.mxu0
    %v3426 = vadd.f32 %v3201, %v3425
    %v3427 = vpop.f32.mrf.mxu0
    %3428 = vmatprep.mubr.f32.mxu0 0.0
    %3429 = vmatmul.mubr.f32.gmra.mxu0 %v3329
    %v3430 = vpop.f32.mrf.mxu0
    %v3431 = vadd.f32 %v3206, %v3430
    %v3432 = vpop.f32.mrf.mxu0
    %3433 = vmatprep.mubr.f32.mxu0 0.0
    %3434 = vmatmul.mubr.f32.gmra.mxu0 %v3331
    %v3435 = vpop.f32.mrf.mxu0
    %v3436 = vadd.f32 %v3211, %v3435
    %v3437 = vpop.f32.mrf.mxu0
    %3438 = vmatprep.mubr.f32.mxu0 0.0
    %3439 = vmatmul.mubr.f32.gmra.mxu0 %v3333
    %v3440 = vpop.f32.mrf.mxu0
    %v3441 = vadd.f32 %v3216, %v3440
    %v3442 = vpop.f32.mrf.mxu0
    %3443 = vmatprep.mubr.f32.mxu0 0.0
    %3444 = vmatmul.mubr.f32.gmra.mxu0 %v3335
    %v3445 = vpop.f32.mrf.mxu0
    %v3446 = vadd.f32 %v3221, %v3445
    %v3447 = vpop.f32.mrf.mxu0
    %3448 = vmatprep.mubr.f32.mxu0 0.0
    %3449 = vmatmul.mubr.f32.gmra.mxu0 %v3337
    %v3450 = vpop.f32.mrf.mxu0
    %v3451 = vadd.f32 %v3226, %v3450
    %v3452 = vpop.f32.mrf.mxu0
    %3453 = vmatprep.mubr.f32.mxu0 0.0
    %3454 = vmatmul.mubr.f32.gmra.mxu0 %v3339
    %v3455 = vpop.f32.mrf.mxu0
    %v3456 = vadd.f32 %v3231, %v3455
    %v3457 = vpop.f32.mrf.mxu0
    %3458 = vmatprep.mubr.f32.mxu0 0.0
    %3459 = vmatmul.mubr.f32.gmra.mxu0 %v3341
    %v3460 = vpop.f32.mrf.mxu0
    %v3461 = vadd.f32 %v3236, %v3460
    %v3462 = vpop.f32.mrf.mxu0
    %3463 = vmatprep.mubr.f32.mxu0 0.0
    %3464 = vmatmul.mubr.f32.gmra.mxu0 %v3343
    %v3465 = vpop.f32.mrf.mxu0
    %v3466 = vadd.f32 %v3241, %v3465
    %v3467 = vpop.f32.mrf.mxu0
    %3468 = vmatprep.mubr.f32.mxu0 0.0
    %3469 = vmatmul.mubr.f32.gmra.mxu0 %v3345
    %v3470 = vpop.f32.mrf.mxu0
    %v3471 = vadd.f32 %v3246, %v3470
    %v3472 = vpop.f32.mrf.mxu0
    %3473 = vmatprep.mubr.f32.mxu0 0.0
    %3474 = vmatmul.mubr.f32.gmra.mxu0 %v3347
    %v3475 = vpop.f32.mrf.mxu0
    %v3476 = vadd.f32 %v3251, %v3475
    %v3477 = vpop.f32.mrf.mxu0
    %3478 = vmatprep.mubr.f32.mxu0 0.0
    %3479 = vmatmul.mubr.f32.gmra.mxu0 %v3349
    %v3480 = vpop.f32.mrf.mxu0
    %v3481 = vadd.f32 %v3256, %v3480
    %v3482 = vpop.f32.mrf.mxu0
    %3483 = vmatprep.mubr.f32.mxu0 0.0
    %3484 = vmatmul.mubr.f32.gmra.mxu0 %v3351
    %v3485 = vpop.f32.mrf.mxu0
    %v3486 = vadd.f32 %v3261, %v3485
    %v3487 = vpop.f32.mrf.mxu0
    %3488 = vmatprep.mubr.f32.mxu0 0.0
    %3489 = vmatmul.mubr.f32.gmra.mxu0 %v3353
    %v3490 = vpop.f32.mrf.mxu0
    %v3491 = vadd.f32 %v3266, %v3490
    %v3492 = vpop.f32.mrf.mxu0
    %3493 = vmatprep.mubr.f32.mxu0 0.0
    %3494 = vmatmul.mubr.f32.gmra.mxu0 %v3355
    %v3495 = vpop.f32.mrf.mxu0
    %v3496 = vadd.f32 %v3271, %v3495
    %v3497 = vpop.f32.mrf.mxu0
    %3498 = vmatprep.mubr.f32.mxu0 0.0
    %3499 = vmatmul.mubr.f32.gmra.mxu0 %v3357
    %v3500 = vpop.f32.mrf.mxu0
    %v3501 = vadd.f32 %v3276, %v3500
    %v3502 = vpop.f32.mrf.mxu0
    %3503 = vdwg.mxu0
    %3505 = vrot.lane.b32.xlu0 %v3431, 112
    %v3506 = vpop.permute.xlu0 %3505
    %v3508 = vadd.f32 %v3426, %v3506
    %3522 = vrot.lane.b32.xlu0 %v3436, 112
    %v3523 = vpop.permute.xlu0 %3522
    %3524 = vrot.lane.b32.xlu0 %v3441, 112
    %v3525 = vpop.permute.xlu0 %3524
    %3526 = vrot.lane.b32.xlu0 %v3446, 112
    %v3527 = vpop.permute.xlu0 %3526
    %3528 = vrot.lane.b32.xlu0 %v3451, 112
    %v3529 = vpop.permute.xlu0 %3528
    %3530 = vrot.lane.b32.xlu0 %v3456, 112
    %v3531 = vpop.permute.xlu0 %3530
    %3532 = vrot.lane.b32.xlu0 %v3461, 112
    %v3533 = vpop.permute.xlu0 %3532
    %3534 = vrot.lane.b32.xlu0 %v3466, 112
    %v3535 = vpop.permute.xlu0 %3534
    %3536 = vrot.lane.b32.xlu0 %v3471, 112
    %v3537 = vpop.permute.xlu0 %3536
    %3538 = vrot.lane.b32.xlu0 %v3476, 112
    %v3539 = vpop.permute.xlu0 %3538
    %3540 = vrot.lane.b32.xlu0 %v3481, 112
    %v3541 = vpop.permute.xlu0 %3540
    %3542 = vrot.lane.b32.xlu0 %v3486, 112
    %v3543 = vpop.permute.xlu0 %3542
    %3544 = vrot.lane.b32.xlu0 %v3491, 112
    %v3545 = vpop.permute.xlu0 %3544
    %3546 = vrot.lane.b32.xlu0 %v3496, 112
    %v3547 = vpop.permute.xlu0 %3546
    %v3561 = vadd.f32 %v3431, %v3523
    %v3562 = vadd.f32 %v3436, %v3525
    %v3563 = vadd.f32 %v3441, %v3527
    %v3564 = vadd.f32 %v3446, %v3529
    %v3565 = vadd.f32 %v3451, %v3531
    %v3566 = vadd.f32 %v3456, %v3533
    %v3567 = vadd.f32 %v3461, %v3535
    %v3568 = vadd.f32 %v3466, %v3537
    %v3569 = vadd.f32 %v3471, %v3539
    %v3570 = vadd.f32 %v3476, %v3541
    %v3571 = vadd.f32 %v3481, %v3543
    %v3572 = vadd.f32 %v3486, %v3545
    %v3573 = vadd.f32 %v3491, %v3547
    %3575 = vrot.lane.b32.xlu0 %v3436, 96
    %v3576 = vpop.permute.xlu0 %3575
    %3577 = vrot.lane.b32.xlu0 %v3441, 96
    %v3578 = vpop.permute.xlu0 %3577
    %3579 = vrot.lane.b32.xlu0 %v3446, 96
    %v3580 = vpop.permute.xlu0 %3579
    %3581 = vrot.lane.b32.xlu0 %v3451, 96
    %v3582 = vpop.permute.xlu0 %3581
    %3583 = vrot.lane.b32.xlu0 %v3456, 96
    %v3584 = vpop.permute.xlu0 %3583
    %3585 = vrot.lane.b32.xlu0 %v3461, 96
    %v3586 = vpop.permute.xlu0 %3585
    %3587 = vrot.lane.b32.xlu0 %v3466, 96
    %v3588 = vpop.permute.xlu0 %3587
    %3589 = vrot.lane.b32.xlu0 %v3471, 96
    %v3590 = vpop.permute.xlu0 %3589
    %3591 = vrot.lane.b32.xlu0 %v3476, 96
    %v3592 = vpop.permute.xlu0 %3591
    %3593 = vrot.lane.b32.xlu0 %v3481, 96
    %v3594 = vpop.permute.xlu0 %3593
    %3595 = vrot.lane.b32.xlu0 %v3486, 96
    %v3596 = vpop.permute.xlu0 %3595
    %3597 = vrot.lane.b32.xlu0 %v3491, 96
    %v3598 = vpop.permute.xlu0 %3597
    %3599 = vrot.lane.b32.xlu0 %v3496, 96
    %v3600 = vpop.permute.xlu0 %3599
    %3601 = vrot.lane.b32.xlu0 %v3501, 96
    %v3602 = vpop.permute.xlu0 %3601
    %v3617 = vadd.f32 %v3508, %v3576
    %v3618 = vadd.f32 %v3561, %v3578
    %v3619 = vadd.f32 %v3562, %v3580
    %v3620 = vadd.f32 %v3563, %v3582
    %v3621 = vadd.f32 %v3564, %v3584
    %v3622 = vadd.f32 %v3565, %v3586
    %v3623 = vadd.f32 %v3566, %v3588
    %v3624 = vadd.f32 %v3567, %v3590
    %v3625 = vadd.f32 %v3568, %v3592
    %v3626 = vadd.f32 %v3569, %v3594
    %v3627 = vadd.f32 %v3570, %v3596
    %v3628 = vadd.f32 %v3571, %v3598
    %v3629 = vadd.f32 %v3572, %v3600
    %v3630 = vadd.f32 %v3573, %v3602
    %3631 = vrot.lane.b32.xlu0 %v3501, 112
    %v3632 = vpop.permute.xlu0 %3631
    %v3634 = vadd.f32 %v3496, %v3632
    %3649 = vrot.lane.b32.xlu0 %v3617, 16
    %v3650 = vpop.permute.xlu0 %3649
    %3651 = vrot.lane.b32.xlu0 %v3618, 16
    %v3652 = vpop.permute.xlu0 %3651
    %3653 = vrot.lane.b32.xlu0 %v3619, 16
    %v3654 = vpop.permute.xlu0 %3653
    %3655 = vrot.lane.b32.xlu0 %v3620, 16
    %v3656 = vpop.permute.xlu0 %3655
    %3657 = vrot.lane.b32.xlu0 %v3621, 16
    %v3658 = vpop.permute.xlu0 %3657
    %3659 = vrot.lane.b32.xlu0 %v3622, 16
    %v3660 = vpop.permute.xlu0 %3659
    %3661 = vrot.lane.b32.xlu0 %v3623, 16
    %v3662 = vpop.permute.xlu0 %3661
    %3663 = vrot.lane.b32.xlu0 %v3624, 16
    %v3664 = vpop.permute.xlu0 %3663
    %3665 = vrot.lane.b32.xlu0 %v3625, 16
    %v3666 = vpop.permute.xlu0 %3665
    %3667 = vrot.lane.b32.xlu0 %v3626, 16
    %v3668 = vpop.permute.xlu0 %3667
    %3669 = vrot.lane.b32.xlu0 %v3627, 16
    %v3670 = vpop.permute.xlu0 %3669
    %3671 = vrot.lane.b32.xlu0 %v3628, 16
    %v3672 = vpop.permute.xlu0 %3671
    %3673 = vrot.lane.b32.xlu0 %v3629, 16
    %v3674 = vpop.permute.xlu0 %3673
    %3675 = vrot.lane.b32.xlu0 %v3630, 16
    %v3676 = vpop.permute.xlu0 %3675
    %3692 = vrot.lane.b32.xlu0 %v3634, 16
    %v3693 = vpop.permute.xlu0 %3692
    %v3696 = vlaneseq
    %v3697 = vshrl.u32 %v3696, 7
    %v3698 = vsub.s32 0, %v3697
    %v3699 = vrot.slane %v3053, %v3698
    %3700 = vrot.lane.b32.xlu0 %v3699, 16
    %v3701 = vpop.permute.xlu0 %3700
    %v3703 = vadd.f32 %v3508, %v3701
    %v3704 = vadd.f32 %v3650, %v3701
    %v3705 = vadd.f32 %v3652, %v3701
    %v3706 = vadd.f32 %v3654, %v3701
    %v3707 = vadd.f32 %v3656, %v3701
    %v3708 = vadd.f32 %v3658, %v3701
    %v3709 = vadd.f32 %v3660, %v3701
    %v3710 = vadd.f32 %v3662, %v3701
    %v3711 = vadd.f32 %v3664, %v3701
    %v3712 = vadd.f32 %v3666, %v3701
    %v3713 = vadd.f32 %v3668, %v3701
    %v3714 = vadd.f32 %v3670, %v3701
    %v3715 = vadd.f32 %v3672, %v3701
    %v3716 = vadd.f32 %v3674, %v3701
    %v3717 = vadd.f32 %v3676, %v3701
    %v3718 = vadd.f32 %v3693, %v3701
    %v3719 = vmax.f32 %v3703, 0.0
    %v3720 = vmax.f32 %v3704, 0.0
    %v3721 = vmax.f32 %v3705, 0.0
    %v3722 = vmax.f32 %v3706, 0.0
    %v3723 = vmax.f32 %v3707, 0.0
    %v3724 = vmax.f32 %v3708, 0.0
    %v3725 = vmax.f32 %v3709, 0.0
    %v3726 = vmax.f32 %v3710, 0.0
    %v3727 = vmax.f32 %v3711, 0.0
    %v3728 = vmax.f32 %v3712, 0.0
    %v3729 = vmax.f32 %v3713, 0.0
    %v3730 = vmax.f32 %v3714, 0.0
    %v3731 = vmax.f32 %v3715, 0.0
    %v3732 = vmax.f32 %v3716, 0.0
    %v3733 = vmax.f32 %v3717, 0.0
    %v3734 = vmax.f32 %v3718, 0.0
    %v3735 = vld [vmem:[#allocation35] sm:$0xff]
    %v3736 = vld [vmem:[#allocation35 + $0x8] sm:$0xff]
    %v3737 = vld [vmem:[%s53] sm:$0x1]
    %3754 = vrot.lane.b32.xlu0 %v3719, 112
    %v3755 = vpop.permute.xlu0 %3754
    %3756 = vrot.lane.b32.xlu0 %v3720, 112
    %v3757 = vpop.permute.xlu0 %3756
    %3758 = vrot.lane.b32.xlu0 %v3721, 112
    %v3759 = vpop.permute.xlu0 %3758
    %3760 = vrot.lane.b32.xlu0 %v3722, 112
    %v3761 = vpop.permute.xlu0 %3760
    %3762 = vrot.lane.b32.xlu0 %v3723, 112
    %v3763 = vpop.permute.xlu0 %3762
    %3764 = vrot.lane.b32.xlu0 %v3724, 112
    %v3765 = vpop.permute.xlu0 %3764
    %3766 = vrot.lane.b32.xlu0 %v3725, 112
    %v3767 = vpop.permute.xlu0 %3766
    %3768 = vrot.lane.b32.xlu0 %v3726, 112
    %v3769 = vpop.permute.xlu0 %3768
    %3770 = vrot.lane.b32.xlu0 %v3727, 112
    %v3771 = vpop.permute.xlu0 %3770
    %3772 = vrot.lane.b32.xlu0 %v3728, 112
    %v3773 = vpop.permute.xlu0 %3772
    %3774 = vrot.lane.b32.xlu0 %v3729, 112
    %v3775 = vpop.permute.xlu0 %3774
    %3776 = vrot.lane.b32.xlu0 %v3730, 112
    %v3777 = vpop.permute.xlu0 %3776
    %3778 = vrot.lane.b32.xlu0 %v3731, 112
    %v3779 = vpop.permute.xlu0 %3778
    %3780 = vrot.lane.b32.xlu0 %v3732, 112
    %v3781 = vpop.permute.xlu0 %3780
    %3782 = vrot.lane.b32.xlu0 %v3733, 112
    %v3783 = vpop.permute.xlu0 %3782
    %3784 = vrot.lane.b32.xlu0 %v3734, 112
    %v3785 = vpop.permute.xlu0 %3784
    %v3786 = vsel %vm651, %v3755, 0
    %v3788 = vsel %vm651, %v3757, 0
    %v3790 = vsel %vm651, %v3759, 0
    %v3792 = vsel %vm651, %v3761, 0
    %v3794 = vsel %vm651, %v3763, 0
    %v3796 = vsel %vm651, %v3765, 0
    %v3798 = vsel %vm651, %v3767, 0
    %v3800 = vsel %vm651, %v3769, 0
    %v3802 = vsel %vm651, %v3771, 0
    %v3804 = vsel %vm651, %v3773, 0
    %v3806 = vsel %vm651, %v3775, 0
    %v3808 = vsel %vm651, %v3777, 0
    %v3810 = vsel %vm651, %v3779, 0
    %v3812 = vsel %vm651, %v3781, 0
    %v3814 = vsel %vm651, %v3783, 0
    %v3816 = vsel %vm651, %v3785, 0
    %3818 = vmatprep.subr.mxu0 0.0
    %3819 = vmatpush1.msra.mxu0 0.0
    %3820 = vmatprep.subr.mxu0 0.0
    %3821 = vmatpush1.msra.mxu0 0.0
    %3822 = vmatprep.subr.mxu0 0.0
    %3823 = vmatpush1.msra.mxu0 0.0
    %3824 = vmatprep.subr.mxu0 0.0
    %3825 = vmatpush1.msra.mxu0 0.0
    %3826 = vmatprep.subr.mxu0 0.0
    %3827 = vmatpush1.msra.mxu0 0.0
    %3828 = vmatprep.subr.mxu0 0.0
    %3829 = vmatpush1.msra.mxu0 0.0
    %3830 = vmatprep.subr.mxu0 0.0
    %3831 = vmatpush1.msra.mxu0 0.0
    %3832 = vmatprep.subr.mxu0 0.0
    %3833 = vmatpush1.msra.mxu0 0.0
    %3834 = vmatprep.subr.mxu0 0.0
    %3835 = vmatpush1.msra.mxu0 0.0
    %3836 = vmatprep.subr.mxu0 0.0
    %3837 = vmatpush1.msra.mxu0 0.0
    %3838 = vmatprep.subr.mxu0 0.0
    %3839 = vmatpush1.msra.mxu0 0.0
    %3840 = vmatprep.subr.mxu0 0.0
    %3841 = vmatpush1.msra.mxu0 0.0
    %3842 = vmatprep.subr.mxu0 0.0
    %3843 = vmatpush1.msra.mxu0 0.0
    %3844 = vmatprep.subr.mxu0 0.0
    %3845 = vmatpush1.msra.mxu0 0.0
    %3846 = vmatprep.subr.mxu0 0.0
    %3847 = vmatpush1.msra.mxu0 %v3736
    %3848 = vmatprep.subr.mxu0 0.0
    %3849 = vmatpush1.msra.mxu0 %v3735
    %3850 = vmatprep.subr.mxu0 0.0
    %3851 = vmatpush2.msra.mxu0 0.0
    %3852 = vmatprep.subr.mxu0 0.0
    %3853 = vmatpush2.msra.mxu0 0.0
    %3854 = vmatprep.subr.mxu0 0.0
    %3855 = vmatpush2.msra.mxu0 0.0
    %3856 = vmatprep.subr.mxu0 0.0
    %3857 = vmatpush2.msra.mxu0 0.0
    %3858 = vmatprep.subr.mxu0 0.0
    %3859 = vmatpush2.msra.mxu0 0.0
    %3860 = vmatprep.subr.mxu0 0.0
    %3861 = vmatpush2.msra.mxu0 0.0
    %3862 = vmatprep.subr.mxu0 0.0
    %3863 = vmatpush2.msra.mxu0 0.0
    %3864 = vmatprep.subr.mxu0 0.0
    %3865 = vmatpush2.msra.mxu0 0.0
    %3866 = vmatprep.subr.mxu0 0.0
    %3867 = vmatpush2.msra.mxu0 0.0
    %3868 = vmatprep.subr.mxu0 0.0
    %3869 = vmatpush2.msra.mxu0 0.0
    %3870 = vmatprep.subr.mxu0 0.0
    %3871 = vmatpush2.msra.mxu0 0.0
    %3872 = vmatprep.subr.mxu0 0.0
    %3873 = vmatpush2.msra.mxu0 0.0
    %3874 = vmatprep.subr.mxu0 0.0
    %3875 = vmatpush2.msra.mxu0 0.0
    %3876 = vmatprep.subr.mxu0 0.0
    %3877 = vmatpush2.msra.mxu0 0.0
    %3878 = vmatprep.subr.mxu0 0.0
    %3879 = vmatpush2.msra.mxu0 0.0
    %3880 = vmatprep.subr.mxu0 0.0
    %3881 = vmatpush2.msra.mxu0 0.0
    %3882 = vmatprep.mubr.f32.mxu0 0.0
    %3883 = vmatmul.mubr.f32.gmra.mxu0 %v3786
    %v3884 = vpop.f32.mrf.mxu0
    %v3885 = vadd.f32 0.0, %v3884
    %v3886 = vpop.f32.mrf.mxu0
    %3887 = vmatprep.mubr.f32.mxu0 0.0
    %3888 = vmatmul.mubr.f32.gmra.mxu0 %v3788
    %v3889 = vpop.f32.mrf.mxu0
    %v3890 = vadd.f32 0.0, %v3889
    %v3891 = vpop.f32.mrf.mxu0
    %3892 = vmatprep.mubr.f32.mxu0 0.0
    %3893 = vmatmul.mubr.f32.gmra.mxu0 %v3790
    %v3894 = vpop.f32.mrf.mxu0
    %v3895 = vadd.f32 0.0, %v3894
    %v3896 = vpop.f32.mrf.mxu0
    %3897 = vmatprep.mubr.f32.mxu0 0.0
    %3898 = vmatmul.mubr.f32.gmra.mxu0 %v3792
    %v3899 = vpop.f32.mrf.mxu0
    %v3900 = vadd.f32 0.0, %v3899
    %v3901 = vpop.f32.mrf.mxu0
    %3902 = vmatprep.mubr.f32.mxu0 0.0
    %3903 = vmatmul.mubr.f32.gmra.mxu0 %v3794
    %v3904 = vpop.f32.mrf.mxu0
    %v3905 = vadd.f32 0.0, %v3904
    %v3906 = vpop.f32.mrf.mxu0
    %3907 = vmatprep.mubr.f32.mxu0 0.0
    %3908 = vmatmul.mubr.f32.gmra.mxu0 %v3796
    %v3909 = vpop.f32.mrf.mxu0
    %v3910 = vadd.f32 0.0, %v3909
    %v3911 = vpop.f32.mrf.mxu0
    %3912 = vmatprep.mubr.f32.mxu0 0.0
    %3913 = vmatmul.mubr.f32.gmra.mxu0 %v3798
    %v3914 = vpop.f32.mrf.mxu0
    %v3915 = vadd.f32 0.0, %v3914
    %v3916 = vpop.f32.mrf.mxu0
    %3917 = vmatprep.mubr.f32.mxu0 0.0
    %3918 = vmatmul.mubr.f32.gmra.mxu0 %v3800
    %v3919 = vpop.f32.mrf.mxu0
    %v3920 = vadd.f32 0.0, %v3919
    %v3921 = vpop.f32.mrf.mxu0
    %3922 = vmatprep.mubr.f32.mxu0 0.0
    %3923 = vmatmul.mubr.f32.gmra.mxu0 %v3802
    %v3924 = vpop.f32.mrf.mxu0
    %v3925 = vadd.f32 0.0, %v3924
    %v3926 = vpop.f32.mrf.mxu0
    %3927 = vmatprep.mubr.f32.mxu0 0.0
    %3928 = vmatmul.mubr.f32.gmra.mxu0 %v3804
    %v3929 = vpop.f32.mrf.mxu0
    %v3930 = vadd.f32 0.0, %v3929
    %v3931 = vpop.f32.mrf.mxu0
    %3932 = vmatprep.mubr.f32.mxu0 0.0
    %3933 = vmatmul.mubr.f32.gmra.mxu0 %v3806
    %v3934 = vpop.f32.mrf.mxu0
    %v3935 = vadd.f32 0.0, %v3934
    %v3936 = vpop.f32.mrf.mxu0
    %3937 = vmatprep.mubr.f32.mxu0 0.0
    %3938 = vmatmul.mubr.f32.gmra.mxu0 %v3808
    %v3939 = vpop.f32.mrf.mxu0
    %v3940 = vadd.f32 0.0, %v3939
    %v3941 = vpop.f32.mrf.mxu0
    %3942 = vmatprep.mubr.f32.mxu0 0.0
    %3943 = vmatmul.mubr.f32.gmra.mxu0 %v3810
    %v3944 = vpop.f32.mrf.mxu0
    %v3945 = vadd.f32 0.0, %v3944
    %v3946 = vpop.f32.mrf.mxu0
    %3947 = vmatprep.mubr.f32.mxu0 0.0
    %3948 = vmatmul.mubr.f32.gmra.mxu0 %v3812
    %v3949 = vpop.f32.mrf.mxu0
    %v3950 = vadd.f32 0.0, %v3949
    %v3951 = vpop.f32.mrf.mxu0
    %3952 = vmatprep.mubr.f32.mxu0 0.0
    %3953 = vmatmul.mubr.f32.gmra.mxu0 %v3814
    %v3954 = vpop.f32.mrf.mxu0
    %v3955 = vadd.f32 0.0, %v3954
    %v3956 = vpop.f32.mrf.mxu0
    %3957 = vmatprep.mubr.f32.mxu0 0.0
    %3958 = vmatmul.mubr.f32.gmra.mxu0 %v3816
    %v3959 = vpop.f32.mrf.mxu0
    %v3960 = vadd.f32 0.0, %v3959
    %v3961 = vpop.f32.mrf.mxu0
    %3962 = vdwg.mxu0
    %3964 = vrot.lane.b32.xlu0 %v3890, 112
    %v3965 = vpop.permute.xlu0 %3964
    %v3967 = vadd.f32 %v3885, %v3965
    %3981 = vrot.lane.b32.xlu0 %v3895, 112
    %v3982 = vpop.permute.xlu0 %3981
    %3983 = vrot.lane.b32.xlu0 %v3900, 112
    %v3984 = vpop.permute.xlu0 %3983
    %3985 = vrot.lane.b32.xlu0 %v3905, 112
    %v3986 = vpop.permute.xlu0 %3985
    %3987 = vrot.lane.b32.xlu0 %v3910, 112
    %v3988 = vpop.permute.xlu0 %3987
    %3989 = vrot.lane.b32.xlu0 %v3915, 112
    %v3990 = vpop.permute.xlu0 %3989
    %3991 = vrot.lane.b32.xlu0 %v3920, 112
    %v3992 = vpop.permute.xlu0 %3991
    %3993 = vrot.lane.b32.xlu0 %v3925, 112
    %v3994 = vpop.permute.xlu0 %3993
    %3995 = vrot.lane.b32.xlu0 %v3930, 112
    %v3996 = vpop.permute.xlu0 %3995
    %3997 = vrot.lane.b32.xlu0 %v3935, 112
    %v3998 = vpop.permute.xlu0 %3997
    %3999 = vrot.lane.b32.xlu0 %v3940, 112
    %v4000 = vpop.permute.xlu0 %3999
    %4001 = vrot.lane.b32.xlu0 %v3945, 112
    %v4002 = vpop.permute.xlu0 %4001
    %4003 = vrot.lane.b32.xlu0 %v3950, 112
    %v4004 = vpop.permute.xlu0 %4003
    %4005 = vrot.lane.b32.xlu0 %v3955, 112
    %v4006 = vpop.permute.xlu0 %4005
    %v4020 = vadd.f32 %v3890, %v3982
    %v4021 = vadd.f32 %v3895, %v3984
    %v4022 = vadd.f32 %v3900, %v3986
    %v4023 = vadd.f32 %v3905, %v3988
    %v4024 = vadd.f32 %v3910, %v3990
    %v4025 = vadd.f32 %v3915, %v3992
    %v4026 = vadd.f32 %v3920, %v3994
    %v4027 = vadd.f32 %v3925, %v3996
    %v4028 = vadd.f32 %v3930, %v3998
    %v4029 = vadd.f32 %v3935, %v4000
    %v4030 = vadd.f32 %v3940, %v4002
    %v4031 = vadd.f32 %v3945, %v4004
    %v4032 = vadd.f32 %v3950, %v4006
    %4034 = vrot.lane.b32.xlu0 %v3895, 96
    %v4035 = vpop.permute.xlu0 %4034
    %4036 = vrot.lane.b32.xlu0 %v3900, 96
    %v4037 = vpop.permute.xlu0 %4036
    %4038 = vrot.lane.b32.xlu0 %v3905, 96
    %v4039 = vpop.permute.xlu0 %4038
    %4040 = vrot.lane.b32.xlu0 %v3910, 96
    %v4041 = vpop.permute.xlu0 %4040
    %4042 = vrot.lane.b32.xlu0 %v3915, 96
    %v4043 = vpop.permute.xlu0 %4042
    %4044 = vrot.lane.b32.xlu0 %v3920, 96
    %v4045 = vpop.permute.xlu0 %4044
    %4046 = vrot.lane.b32.xlu0 %v3925, 96
    %v4047 = vpop.permute.xlu0 %4046
    %4048 = vrot.lane.b32.xlu0 %v3930, 96
    %v4049 = vpop.permute.xlu0 %4048
    %4050 = vrot.lane.b32.xlu0 %v3935, 96
    %v4051 = vpop.permute.xlu0 %4050
    %4052 = vrot.lane.b32.xlu0 %v3940, 96
    %v4053 = vpop.permute.xlu0 %4052
    %4054 = vrot.lane.b32.xlu0 %v3945, 96
    %v4055 = vpop.permute.xlu0 %4054
    %4056 = vrot.lane.b32.xlu0 %v3950, 96
    %v4057 = vpop.permute.xlu0 %4056
    %4058 = vrot.lane.b32.xlu0 %v3955, 96
    %v4059 = vpop.permute.xlu0 %4058
    %4060 = vrot.lane.b32.xlu0 %v3960, 96
    %v4061 = vpop.permute.xlu0 %4060
    %v4076 = vadd.f32 %v3967, %v4035
    %v4077 = vadd.f32 %v4020, %v4037
    %v4078 = vadd.f32 %v4021, %v4039
    %v4079 = vadd.f32 %v4022, %v4041
    %v4080 = vadd.f32 %v4023, %v4043
    %v4081 = vadd.f32 %v4024, %v4045
    %v4082 = vadd.f32 %v4025, %v4047
    %v4083 = vadd.f32 %v4026, %v4049
    %v4084 = vadd.f32 %v4027, %v4051
    %v4085 = vadd.f32 %v4028, %v4053
    %v4086 = vadd.f32 %v4029, %v4055
    %v4087 = vadd.f32 %v4030, %v4057
    %v4088 = vadd.f32 %v4031, %v4059
    %v4089 = vadd.f32 %v4032, %v4061
    %4090 = vrot.lane.b32.xlu0 %v3960, 112
    %v4091 = vpop.permute.xlu0 %4090
    %v4093 = vadd.f32 %v3955, %v4091
    %4108 = vrot.lane.b32.xlu0 %v4076, 16
    %v4109 = vpop.permute.xlu0 %4108
    %4110 = vrot.lane.b32.xlu0 %v4077, 16
    %v4111 = vpop.permute.xlu0 %4110
    %4112 = vrot.lane.b32.xlu0 %v4078, 16
    %v4113 = vpop.permute.xlu0 %4112
    %4114 = vrot.lane.b32.xlu0 %v4079, 16
    %v4115 = vpop.permute.xlu0 %4114
    %4116 = vrot.lane.b32.xlu0 %v4080, 16
    %v4117 = vpop.permute.xlu0 %4116
    %4118 = vrot.lane.b32.xlu0 %v4081, 16
    %v4119 = vpop.permute.xlu0 %4118
    %4120 = vrot.lane.b32.xlu0 %v4082, 16
    %v4121 = vpop.permute.xlu0 %4120
    %4122 = vrot.lane.b32.xlu0 %v4083, 16
    %v4123 = vpop.permute.xlu0 %4122
    %4124 = vrot.lane.b32.xlu0 %v4084, 16
    %v4125 = vpop.permute.xlu0 %4124
    %4126 = vrot.lane.b32.xlu0 %v4085, 16
    %v4127 = vpop.permute.xlu0 %4126
    %4128 = vrot.lane.b32.xlu0 %v4086, 16
    %v4129 = vpop.permute.xlu0 %4128
    %4130 = vrot.lane.b32.xlu0 %v4087, 16
    %v4131 = vpop.permute.xlu0 %4130
    %4132 = vrot.lane.b32.xlu0 %v4088, 16
    %v4133 = vpop.permute.xlu0 %4132
    %4134 = vrot.lane.b32.xlu0 %v4089, 16
    %v4135 = vpop.permute.xlu0 %4134
    %4151 = vrot.lane.b32.xlu0 %v4093, 16
    %v4152 = vpop.permute.xlu0 %4151
    %v4155 = vlaneseq
    %v4156 = vshrl.u32 %v4155, 7
    %v4157 = vsub.s32 0, %v4156
    %v4158 = vrot.slane %v3737, %v4157
    %4159 = vrot.lane.b32.xlu0 %v4158, 16
    %v4160 = vpop.permute.xlu0 %4159
    %v4162 = vadd.f32 %v3967, %v4160
    %v4163 = vadd.f32 %v4109, %v4160
    %v4164 = vadd.f32 %v4111, %v4160
    %v4165 = vadd.f32 %v4113, %v4160
    %v4166 = vadd.f32 %v4115, %v4160
    %v4167 = vadd.f32 %v4117, %v4160
    %v4168 = vadd.f32 %v4119, %v4160
    %v4169 = vadd.f32 %v4121, %v4160
    %v4170 = vadd.f32 %v4123, %v4160
    %v4171 = vadd.f32 %v4125, %v4160
    %v4172 = vadd.f32 %v4127, %v4160
    %v4173 = vadd.f32 %v4129, %v4160
    %v4174 = vadd.f32 %v4131, %v4160
    %v4175 = vadd.f32 %v4133, %v4160
    %v4176 = vadd.f32 %v4135, %v4160
    %v4177 = vadd.f32 %v4152, %v4160
    %v4178 = vmax.f32 %v4162, 0.0
    %v4179 = vmax.f32 %v4163, 0.0
    %v4180 = vmax.f32 %v4164, 0.0
    %v4181 = vmax.f32 %v4165, 0.0
    %v4182 = vmax.f32 %v4166, 0.0
    %v4183 = vmax.f32 %v4167, 0.0
    %v4184 = vmax.f32 %v4168, 0.0
    %v4185 = vmax.f32 %v4169, 0.0
    %v4186 = vmax.f32 %v4170, 0.0
    %v4187 = vmax.f32 %v4171, 0.0
    %v4188 = vmax.f32 %v4172, 0.0
    %v4189 = vmax.f32 %v4173, 0.0
    %v4190 = vmax.f32 %v4174, 0.0
    %v4191 = vmax.f32 %v4175, 0.0
    %v4192 = vmax.f32 %v4176, 0.0
    %v4193 = vmax.f32 %v4177, 0.0
    %v4194 = vld [vmem:[%s55] sm:$0x1]
    %v4196 = vlaneseq
    %v4197 = vshrl.u32 %v4196, 7
    %v4198 = vsub.s32 0, %v4197
    %v4199 = vrot.slane %v4194, %v4198
    %4200 = vrot.lane.b32.xlu0 %v4199, 16
    %v4201 = vpop.permute.xlu0 %4200
    %v4203 = vmul.f32 %v4178, %v4201
    %v4204 = vmul.f32 %v4179, %v4201
    %v4205 = vmul.f32 %v4180, %v4201
    %v4206 = vmul.f32 %v4181, %v4201
    %v4207 = vmul.f32 %v4182, %v4201
    %v4208 = vmul.f32 %v4183, %v4201
    %v4209 = vmul.f32 %v4184, %v4201
    %v4210 = vmul.f32 %v4185, %v4201
    %v4211 = vmul.f32 %v4186, %v4201
    %v4212 = vmul.f32 %v4187, %v4201
    %v4213 = vmul.f32 %v4188, %v4201
    %v4214 = vmul.f32 %v4189, %v4201
    %v4215 = vmul.f32 %v4190, %v4201
    %v4216 = vmul.f32 %v4191, %v4201
    %v4217 = vmul.f32 %v4192, %v4201
    %v4218 = vmul.f32 %v4193, %v4201
    %4235 = vrot.lane.b32.xlu0 %v4203, 112
    %v4236 = vpop.permute.xlu0 %4235
    %4237 = vrot.lane.b32.xlu0 %v4204, 112
    %v4238 = vpop.permute.xlu0 %4237
    %4239 = vrot.lane.b32.xlu0 %v4205, 112
    %v4240 = vpop.permute.xlu0 %4239
    %4241 = vrot.lane.b32.xlu0 %v4206, 112
    %v4242 = vpop.permute.xlu0 %4241
    %4243 = vrot.lane.b32.xlu0 %v4207, 112
    %v4244 = vpop.permute.xlu0 %4243
    %4245 = vrot.lane.b32.xlu0 %v4208, 112
    %v4246 = vpop.permute.xlu0 %4245
    %4247 = vrot.lane.b32.xlu0 %v4209, 112
    %v4248 = vpop.permute.xlu0 %4247
    %4249 = vrot.lane.b32.xlu0 %v4210, 112
    %v4250 = vpop.permute.xlu0 %4249
    %4251 = vrot.lane.b32.xlu0 %v4211, 112
    %v4252 = vpop.permute.xlu0 %4251
    %4253 = vrot.lane.b32.xlu0 %v4212, 112
    %v4254 = vpop.permute.xlu0 %4253
    %4255 = vrot.lane.b32.xlu0 %v4213, 112
    %v4256 = vpop.permute.xlu0 %4255
    %4257 = vrot.lane.b32.xlu0 %v4214, 112
    %v4258 = vpop.permute.xlu0 %4257
    %4259 = vrot.lane.b32.xlu0 %v4215, 112
    %v4260 = vpop.permute.xlu0 %4259
    %4261 = vrot.lane.b32.xlu0 %v4216, 112
    %v4262 = vpop.permute.xlu0 %4261
    %4263 = vrot.lane.b32.xlu0 %v4217, 112
    %v4264 = vpop.permute.xlu0 %4263
    %4265 = vrot.lane.b32.xlu0 %v4218, 112
    %v4266 = vpop.permute.xlu0 %4265
    %v4283 = vsel %vm651, %v4236, 0.0
    %4284 = vadd.xlane.f32.xlu0 %v4283
    %v4285 = vpop.xlane.xlu0 %4284
    %v4286 = vsel %vm651, %v4238, 0.0
    %4287 = vadd.xlane.f32.xlu0 %v4286
    %v4288 = vpop.xlane.xlu0 %4287
    %v4289 = vsel %vm651, %v4240, 0.0
    %4290 = vadd.xlane.f32.xlu0 %v4289
    %v4291 = vpop.xlane.xlu0 %4290
    %v4292 = vsel %vm651, %v4242, 0.0
    %4293 = vadd.xlane.f32.xlu0 %v4292
    %v4294 = vpop.xlane.xlu0 %4293
    %v4295 = vsel %vm651, %v4244, 0.0
    %4296 = vadd.xlane.f32.xlu0 %v4295
    %v4297 = vpop.xlane.xlu0 %4296
    %v4298 = vsel %vm651, %v4246, 0.0
    %4299 = vadd.xlane.f32.xlu0 %v4298
    %v4300 = vpop.xlane.xlu0 %4299
    %v4301 = vsel %vm651, %v4248, 0.0
    %4302 = vadd.xlane.f32.xlu0 %v4301
    %v4303 = vpop.xlane.xlu0 %4302
    %v4304 = vsel %vm651, %v4250, 0.0
    %4305 = vadd.xlane.f32.xlu0 %v4304
    %v4306 = vpop.xlane.xlu0 %4305
    %v4307 = vsel %vm651, %v4252, 0.0
    %4308 = vadd.xlane.f32.xlu0 %v4307
    %v4309 = vpop.xlane.xlu0 %4308
    %v4310 = vsel %vm651, %v4254, 0.0
    %4311 = vadd.xlane.f32.xlu0 %v4310
    %v4312 = vpop.xlane.xlu0 %4311
    %v4313 = vsel %vm651, %v4256, 0.0
    %4314 = vadd.xlane.f32.xlu0 %v4313
    %v4315 = vpop.xlane.xlu0 %4314
    %v4316 = vsel %vm651, %v4258, 0.0
    %4317 = vadd.xlane.f32.xlu0 %v4316
    %v4318 = vpop.xlane.xlu0 %4317
    %v4319 = vsel %vm651, %v4260, 0.0
    %4320 = vadd.xlane.f32.xlu0 %v4319
    %v4321 = vpop.xlane.xlu0 %4320
    %v4322 = vsel %vm651, %v4262, 0.0
    %4323 = vadd.xlane.f32.xlu0 %v4322
    %v4324 = vpop.xlane.xlu0 %4323
    %v4325 = vsel %vm651, %v4264, 0.0
    %4326 = vadd.xlane.f32.xlu0 %v4325
    %v4327 = vpop.xlane.xlu0 %4326
    %v4328 = vsel %vm651, %v4266, 0.0
    %4329 = vadd.xlane.f32.xlu0 %v4328
    %v4330 = vpop.xlane.xlu0 %4329
    %v4331 = vld [vmem:[#allocation2] sm:$0x1]
    %v4333 = vlaneseq
    %v4334 = vshrl.u32 %v4333, 7
    %v4335 = vsub.s32 0, %v4334
    %v4336 = vrot.slane %v4331, %v4335
    %4337 = vset.pattern.permute.xlu0 0
    %4338 = vperm.xlu0 %4337, %v4336
    %v4339 = vpop.permute.xlu0 %4338
    %v4341 = vadd.f32 %v4285, %v4339
    %v4342 = vadd.f32 %v4288, %v4339
    %v4343 = vadd.f32 %v4291, %v4339
    %v4344 = vadd.f32 %v4294, %v4339
    %v4345 = vadd.f32 %v4297, %v4339
    %v4346 = vadd.f32 %v4300, %v4339
    %v4347 = vadd.f32 %v4303, %v4339
    %v4348 = vadd.f32 %v4306, %v4339
    %v4349 = vadd.f32 %v4309, %v4339
    %v4350 = vadd.f32 %v4312, %v4339
    %v4351 = vadd.f32 %v4315, %v4339
    %v4352 = vadd.f32 %v4318, %v4339
    %v4353 = vadd.f32 %v4321, %v4339
    %v4354 = vadd.f32 %v4324, %v4339
    %v4355 = vadd.f32 %v4327, %v4339
    %v4356 = vadd.f32 %v4330, %v4339
    %v4373 = vlaneseq
    %v4374 = vand.u32 %v4373, 127
    %v4375 = vlaneseq
    %v4376 = vshrl.u32 %v4375, 7
    %v4377 = vsub.s32 %v4374, %v4376
    %v4378 = vrot.slane %v4341, %v4377
    %v4379 = vlaneseq
    %v4380 = vshrl.u32 %v4379, 7
    %v4381 = vsub.s32 %v4374, %v4380
    %v4382 = vrot.slane %v4342, %v4381
    %v4383 = vlaneseq
    %v4384 = vshrl.u32 %v4383, 7
    %v4385 = vsub.s32 %v4374, %v4384
    %v4386 = vrot.slane %v4343, %v4385
    %v4387 = vlaneseq
    %v4388 = vshrl.u32 %v4387, 7
    %v4389 = vsub.s32 %v4374, %v4388
    %v4390 = vrot.slane %v4344, %v4389
    %v4391 = vlaneseq
    %v4392 = vshrl.u32 %v4391, 7
    %v4393 = vsub.s32 %v4374, %v4392
    %v4394 = vrot.slane %v4345, %v4393
    %v4395 = vlaneseq
    %v4396 = vshrl.u32 %v4395, 7
    %v4397 = vsub.s32 %v4374, %v4396
    %v4398 = vrot.slane %v4346, %v4397
    %v4399 = vlaneseq
    %v4400 = vshrl.u32 %v4399, 7
    %v4401 = vsub.s32 %v4374, %v4400
    %v4402 = vrot.slane %v4347, %v4401
    %v4403 = vlaneseq
    %v4404 = vshrl.u32 %v4403, 7
    %v4405 = vsub.s32 %v4374, %v4404
    %v4406 = vrot.slane %v4348, %v4405
    %v4407 = vlaneseq
    %v4408 = vshrl.u32 %v4407, 7
    %v4409 = vsub.s32 %v4374, %v4408
    %v4410 = vrot.slane %v4349, %v4409
    %v4411 = vlaneseq
    %v4412 = vshrl.u32 %v4411, 7
    %v4413 = vsub.s32 %v4374, %v4412
    %v4414 = vrot.slane %v4350, %v4413
    %v4415 = vlaneseq
    %v4416 = vshrl.u32 %v4415, 7
    %v4417 = vsub.s32 %v4374, %v4416
    %v4418 = vrot.slane %v4351, %v4417
    %v4419 = vlaneseq
    %v4420 = vshrl.u32 %v4419, 7
    %v4421 = vsub.s32 %v4374, %v4420
    %v4422 = vrot.slane %v4352, %v4421
    %v4423 = vlaneseq
    %v4424 = vshrl.u32 %v4423, 7
    %v4425 = vsub.s32 %v4374, %v4424
    %v4426 = vrot.slane %v4353, %v4425
    %v4427 = vlaneseq
    %v4428 = vshrl.u32 %v4427, 7
    %v4429 = vsub.s32 %v4374, %v4428
    %v4430 = vrot.slane %v4354, %v4429
    %v4431 = vlaneseq
    %v4432 = vshrl.u32 %v4431, 7
    %v4433 = vsub.s32 %v4374, %v4432
    %v4434 = vrot.slane %v4355, %v4433
    %v4435 = vlaneseq
    %v4436 = vshrl.u32 %v4435, 7
    %v4437 = vsub.s32 %v4374, %v4436
    %v4438 = vrot.slane %v4356, %v4437
    %vm4439 = vcmask 1041409
    %v4440 = vsel %vm4439, %v4382, %v4378
    %vm4441 = vcmask 1042434
    %v4442 = vsel %vm4441, %v4386, %v4440
    %vm4443 = vcmask 1043459
    %v4444 = vsel %vm4443, %v4390, %v4442
    %vm4445 = vcmask 1044484
    %v4446 = vsel %vm4445, %v4394, %v4444
    %vm4447 = vcmask 1045509
    %v4448 = vsel %vm4447, %v4398, %v4446
    %vm4449 = vcmask 1046534
    %v4450 = vsel %vm4449, %v4402, %v4448
    %vm4451 = vcmask 1047559
    %v4452 = vsel %vm4451, %v4406, %v4450
    %v4453 = vsel %vm4439, %v4414, %v4410
    %v4454 = vsel %vm4441, %v4418, %v4453
    %v4455 = vsel %vm4443, %v4422, %v4454
    %v4456 = vsel %vm4445, %v4426, %v4455
    %v4457 = vsel %vm4447, %v4430, %v4456
    %v4458 = vsel %vm4449, %v4434, %v4457
    %v4459 = vsel %vm4451, %v4438, %v4458
    %4462 = vxpose.xlu0.b32.start [1/16] %v4452, 128
    %4463 = vxpose.xlu0.b32.cont [2/16] %v4459, 128
    %4464 = vxpose.xlu0.b32.cont [3/16] 0.0, 128
    %4465 = vxpose.xlu0.b32.cont [4/16] 0.0, 128
    %4466 = vxpose.xlu0.b32.cont [5/16] 0.0, 128
    %4467 = vxpose.xlu0.b32.cont [6/16] 0.0, 128
    %4468 = vxpose.xlu0.b32.cont [7/16] 0.0, 128
    %4469 = vxpose.xlu0.b32.cont [8/16] 0.0, 128
    %4470 = vxpose.xlu0.b32.cont [9/16] 0.0, 128
    %4471 = vxpose.xlu0.b32.cont [10/16] 0.0, 128
    %4472 = vxpose.xlu0.b32.cont [11/16] 0.0, 128
    %4473 = vxpose.xlu0.b32.cont [12/16] 0.0, 128
    %4474 = vxpose.xlu0.b32.cont [13/16] 0.0, 128
    %4475 = vxpose.xlu0.b32.cont [14/16] 0.0, 128
    %4476 = vxpose.xlu0.b32.cont [15/16] 0.0, 128
    %4477 = vxpose.xlu0.b32.end [16/16] 0.0, 128
    %v4478 = vpop.trf.xlu0
    %v4479 = vpop.trf.xlu0
    %v4480 = vpop.trf.xlu0
    %v4481 = vpop.trf.xlu0
    %v4482 = vpop.trf.xlu0
    %v4483 = vpop.trf.xlu0
    %v4484 = vpop.trf.xlu0
    %v4485 = vpop.trf.xlu0
    %v4486 = vpop.trf.xlu0
    %v4487 = vpop.trf.xlu0
    %v4488 = vpop.trf.xlu0
    %v4489 = vpop.trf.xlu0
    %v4490 = vpop.trf.xlu0
    %v4491 = vpop.trf.xlu0
    %v4492 = vpop.trf.xlu0
    %v4493 = vpop.trf.xlu0
    %4494 = vst.msk [vmem:[#allocation36] sm:$0xff] %vm651, %v4478
    // Predicated region
    $region202: #{tpu_custom_call.1} parent=1 // pred_check
      _
    $region203: #{tpu_custom_call.1} parent=1 // pred_check_branch
      %4496 = sbr.rel (0) target = $region205
    $region204: #{tpu_custom_call.1} parent=1 // pred_region
      %s4498 = ssub.s32 128, 128
      %4499 = vsyncadd [#allocation5], %s4498
      %s4501 = sshll.u32 [#allocation36], 4
      %s4502 = int_to_ptr.vmem [resolvable:$true] %s4501
      %4504 = dma.vmem_to_hbm [thread:$0]  %s4502, 128, %s59, [#allocation5]
    $region205: #{tpu_custom_call.1} parent=1 // pred_fallthru
      _
    // Predicated region
    $region206: #{tpu_custom_call.1} parent=1 // pred_check
      _
    $region207: #{tpu_custom_call.1} parent=1 // pred_check_branch
      %4506 = sbr.rel (0) target = $region209
    $region208: #{tpu_custom_call.1} parent=1 // pred_region
      %4507 = dma.done [#allocation5], 128
    $region209: #{tpu_custom_call.1} parent=1 // pred_fallthru
      _
    %4508 = vsyncpa [#allocation4], 1
    %4509 = vsyncpa [#allocation7], 1
    %4510 = vsyncpa [#allocation10], 1
    %4511 = vsyncpa [#allocation13], 1
    %4512 = vsyncpa [#allocation16], 1
    %4513 = vsyncpa [#allocation19], 1
    %4514 = vsyncpa [#allocation22], 1
    %4515 = vsyncpa [#allocation25], 1
    %4516 = vsyncpa [#allocation28], 1
    %4517 = vsyncpa [#allocation31], 1
    %4518 = vsyncpa [#allocation34], 1
    %4519 = vsyncpa [#allocation5], 1

</llo_original>
